<compile_context>
chip_gen: v5e
topology: v5e:2x2
jax: 0.10.0
libtpu: 0.0.40
codegen_flags: <defaults>
</compile_context>

<pallas_src>
import math

import jax
import jax.numpy as jnp
from jax.experimental import pallas as pl
from jax.experimental.pallas import tpu as pltpu

# ---------------- hyperparameters (small test sizes consistent with the module) ----
B = 2            # batch
D_INPUT = 4      # d_input (channels)
SEQ = 16         # length_timeseries
D_MODEL = 32     # d_model
Q_DIM = 8        # q (per-head query/key dim)
V_DIM = 8        # v (per-head value dim)
N_HEADS = 4      # h
N_LAYERS = 2     # N encoder layers per branch
HIDDEN = 64      # encoder FFN hidden dim
EMBED = 32       # embedding_dim (gate_dense output)
CLS_HIDDEN = 32  # classifier hidden (in_classifier / out_classifier)
NUM_CLASSES = 7
EPS = 1e-5
NEG_INF = -1e30

assert Q_DIM == V_DIM  # required by the fused QKV packing below

HQ = N_HEADS * Q_DIM          # 32
QKV_W = 3 * HQ                # 96
NL = 2 * N_LAYERS             # total encoder layers (time branch first, then channel)

# ---- bias / LayerNorm slab row layout (f32, lane width BIAS_W) ----------------------
ROW_ECB = 0                    # embedding_channel bias            (width D_MODEL)
ROW_BQKV = 1                   # NL rows: [b_q*scale | b_k | b_v]  (width QKV_W)
ROW_BO = ROW_BQKV + NL         # NL rows: W_o bias                 (width D_MODEL)
ROW_LN = ROW_BO + NL           # 4*NL rows: gamma1,beta1,gamma2,beta2 per layer
ROW_B1 = ROW_LN + 4 * NL       # NL rows: FFN hidden bias          (width HIDDEN)
ROW_B2 = ROW_B1 + NL           # NL rows: FFN out bias             (width D_MODEL)
ROW_GB = ROW_B2 + NL           # gate bias                         (width 2)
ROW_DB = ROW_GB + 1            # gate_dense bias                   (width EMBED)
ROW_C1B = ROW_DB + 1           # classifier-1 bias                 (width CLS_HIDDEN)
ROW_C2B = ROW_C1B + 1          # classifier-2 bias                 (width NUM_CLASSES)
N_BIAS_ROWS = ROW_C2B + 1
BIAS_W = max(QKV_W, HIDDEN)    # 96


# ---------------- the single fused Pallas kernel -------------------------------------

def _fused_forward_kernel(
    xt_ref, xc_ref, addt_ref,
    embw_ref, wqkv_ref, wo_ref, w1_ref, w2_ref,
    gdwt_ref, gdwc_ref, clsw_ref, bias_ref,
    out_ref,
):
    f32 = jnp.float32
    bf16 = jnp.bfloat16

    def brow(r, w):
        return bias_ref[r:r + 1, :w]                    # (1, w) f32, static slice

    def layer_norm(h, g_row, b_row):
        mu = jnp.mean(h, axis=-1, keepdims=True)
        var = jnp.mean((h - mu) * (h - mu), axis=-1, keepdims=True)
        return ((h - mu) * jax.lax.rsqrt(var + EPS) * brow(g_row, D_MODEL)
                + brow(b_row, D_MODEL))

    def additive_batch_mask(n_rows):
        # rows are position-major (row = position * B + batch) -> batch id = row % B
        r = jax.lax.broadcasted_iota(jnp.int32, (n_rows, n_rows), 0) % B
        c = jax.lax.broadcasted_iota(jnp.int32, (n_rows, n_rows), 1) % B
        return jnp.where(r == c, 0.0, NEG_INF).astype(f32)

    def encoder_layer(h, li, madd):
        h16 = h.astype(bf16)
        # fused QKV: ONE lane-dense (n,32)@(32,96) MXU push per layer
        # (1/sqrt(q) already folded into the Q columns / bias on the host)
        qkv = (jnp.dot(h16, wqkv_ref[li], preferred_element_type=f32)
               + brow(ROW_BQKV + li, QKV_W))
        heads = []
        for hd in range(N_HEADS):
            q = qkv[:, hd * Q_DIM:(hd + 1) * Q_DIM]
            k = qkv[:, HQ + hd * Q_DIM:HQ + (hd + 1) * Q_DIM]
            v = qkv[:, 2 * HQ + hd * V_DIM:2 * HQ + (hd + 1) * V_DIM]
            s = jax.lax.dot_general(q.astype(bf16), k.astype(bf16),
                                    (((1,), (1,)), ((), ())),
                                    preferred_element_type=f32)
            s = s + madd                                   # per-batch block-diag mask
            s = s - jnp.max(s, axis=-1, keepdims=True)     # softmax kept in f32
            p = jnp.exp(s)
            p = p / jnp.sum(p, axis=-1, keepdims=True)
            heads.append(jnp.dot(p.astype(bf16), v.astype(bf16),
                                 preferred_element_type=f32))
        # lane-concat the heads, then ONE (n,32)@(32,32) output projection
        att = jnp.concatenate(heads, axis=-1).astype(bf16)
        att = (jnp.dot(att, wo_ref[li], preferred_element_type=f32)
               + brow(ROW_BO + li, D_MODEL))
        x1 = layer_norm(h + att, ROW_LN + 4 * li + 0, ROW_LN + 4 * li + 1)
        hid = jnp.maximum(
            jnp.dot(x1.astype(bf16), w1_ref[li], preferred_element_type=f32)
            + brow(ROW_B1 + li, HIDDEN), 0.0)
        ff = (jnp.dot(hid.astype(bf16), w2_ref[li], preferred_element_type=f32)
              + brow(ROW_B2 + li, D_MODEL))
        return layer_norm(x1 + ff, ROW_LN + 4 * li + 2, ROW_LN + 4 * li + 3)

    # ------------------------------- time branch -----------------------------------
    et = (jnp.dot(xt_ref[...].astype(bf16), embw_ref[:D_INPUT, :],
                  preferred_element_type=f32) + addt_ref[...])   # addt = PE + bias
    madd_t = additive_batch_mask(SEQ * B)
    for li in range(N_LAYERS):
        et = encoder_layer(et, li, madd_t)

    # ------------------------------ channel branch ---------------------------------
    ec = (jnp.dot(xc_ref[...].astype(bf16), embw_ref[D_INPUT:, :],
                  preferred_element_type=f32) + brow(ROW_ECB, D_MODEL))
    madd_c = additive_batch_mask(D_INPUT * B)
    for li in range(N_LAYERS):
        ec = encoder_layer(ec, N_LAYERS + li, madd_c)

    # ------------- gate + gate_dense: ONE lane-dense contraction per branch --------
    # (B, S*D) flatten = lane-concat of contiguous (B, D) row blocks (pure relayout,
    # no MXU work); matches torch's reshape(B, -1) ordering with position-major rows.
    ft = jnp.concatenate([et[s * B:(s + 1) * B, :] for s in range(SEQ)], axis=-1)
    fc = jnp.concatenate([ec[c * B:(c + 1) * B, :] for c in range(D_INPUT)], axis=-1)
    gd_t = jnp.dot(ft.astype(bf16), gdwt_ref[...], preferred_element_type=f32)
    gd_c = jnp.dot(fc.astype(bf16), gdwc_ref[...], preferred_element_type=f32)
    # slab lane layout: [dense (EMBED) | gate (2)]
    logits = gd_t[:, EMBED:EMBED + 2] + gd_c[:, EMBED:EMBED + 2] + brow(ROW_GB, 2)
    logits = logits - jnp.max(logits, axis=-1, keepdims=True)
    eg = jnp.exp(logits)
    g = eg / jnp.sum(eg, axis=-1, keepdims=True)
    # the gate scalars factor out of gate_dense (linearity) -> no gated concat needed
    emb = jnp.tanh(g[:, 0:1] * gd_t[:, :EMBED] + g[:, 1:2] * gd_c[:, :EMBED]
                   + brow(ROW_DB, EMBED))

    # -------------------------------- classifier ------------------------------------
    h1 = jnp.tanh(jnp.dot(emb.astype(bf16), clsw_ref[:EMBED, :],
                          preferred_element_type=f32) + brow(ROW_C1B, CLS_HIDDEN))
    out = jnp.dot(h1.astype(bf16), clsw_ref[EMBED:, :], preferred_element_type=f32)
    out_ref[...] = out[:, :NUM_CLASSES] + brow(ROW_C2B, NUM_CLASSES)


# ---------------- deterministic parameter init (PyTorch Linear-style uniform) -------

def _init_linear(key, fan_in, fan_out):
    kw, kb = jax.random.split(key)
    bound = 1.0 / math.sqrt(fan_in)
    w = jax.random.uniform(kw, (fan_in, fan_out), jnp.float32, -bound, bound)
    b = jax.random.uniform(kb, (1, fan_out), jnp.float32, -bound, bound)
    return w, b


def _init_encoder(key):
    keys = jax.random.split(key, 6)
    wq, bq = _init_linear(keys[0], D_MODEL, Q_DIM * N_HEADS)
    wk, bk = _init_linear(keys[1], D_MODEL, Q_DIM * N_HEADS)
    wv, bv = _init_linear(keys[2], D_MODEL, V_DIM * N_HEADS)
    wo, bo = _init_linear(keys[3], V_DIM * N_HEADS, D_MODEL)
    w1, b1 = _init_linear(keys[4], D_MODEL, HIDDEN)
    w2, b2 = _init_linear(keys[5], HIDDEN, D_MODEL)
    g1 = jnp.ones((1, D_MODEL), jnp.float32)
    be1 = jnp.zeros((1, D_MODEL), jnp.float32)
    g2 = jnp.ones((1, D_MODEL), jnp.float32)
    be2 = jnp.zeros((1, D_MODEL), jnp.float32)
    return (wq, bq, wk, bk, wv, bv, wo, bo, g1, be1, w1, b1, w2, b2, g2, be2)


def positional_encoding(length, d_model):
    # mirrors the in-forward PE construction of the PyTorch module (computed ONCE)
    pos = jnp.arange(length, dtype=jnp.float32)[:, None]
    freq = jnp.exp(jnp.arange(0, d_model, 2, dtype=jnp.float32)
                   * (-math.log(10000.0) / d_model))[None, :]
    ang = pos @ freq
    pe = jnp.ones((length, d_model), jnp.float32)
    pe = pe.at[:, 0::2].set(jnp.sin(ang))
    pe = pe.at[:, 1::2].set(jnp.cos(ang))
    return pe


def init_params(key):
    keys = jax.random.split(key, 6 + 2 * N_LAYERS)
    p = {}
    p["emb_time_w"], p["emb_time_b"] = _init_linear(keys[0], D_INPUT, D_MODEL)
    p["emb_chan_w"], p["emb_chan_b"] = _init_linear(keys[1], SEQ, D_MODEL)
    feat_dim = D_MODEL * SEQ + D_MODEL * D_INPUT
    p["gate_w"], p["gate_b"] = _init_linear(keys[2], feat_dim, 2)
    p["dense_w"], p["dense_b"] = _init_linear(keys[3], feat_dim, EMBED)
    p["cls1_w"], p["cls1_b"] = _init_linear(keys[4], EMBED, CLS_HIDDEN)
    p["cls2_w"], p["cls2_b"] = _init_linear(keys[5], CLS_HIDDEN, NUM_CLASSES)
    p["enc_time"] = [_init_encoder(keys[6 + i]) for i in range(N_LAYERS)]
    p["enc_chan"] = [_init_encoder(keys[6 + N_LAYERS + i]) for i in range(N_LAYERS)]
    p["pe"] = positional_encoding(SEQ, D_MODEL)   # built once, not per call
    return p


# ---------------- host-side packing (param-only, cached at init: runs ONCE) ----------

def pack_params(params):
    bf16 = jnp.bfloat16
    scale = 1.0 / math.sqrt(Q_DIM)

    # embedding weights slab (bf16): rows 0:D_INPUT = time, D_INPUT: = channel
    emb_w = jnp.concatenate([params["emb_time_w"], params["emb_chan_w"]],
                            axis=0).astype(bf16)

    wqkv, wo, w1, w2 = [], [], [], []
    bqkv_rows, bo_rows, ln_rows, b1_rows, b2_rows = [], [], [], [], []
    for lp in list(params["enc_time"]) + list(params["enc_chan"]):
        (wq, bq, wk, bk, wv, bv, wo_, bo_, g1, be1, w1_, b1_, w2_, b2_, g2, be2) = lp
        wqkv.append(jnp.concatenate([wq * scale, wk, wv], axis=1))     # (D, 96)
        bqkv_rows.append(jnp.concatenate([bq * scale, bk, bv], axis=1))  # (1, 96)
        wo.append(wo_)                                                 # (32, 32)
        bo_rows.append(bo_)
        w1.append(w1_); b1_rows.append(b1_)
        w2.append(w2_); b2_rows.append(b2_)
        ln_rows.extend([g1, be1, g2, be2])
    wqkv = jnp.stack(wqkv).astype(bf16)      # (NL, 32, 96)
    wo = jnp.stack(wo).astype(bf16)          # (NL, 32, 32)
    w1 = jnp.stack(w1).astype(bf16)          # (NL, 32, 64)
    w2 = jnp.stack(w2).astype(bf16)          # (NL, 64, 32)

    # gate / gate_dense slabs: [dense | gate] along lanes, per branch
    nt = SEQ * D_MODEL
    gdwt = jnp.concatenate([params["dense_w"][:nt], params["gate_w"][:nt]],
                           axis=1).astype(bf16)                        # (512, 34)
    gdwc = jnp.concatenate([params["dense_w"][nt:], params["gate_w"][nt:]],
                           axis=1).astype(bf16)                        # (128, 34)

    # classifier slab: rows 0:EMBED = cls1_w, EMBED: = cls2_w (lane-padded to 32)
    c2w_pad = jnp.pad(params["cls2_w"], ((0, 0), (0, CLS_HIDDEN - NUM_CLASSES)))
    cls_w = jnp.concatenate([params["cls1_w"], c2w_pad], axis=0).astype(bf16)

    # bias / LayerNorm slab (f32, lane width BIAS_W)
    def row(v):
        return jnp.pad(v, ((0, 0), (0, BIAS_W - v.shape[1])))
    rows = [row(params["emb_chan_b"])]
    rows += [row(r) for r in bqkv_rows]
    rows += [row(r) for r in bo_rows]
    rows += [row(r) for r in ln_rows]
    rows += [row(r) for r in b1_rows]
    rows += [row(r) for r in b2_rows]
    rows.append(row(params["gate_b"]))
    rows.append(row(params["dense_b"]))
    rows.append(row(params["cls1_b"]))
    rows.append(row(params["cls2_b"]))
    bias = jnp.concatenate(rows, axis=0).astype(jnp.float32)
    assert bias.shape == (N_BIAS_ROWS, BIAS_W)

    # time-branch additive term: embedding_time bias + PE, repeated per batch row
    addt = jnp.repeat(params["pe"] + params["emb_time_b"], B, axis=0)  # (S*B, D)

    return dict(addt=addt, emb_w=emb_w, wqkv=wqkv, wo=wo, w1=w1, w2=w2,
                gdwt=gdwt, gdwc=gdwc, cls_w=cls_w, bias=bias)


# ---------------- fused forward (only x-dependent layout work per call) --------------

@jax.jit
def forward(packed, x):
    # activations use position-major rows (row = position * B + batch)
    xt = jnp.transpose(x, (1, 0, 2)).reshape(SEQ * B, D_INPUT)
    xc = jnp.transpose(x, (2, 0, 1)).reshape(D_INPUT * B, SEQ)
    return pl.pallas_call(
        _fused_forward_kernel,
        out_shape=jax.ShapeDtypeStruct((B, NUM_CLASSES), jnp.float32),
        compiler_params=pltpu.CompilerParams(vmem_limit_bytes=32 * 1024 * 1024),
    )(xt, xc, packed["addt"], packed["emb_w"], packed["wqkv"], packed["wo"],
      packed["w1"], packed["w2"], packed["gdwt"], packed["gdwc"],
      packed["cls_w"], packed["bias"])


# ---------------- plain-JAX references (numerical self-check) -----------------------

def _layer_norm_ref(h, g, b):
    mu = jnp.mean(h, axis=-1, keepdims=True)
    var = jnp.mean((h - mu) ** 2, axis=-1, keepdims=True)
    return (h - mu) * jax.lax.rsqrt(var + EPS) * g + b


def _encoder_ref(x, lp, mm, bmm, fold_scale):
    wq, bq, wk, bk, wv, bv, wo, bo, g1, be1, w1, b1, w2, b2, g2, be2 = lp
    bsz, t, _ = x.shape
    scale = 1.0 / math.sqrt(Q_DIM)
    if fold_scale:                      # mirrors the kernel's host-folded scaling
        q = mm(x, wq * scale) + bq * scale
    else:
        q = mm(x, wq) + bq
    k = mm(x, wk) + bk
    v = mm(x, wv) + bv
    q = q.reshape(bsz, t, N_HEADS, Q_DIM).transpose(0, 2, 1, 3)
    k = k.reshape(bsz, t, N_HEADS, Q_DIM).transpose(0, 2, 1, 3)
    v = v.reshape(bsz, t, N_HEADS, V_DIM).transpose(0, 2, 1, 3)
    s = bmm("bhik,bhjk->bhij", q, k)
    if not fold_scale:
        s = s * scale
    p = jax.nn.softmax(s, axis=-1)
    o = bmm("bhij,bhjk->bhik", p, v)
    o = o.transpose(0, 2, 1, 3).reshape(bsz, t, N_HEADS * V_DIM)
    x1 = _layer_norm_ref(x + mm(o, wo) + bo, g1, be1)
    ff = mm(jnp.maximum(mm(x1, w1) + b1, 0.0), w2) + b2
    return _layer_norm_ref(x1 + ff, g2, be2)


def forward_reference(params, x, mxu_bf16=False):
    bf16, f32 = jnp.bfloat16, jnp.float32
    if mxu_bf16:    # same bf16-operand / f32-accumulate placement as the kernel
        def mm(a, w):
            return jnp.dot(a.astype(bf16), w.astype(bf16), preferred_element_type=f32)

        def bmm(eq, a, b):
            return jnp.einsum(eq, a.astype(bf16), b.astype(bf16),
                              preferred_element_type=f32)
    else:
        def mm(a, w):
            return jnp.dot(a, w, preferred_element_type=f32)

        def bmm(eq, a, b):
            return jnp.einsum(eq, a, b, preferred_element_type=f32)

    bsz = x.shape[0]
    et = mm(x, params["emb_time_w"]) + params["emb_time_b"] + params["pe"][None]
    for lp in params["enc_time"]:
        et = _encoder_ref(et, lp, mm, bmm, fold_scale=mxu_bf16)
    ec = mm(jnp.transpose(x, (0, 2, 1)), params["emb_chan_w"]) + params["emb_chan_b"]
    for lp in params["enc_chan"]:
        ec = _encoder_ref(ec, lp, mm, bmm, fold_scale=mxu_bf16)
    ft = et.reshape(bsz, -1)
    fc = ec.reshape(bsz, -1)
    nt = SEQ * D_MODEL
    gw, dw = params["gate_w"], params["dense_w"]
    if mxu_bf16:
        # kernel-equivalent formulation: gate scalars factored out by linearity
        logits = mm(ft, gw[:nt]) + mm(fc, gw[nt:]) + params["gate_b"]
        g = jax.nn.softmax(logits, axis=-1)
        pre = (g[:, 0:1] * mm(ft, dw[:nt]) + g[:, 1:2] * mm(fc, dw[nt:])
               + params["dense_b"])
    else:
        # original module formulation (concat of gated features)
        logits = mm(jnp.concatenate([ft, fc], axis=-1), gw) + params["gate_b"]
        g = jax.nn.softmax(logits, axis=-1)
        enc = jnp.concatenate([ft * g[:, 0:1], fc * g[:, 1:2]], axis=-1)
        pre = mm(enc, dw) + params["dense_b"]
    emb = jnp.tanh(pre)
    h = jnp.tanh(mm(emb, params["cls1_w"]) + params["cls1_b"])
    return mm(h, params["cls2_w"]) + params["cls2_b"]


# ---------------- main ----------------------------------------------------------------

if __name__ == "__main__":
    key = jax.random.PRNGKey(0)
    kx, kp = jax.random.split(key)
    x = jax.random.normal(kx, (B, SEQ, D_INPUT), dtype=jnp.float32)
    params = init_params(kp)
    packed = pack_params(params)          # param-only packing, done once (cached)

    out = jax.block_until_ready(forward(packed, x))
    assert out.shape == (B, NUM_CLASSES) and out.dtype == jnp.float32

    # strict logic check: plain-JAX model with the SAME bf16 MXU-operand placement
    ref16 = jax.block_until_ready(forward_reference(params, x, mxu_bf16=True))
    err16 = float(jnp.max(jnp.abs(out - ref16)))
    assert err16 < 1e-2, f"fused kernel mismatch vs bf16-matmul reference: {err16}"

    # semantics sanity check: full-f32 (HIGHEST) reference of the original module math
    with jax.default_matmul_precision("highest"):
        ref32 = jax.block_until_ready(forward_reference(params, x, mxu_bf16=False))
    err32 = float(jnp.max(jnp.abs(out - ref32)))
    assert err32 < 5e-2, f"fused kernel mismatch vs f32 reference: {err32}"

    print("KERNEL_OK")
</pallas_src>

<mosaic_0001>
module attributes {stable_mosaic.version = 11 : i64} {
  func.func @_fused_forward_kernel(%arg0: memref<32x4xf32, #tpu.memory_space<vmem>>, %arg1: memref<8x16xf32, #tpu.memory_space<vmem>>, %arg2: memref<32x32xf32, #tpu.memory_space<vmem>>, %arg3: memref<20x32xbf16, #tpu.memory_space<vmem>>, %arg4: memref<4x32x96xbf16, #tpu.memory_space<vmem>>, %arg5: memref<4x32x32xbf16, #tpu.memory_space<vmem>>, %arg6: memref<4x32x64xbf16, #tpu.memory_space<vmem>>, %arg7: memref<4x64x32xbf16, #tpu.memory_space<vmem>>, %arg8: memref<512x34xbf16, #tpu.memory_space<vmem>>, %arg9: memref<128x34xbf16, #tpu.memory_space<vmem>>, %arg10: memref<64x32xbf16, #tpu.memory_space<vmem>>, %arg11: memref<37x96xf32, #tpu.memory_space<vmem>>, %arg12: memref<2x7xf32, #tpu.memory_space<vmem>>) attributes {dimension_semantics = [], scalar_prefetch = 0 : i64, scratch_operands = 0 : i64, tpu.core_type = #tpu.core_type<tc>} {
    %c0 = arith.constant 0 : index
    %c0_0 = arith.constant 0 : index
    %0 = vector.load %arg0[%c0, %c0_0] : memref<32x4xf32, #tpu.memory_space<vmem>>, vector<32x4xf32>
    %1 = arith.truncf %0 : vector<32x4xf32> to vector<32x4xbf16>
    %c0_1 = arith.constant 0 : index
    %c0_2 = arith.constant 0 : index
    %2 = vector.load %arg3[%c0_1, %c0_2] : memref<20x32xbf16, #tpu.memory_space<vmem>>, vector<4x32xbf16>
    %cst = arith.constant dense<0.000000e+00> : vector<32x32xf32>
    %3 = tpu.matmul %1, %2, %cst {dimension_numbers = #tpu.dot_dimension_numbers<[1], [0], [0], [1], [0, 0, 1, 1], [], []>} : vector<32x4xbf16>, vector<4x32xbf16>, vector<32x32xf32> -> vector<32x32xf32>
    %c0_3 = arith.constant 0 : index
    %c0_4 = arith.constant 0 : index
    %4 = vector.load %arg2[%c0_3, %c0_4] : memref<32x32xf32, #tpu.memory_space<vmem>>, vector<32x32xf32>
    %5 = arith.addf %3, %4 : vector<32x32xf32>
    %6 = tpu.iota {dimensions = array<i32: 0>} : vector<32x32xi32>
    %c2_i32 = arith.constant 2 : i32
    %c0_i32 = arith.constant 0 : i32
    %7 = arith.cmpi eq, %c2_i32, %c0_i32 : i32
    %c1_i32 = arith.constant 1 : i32
    %8 = arith.select %7, %c1_i32, %c2_i32 : i32
    %9 = vector.broadcast %8 : i32 to vector<32x32xi32>
    %10 = arith.remsi %6, %9 : vector<32x32xi32>
    %c0_i32_5 = arith.constant 0 : i32
    %11 = vector.broadcast %c0_i32_5 : i32 to vector<32x32xi32>
    %12 = arith.cmpi ne, %10, %11 : vector<32x32xi32>
    %c0_i32_6 = arith.constant 0 : i32
    %13 = vector.broadcast %c0_i32_6 : i32 to vector<32x32xi32>
    %14 = arith.cmpi slt, %10, %13 : vector<32x32xi32>
    %c0_i32_7 = arith.constant 0 : i32
    %15 = arith.cmpi slt, %8, %c0_i32_7 : i32
    %16 = vector.broadcast %15 : i1 to vector<32x32xi1>
    %17 = vector.broadcast %16 : vector<32x32xi1> to vector<32x32xi1>
    %18 = arith.xori %14, %17 : vector<32x32xi1>
    %19 = arith.andi %18, %12 : vector<32x32xi1>
    %20 = vector.broadcast %8 : i32 to vector<32x32xi32>
    %21 = arith.addi %10, %20 : vector<32x32xi32>
    %22 = arith.select %19, %21, %10 : vector<32x32xi1>, vector<32x32xi32>
    %23 = tpu.iota {dimensions = array<i32: 1>} : vector<32x32xi32>
    %c2_i32_8 = arith.constant 2 : i32
    %c0_i32_9 = arith.constant 0 : i32
    %24 = arith.cmpi eq, %c2_i32_8, %c0_i32_9 : i32
    %c1_i32_10 = arith.constant 1 : i32
    %25 = arith.select %24, %c1_i32_10, %c2_i32_8 : i32
    %26 = vector.broadcast %25 : i32 to vector<32x32xi32>
    %27 = arith.remsi %23, %26 : vector<32x32xi32>
    %c0_i32_11 = arith.constant 0 : i32
    %28 = vector.broadcast %c0_i32_11 : i32 to vector<32x32xi32>
    %29 = arith.cmpi ne, %27, %28 : vector<32x32xi32>
    %c0_i32_12 = arith.constant 0 : i32
    %30 = vector.broadcast %c0_i32_12 : i32 to vector<32x32xi32>
    %31 = arith.cmpi slt, %27, %30 : vector<32x32xi32>
    %c0_i32_13 = arith.constant 0 : i32
    %32 = arith.cmpi slt, %25, %c0_i32_13 : i32
    %33 = vector.broadcast %32 : i1 to vector<32x32xi1>
    %34 = vector.broadcast %33 : vector<32x32xi1> to vector<32x32xi1>
    %35 = arith.xori %31, %34 : vector<32x32xi1>
    %36 = arith.andi %35, %29 : vector<32x32xi1>
    %37 = vector.broadcast %25 : i32 to vector<32x32xi32>
    %38 = arith.addi %27, %37 : vector<32x32xi32>
    %39 = arith.select %36, %38, %27 : vector<32x32xi1>, vector<32x32xi32>
    %40 = arith.cmpi eq, %22, %39 : vector<32x32xi32>
    %cst_14 = arith.constant 0.000000e+00 : f32
    %cst_15 = arith.constant -1.000000e+30 : f32
    %41 = vector.broadcast %cst_14 : f32 to vector<32x32xf32>
    %42 = vector.broadcast %cst_15 : f32 to vector<32x32xf32>
    %43 = arith.select %40, %41, %42 : vector<32x32xi1>, vector<32x32xf32>
    %44 = arith.truncf %5 : vector<32x32xf32> to vector<32x32xbf16>
    %c0_16 = arith.constant 0 : index
    %c0_17 = arith.constant 0 : index
    %c0_18 = arith.constant 0 : index
    %45 = vector.load %arg4[%c0_16, %c0_17, %c0_18] : memref<4x32x96xbf16, #tpu.memory_space<vmem>>, vector<1x32x96xbf16>
    %46 = vector.shape_cast %45 : vector<1x32x96xbf16> to vector<32x96xbf16>
    %cst_19 = arith.constant dense<0.000000e+00> : vector<32x96xf32>
    %47 = tpu.matmul %44, %46, %cst_19 {dimension_numbers = #tpu.dot_dimension_numbers<[1], [0], [0], [1], [0, 0, 1, 1], [], []>} : vector<32x32xbf16>, vector<32x96xbf16>, vector<32x96xf32> -> vector<32x96xf32>
    %c1 = arith.constant 1 : index
    %c0_20 = arith.constant 0 : index
    %48 = vector.load %arg11[%c1, %c0_20] : memref<37x96xf32, #tpu.memory_space<vmem>>, vector<1x96xf32>
    %49 = vector.broadcast %48 : vector<1x96xf32> to vector<32x96xf32>
    %50 = arith.addf %47, %49 : vector<32x96xf32>
    %51 = vector.extract_strided_slice %50 {offsets = [0, 0], sizes = [32, 8], strides = [1, 1]} : vector<32x96xf32> to vector<32x8xf32>
    %52 = vector.extract_strided_slice %50 {offsets = [0, 32], sizes = [32, 8], strides = [1, 1]} : vector<32x96xf32> to vector<32x8xf32>
    %53 = vector.extract_strided_slice %50 {offsets = [0, 64], sizes = [32, 8], strides = [1, 1]} : vector<32x96xf32> to vector<32x8xf32>
    %54 = arith.truncf %51 : vector<32x8xf32> to vector<32x8xbf16>
    %55 = arith.truncf %52 : vector<32x8xf32> to vector<32x8xbf16>
    %cst_21 = arith.constant dense<0.000000e+00> : vector<32x32xf32>
    %56 = tpu.matmul %54, %55, %cst_21 {dimension_numbers = #tpu.dot_dimension_numbers<[1], [1], [0], [0], [0, 0, 1, 0], [], []>} : vector<32x8xbf16>, vector<32x8xbf16>, vector<32x32xf32> -> vector<32x32xf32>
    %57 = arith.addf %56, %43 : vector<32x32xf32>
    %cst_22 = arith.constant dense<0xFF800000> : vector<32xf32>
    %58 = vector.multi_reduction <maximumf>, %57, %cst_22 [1] : vector<32x32xf32> to vector<32xf32>
    %59 = vector.shape_cast %58 : vector<32xf32> to vector<32x1xf32>
    %60 = vector.broadcast %59 : vector<32x1xf32> to vector<32x32xf32>
    %61 = arith.subf %57, %60 : vector<32x32xf32>
    %62 = math.exp %61 : vector<32x32xf32>
    %cst_23 = arith.constant dense<0.000000e+00> : vector<32xf32>
    %63 = vector.multi_reduction <add>, %62, %cst_23 [1] : vector<32x32xf32> to vector<32xf32>
    %64 = vector.shape_cast %63 : vector<32xf32> to vector<32x1xf32>
    %65 = vector.broadcast %64 : vector<32x1xf32> to vector<32x32xf32>
    %66 = arith.divf %62, %65 : vector<32x32xf32>
    %67 = arith.truncf %66 : vector<32x32xf32> to vector<32x32xbf16>
    %68 = arith.truncf %53 : vector<32x8xf32> to vector<32x8xbf16>
    %cst_24 = arith.constant dense<0.000000e+00> : vector<32x8xf32>
    %69 = tpu.matmul %67, %68, %cst_24 {dimension_numbers = #tpu.dot_dimension_numbers<[1], [0], [0], [1], [0, 0, 1, 1], [], []>} : vector<32x32xbf16>, vector<32x8xbf16>, vector<32x8xf32> -> vector<32x8xf32>
    %70 = vector.extract_strided_slice %50 {offsets = [0, 8], sizes = [32, 8], strides = [1, 1]} : vector<32x96xf32> to vector<32x8xf32>
    %71 = vector.extract_strided_slice %50 {offsets = [0, 40], sizes = [32, 8], strides = [1, 1]} : vector<32x96xf32> to vector<32x8xf32>
    %72 = vector.extract_strided_slice %50 {offsets = [0, 72], sizes = [32, 8], strides = [1, 1]} : vector<32x96xf32> to vector<32x8xf32>
    %73 = arith.truncf %70 : vector<32x8xf32> to vector<32x8xbf16>
    %74 = arith.truncf %71 : vector<32x8xf32> to vector<32x8xbf16>
    %cst_25 = arith.constant dense<0.000000e+00> : vector<32x32xf32>
    %75 = tpu.matmul %73, %74, %cst_25 {dimension_numbers = #tpu.dot_dimension_numbers<[1], [1], [0], [0], [0, 0, 1, 0], [], []>} : vector<32x8xbf16>, vector<32x8xbf16>, vector<32x32xf32> -> vector<32x32xf32>
    %76 = arith.addf %75, %43 : vector<32x32xf32>
    %cst_26 = arith.constant dense<0xFF800000> : vector<32xf32>
    %77 = vector.multi_reduction <maximumf>, %76, %cst_26 [1] : vector<32x32xf32> to vector<32xf32>
    %78 = vector.shape_cast %77 : vector<32xf32> to vector<32x1xf32>
    %79 = vector.broadcast %78 : vector<32x1xf32> to vector<32x32xf32>
    %80 = arith.subf %76, %79 : vector<32x32xf32>
    %81 = math.exp %80 : vector<32x32xf32>
    %cst_27 = arith.constant dense<0.000000e+00> : vector<32xf32>
    %82 = vector.multi_reduction <add>, %81, %cst_27 [1] : vector<32x32xf32> to vector<32xf32>
    %83 = vector.shape_cast %82 : vector<32xf32> to vector<32x1xf32>
    %84 = vector.broadcast %83 : vector<32x1xf32> to vector<32x32xf32>
    %85 = arith.divf %81, %84 : vector<32x32xf32>
    %86 = arith.truncf %85 : vector<32x32xf32> to vector<32x32xbf16>
    %87 = arith.truncf %72 : vector<32x8xf32> to vector<32x8xbf16>
    %cst_28 = arith.constant dense<0.000000e+00> : vector<32x8xf32>
    %88 = tpu.matmul %86, %87, %cst_28 {dimension_numbers = #tpu.dot_dimension_numbers<[1], [0], [0], [1], [0, 0, 1, 1], [], []>} : vector<32x32xbf16>, vector<32x8xbf16>, vector<32x8xf32> -> vector<32x8xf32>
    %89 = vector.extract_strided_slice %50 {offsets = [0, 16], sizes = [32, 8], strides = [1, 1]} : vector<32x96xf32> to vector<32x8xf32>
    %90 = vector.extract_strided_slice %50 {offsets = [0, 48], sizes = [32, 8], strides = [1, 1]} : vector<32x96xf32> to vector<32x8xf32>
    %91 = vector.extract_strided_slice %50 {offsets = [0, 80], sizes = [32, 8], strides = [1, 1]} : vector<32x96xf32> to vector<32x8xf32>
    %92 = arith.truncf %89 : vector<32x8xf32> to vector<32x8xbf16>
    %93 = arith.truncf %90 : vector<32x8xf32> to vector<32x8xbf16>
    %cst_29 = arith.constant dense<0.000000e+00> : vector<32x32xf32>
    %94 = tpu.matmul %92, %93, %cst_29 {dimension_numbers = #tpu.dot_dimension_numbers<[1], [1], [0], [0], [0, 0, 1, 0], [], []>} : vector<32x8xbf16>, vector<32x8xbf16>, vector<32x32xf32> -> vector<32x32xf32>
    %95 = arith.addf %94, %43 : vector<32x32xf32>
    %cst_30 = arith.constant dense<0xFF800000> : vector<32xf32>
    %96 = vector.multi_reduction <maximumf>, %95, %cst_30 [1] : vector<32x32xf32> to vector<32xf32>
    %97 = vector.shape_cast %96 : vector<32xf32> to vector<32x1xf32>
    %98 = vector.broadcast %97 : vector<32x1xf32> to vector<32x32xf32>
    %99 = arith.subf %95, %98 : vector<32x32xf32>
    %100 = math.exp %99 : vector<32x32xf32>
    %cst_31 = arith.constant dense<0.000000e+00> : vector<32xf32>
    %101 = vector.multi_reduction <add>, %100, %cst_31 [1] : vector<32x32xf32> to vector<32xf32>
    %102 = vector.shape_cast %101 : vector<32xf32> to vector<32x1xf32>
    %103 = vector.broadcast %102 : vector<32x1xf32> to vector<32x32xf32>
    %104 = arith.divf %100, %103 : vector<32x32xf32>
    %105 = arith.truncf %104 : vector<32x32xf32> to vector<32x32xbf16>
    %106 = arith.truncf %91 : vector<32x8xf32> to vector<32x8xbf16>
    %cst_32 = arith.constant dense<0.000000e+00> : vector<32x8xf32>
    %107 = tpu.matmul %105, %106, %cst_32 {dimension_numbers = #tpu.dot_dimension_numbers<[1], [0], [0], [1], [0, 0, 1, 1], [], []>} : vector<32x32xbf16>, vector<32x8xbf16>, vector<32x8xf32> -> vector<32x8xf32>
    %108 = vector.extract_strided_slice %50 {offsets = [0, 24], sizes = [32, 8], strides = [1, 1]} : vector<32x96xf32> to vector<32x8xf32>
    %109 = vector.extract_strided_slice %50 {offsets = [0, 56], sizes = [32, 8], strides = [1, 1]} : vector<32x96xf32> to vector<32x8xf32>
    %110 = vector.extract_strided_slice %50 {offsets = [0, 88], sizes = [32, 8], strides = [1, 1]} : vector<32x96xf32> to vector<32x8xf32>
    %111 = arith.truncf %108 : vector<32x8xf32> to vector<32x8xbf16>
    %112 = arith.truncf %109 : vector<32x8xf32> to vector<32x8xbf16>
    %cst_33 = arith.constant dense<0.000000e+00> : vector<32x32xf32>
    %113 = tpu.matmul %111, %112, %cst_33 {dimension_numbers = #tpu.dot_dimension_numbers<[1], [1], [0], [0], [0, 0, 1, 0], [], []>} : vector<32x8xbf16>, vector<32x8xbf16>, vector<32x32xf32> -> vector<32x32xf32>
    %114 = arith.addf %113, %43 : vector<32x32xf32>
    %cst_34 = arith.constant dense<0xFF800000> : vector<32xf32>
    %115 = vector.multi_reduction <maximumf>, %114, %cst_34 [1] : vector<32x32xf32> to vector<32xf32>
    %116 = vector.shape_cast %115 : vector<32xf32> to vector<32x1xf32>
    %117 = vector.broadcast %116 : vector<32x1xf32> to vector<32x32xf32>
    %118 = arith.subf %114, %117 : vector<32x32xf32>
    %119 = math.exp %118 : vector<32x32xf32>
    %cst_35 = arith.constant dense<0.000000e+00> : vector<32xf32>
    %120 = vector.multi_reduction <add>, %119, %cst_35 [1] : vector<32x32xf32> to vector<32xf32>
    %121 = vector.shape_cast %120 : vector<32xf32> to vector<32x1xf32>
    %122 = vector.broadcast %121 : vector<32x1xf32> to vector<32x32xf32>
    %123 = arith.divf %119, %122 : vector<32x32xf32>
    %124 = arith.truncf %123 : vector<32x32xf32> to vector<32x32xbf16>
    %125 = arith.truncf %110 : vector<32x8xf32> to vector<32x8xbf16>
    %cst_36 = arith.constant dense<0.000000e+00> : vector<32x8xf32>
    %126 = tpu.matmul %124, %125, %cst_36 {dimension_numbers = #tpu.dot_dimension_numbers<[1], [0], [0], [1], [0, 0, 1, 1], [], []>} : vector<32x32xbf16>, vector<32x8xbf16>, vector<32x8xf32> -> vector<32x8xf32>
    %127 = tpu.concatenate %69, %88, %107, %126 in 1 : vector<32x8xf32>, vector<32x8xf32>, vector<32x8xf32>, vector<32x8xf32> -> vector<32x32xf32>
    %128 = arith.truncf %127 : vector<32x32xf32> to vector<32x32xbf16>
    %c0_37 = arith.constant 0 : index
    %c0_38 = arith.constant 0 : index
    %c0_39 = arith.constant 0 : index
    %129 = vector.load %arg5[%c0_37, %c0_38, %c0_39] : memref<4x32x32xbf16, #tpu.memory_space<vmem>>, vector<1x32x32xbf16>
    %130 = vector.shape_cast %129 : vector<1x32x32xbf16> to vector<32x32xbf16>
    %cst_40 = arith.constant dense<0.000000e+00> : vector<32x32xf32>
    %131 = tpu.matmul %128, %130, %cst_40 {dimension_numbers = #tpu.dot_dimension_numbers<[1], [0], [0], [1], [0, 0, 1, 1], [], []>} : vector<32x32xbf16>, vector<32x32xbf16>, vector<32x32xf32> -> vector<32x32xf32>
    %c5 = arith.constant 5 : index
    %c0_41 = arith.constant 0 : index
    %132 = vector.load %arg11[%c5, %c0_41] : memref<37x96xf32, #tpu.memory_space<vmem>>, vector<1x32xf32>
    %133 = vector.broadcast %132 : vector<1x32xf32> to vector<32x32xf32>
    %134 = arith.addf %131, %133 : vector<32x32xf32>
    %135 = arith.addf %5, %134 : vector<32x32xf32>
    %cst_42 = arith.constant dense<0.000000e+00> : vector<32xf32>
    %136 = vector.multi_reduction <add>, %135, %cst_42 [1] : vector<32x32xf32> to vector<32xf32>
    %137 = vector.shape_cast %136 : vector<32xf32> to vector<32x1xf32>
    %cst_43 = arith.constant 3.200000e+01 : f32
    %138 = vector.broadcast %cst_43 : f32 to vector<32x1xf32>
    %139 = arith.divf %137, %138 : vector<32x1xf32>
    %140 = vector.broadcast %139 : vector<32x1xf32> to vector<32x32xf32>
    %141 = arith.subf %135, %140 : vector<32x32xf32>
    %142 = vector.broadcast %139 : vector<32x1xf32> to vector<32x32xf32>
    %143 = arith.subf %135, %142 : vector<32x32xf32>
    %144 = arith.mulf %141, %143 : vector<32x32xf32>
    %cst_44 = arith.constant dense<0.000000e+00> : vector<32xf32>
    %145 = vector.multi_reduction <add>, %144, %cst_44 [1] : vector<32x32xf32> to vector<32xf32>
    %146 = vector.shape_cast %145 : vector<32xf32> to vector<32x1xf32>
    %cst_45 = arith.constant 3.200000e+01 : f32
    %147 = vector.broadcast %cst_45 : f32 to vector<32x1xf32>
    %148 = arith.divf %146, %147 : vector<32x1xf32>
    %149 = vector.broadcast %139 : vector<32x1xf32> to vector<32x32xf32>
    %150 = arith.subf %135, %149 : vector<32x32xf32>
    %cst_46 = arith.constant 9.99999974E-6 : f32
    %151 = vector.broadcast %cst_46 : f32 to vector<32x1xf32>
    %152 = arith.addf %148, %151 : vector<32x1xf32>
    %153 = math.rsqrt %152 : vector<32x1xf32>
    %154 = vector.broadcast %153 : vector<32x1xf32> to vector<32x32xf32>
    %155 = arith.mulf %150, %154 : vector<32x32xf32>
    %c9 = arith.constant 9 : index
    %c0_47 = arith.constant 0 : index
    %156 = vector.load %arg11[%c9, %c0_47] : memref<37x96xf32, #tpu.memory_space<vmem>>, vector<1x32xf32>
    %157 = vector.broadcast %156 : vector<1x32xf32> to vector<32x32xf32>
    %158 = arith.mulf %155, %157 : vector<32x32xf32>
    %c10 = arith.constant 10 : index
    %c0_48 = arith.constant 0 : index
    %159 = vector.load %arg11[%c10, %c0_48] : memref<37x96xf32, #tpu.memory_space<vmem>>, vector<1x32xf32>
    %160 = vector.broadcast %159 : vector<1x32xf32> to vector<32x32xf32>
    %161 = arith.addf %158, %160 : vector<32x32xf32>
    %162 = arith.truncf %161 : vector<32x32xf32> to vector<32x32xbf16>
    %c0_49 = arith.constant 0 : index
    %c0_50 = arith.constant 0 : index
    %c0_51 = arith.constant 0 : index
    %163 = vector.load %arg6[%c0_49, %c0_50, %c0_51] : memref<4x32x64xbf16, #tpu.memory_space<vmem>>, vector<1x32x64xbf16>
    %164 = vector.shape_cast %163 : vector<1x32x64xbf16> to vector<32x64xbf16>
    %cst_52 = arith.constant dense<0.000000e+00> : vector<32x64xf32>
    %165 = tpu.matmul %162, %164, %cst_52 {dimension_numbers = #tpu.dot_dimension_numbers<[1], [0], [0], [1], [0, 0, 1, 1], [], []>} : vector<32x32xbf16>, vector<32x64xbf16>, vector<32x64xf32> -> vector<32x64xf32>
    %c25 = arith.constant 25 : index
    %c0_53 = arith.constant 0 : index
    %166 = vector.load %arg11[%c25, %c0_53] : memref<37x96xf32, #tpu.memory_space<vmem>>, vector<1x64xf32>
    %167 = vector.broadcast %166 : vector<1x64xf32> to vector<32x64xf32>
    %168 = arith.addf %165, %167 : vector<32x64xf32>
    %cst_54 = arith.constant 0.000000e+00 : f32
    %169 = vector.broadcast %cst_54 : f32 to vector<32x64xf32>
    %170 = arith.maximumf %168, %169 : vector<32x64xf32>
    %171 = arith.truncf %170 : vector<32x64xf32> to vector<32x64xbf16>
    %c0_55 = arith.constant 0 : index
    %c0_56 = arith.constant 0 : index
    %c0_57 = arith.constant 0 : index
    %172 = vector.load %arg7[%c0_55, %c0_56, %c0_57] : memref<4x64x32xbf16, #tpu.memory_space<vmem>>, vector<1x64x32xbf16>
    %173 = vector.shape_cast %172 : vector<1x64x32xbf16> to vector<64x32xbf16>
    %cst_58 = arith.constant dense<0.000000e+00> : vector<32x32xf32>
    %174 = tpu.matmul %171, %173, %cst_58 {dimension_numbers = #tpu.dot_dimension_numbers<[1], [0], [0], [1], [0, 0, 1, 1], [], []>} : vector<32x64xbf16>, vector<64x32xbf16>, vector<32x32xf32> -> vector<32x32xf32>
    %c29 = arith.constant 29 : index
    %c0_59 = arith.constant 0 : index
    %175 = vector.load %arg11[%c29, %c0_59] : memref<37x96xf32, #tpu.memory_space<vmem>>, vector<1x32xf32>
    %176 = vector.broadcast %175 : vector<1x32xf32> to vector<32x32xf32>
    %177 = arith.addf %174, %176 : vector<32x32xf32>
    %178 = arith.addf %161, %177 : vector<32x32xf32>
    %cst_60 = arith.constant dense<0.000000e+00> : vector<32xf32>
    %179 = vector.multi_reduction <add>, %178, %cst_60 [1] : vector<32x32xf32> to vector<32xf32>
    %180 = vector.shape_cast %179 : vector<32xf32> to vector<32x1xf32>
    %cst_61 = arith.constant 3.200000e+01 : f32
    %181 = vector.broadcast %cst_61 : f32 to vector<32x1xf32>
    %182 = arith.divf %180, %181 : vector<32x1xf32>
    %183 = vector.broadcast %182 : vector<32x1xf32> to vector<32x32xf32>
    %184 = arith.subf %178, %183 : vector<32x32xf32>
    %185 = vector.broadcast %182 : vector<32x1xf32> to vector<32x32xf32>
    %186 = arith.subf %178, %185 : vector<32x32xf32>
    %187 = arith.mulf %184, %186 : vector<32x32xf32>
    %cst_62 = arith.constant dense<0.000000e+00> : vector<32xf32>
    %188 = vector.multi_reduction <add>, %187, %cst_62 [1] : vector<32x32xf32> to vector<32xf32>
    %189 = vector.shape_cast %188 : vector<32xf32> to vector<32x1xf32>
    %cst_63 = arith.constant 3.200000e+01 : f32
    %190 = vector.broadcast %cst_63 : f32 to vector<32x1xf32>
    %191 = arith.divf %189, %190 : vector<32x1xf32>
    %192 = vector.broadcast %182 : vector<32x1xf32> to vector<32x32xf32>
    %193 = arith.subf %178, %192 : vector<32x32xf32>
    %cst_64 = arith.constant 9.99999974E-6 : f32
    %194 = vector.broadcast %cst_64 : f32 to vector<32x1xf32>
    %195 = arith.addf %191, %194 : vector<32x1xf32>
    %196 = math.rsqrt %195 : vector<32x1xf32>
    %197 = vector.broadcast %196 : vector<32x1xf32> to vector<32x32xf32>
    %198 = arith.mulf %193, %197 : vector<32x32xf32>
    %c11 = arith.constant 11 : index
    %c0_65 = arith.constant 0 : index
    %199 = vector.load %arg11[%c11, %c0_65] : memref<37x96xf32, #tpu.memory_space<vmem>>, vector<1x32xf32>
    %200 = vector.broadcast %199 : vector<1x32xf32> to vector<32x32xf32>
    %201 = arith.mulf %198, %200 : vector<32x32xf32>
    %c12 = arith.constant 12 : index
    %c0_66 = arith.constant 0 : index
    %202 = vector.load %arg11[%c12, %c0_66] : memref<37x96xf32, #tpu.memory_space<vmem>>, vector<1x32xf32>
    %203 = vector.broadcast %202 : vector<1x32xf32> to vector<32x32xf32>
    %204 = arith.addf %201, %203 : vector<32x32xf32>
    %205 = arith.truncf %204 : vector<32x32xf32> to vector<32x32xbf16>
    %c1_67 = arith.constant 1 : index
    %c0_68 = arith.constant 0 : index
    %c0_69 = arith.constant 0 : index
    %206 = vector.load %arg4[%c1_67, %c0_68, %c0_69] : memref<4x32x96xbf16, #tpu.memory_space<vmem>>, vector<1x32x96xbf16>
    %207 = vector.shape_cast %206 : vector<1x32x96xbf16> to vector<32x96xbf16>
    %cst_70 = arith.constant dense<0.000000e+00> : vector<32x96xf32>
    %208 = tpu.matmul %205, %207, %cst_70 {dimension_numbers = #tpu.dot_dimension_numbers<[1], [0], [0], [1], [0, 0, 1, 1], [], []>} : vector<32x32xbf16>, vector<32x96xbf16>, vector<32x96xf32> -> vector<32x96xf32>
    %c2 = arith.constant 2 : index
    %c0_71 = arith.constant 0 : index
    %209 = vector.load %arg11[%c2, %c0_71] : memref<37x96xf32, #tpu.memory_space<vmem>>, vector<1x96xf32>
    %210 = vector.broadcast %209 : vector<1x96xf32> to vector<32x96xf32>
    %211 = arith.addf %208, %210 : vector<32x96xf32>
    %212 = vector.extract_strided_slice %211 {offsets = [0, 0], sizes = [32, 8], strides = [1, 1]} : vector<32x96xf32> to vector<32x8xf32>
    %213 = vector.extract_strided_slice %211 {offsets = [0, 32], sizes = [32, 8], strides = [1, 1]} : vector<32x96xf32> to vector<32x8xf32>
    %214 = vector.extract_strided_slice %211 {offsets = [0, 64], sizes = [32, 8], strides = [1, 1]} : vector<32x96xf32> to vector<32x8xf32>
    %215 = arith.truncf %212 : vector<32x8xf32> to vector<32x8xbf16>
    %216 = arith.truncf %213 : vector<32x8xf32> to vector<32x8xbf16>
    %cst_72 = arith.constant dense<0.000000e+00> : vector<32x32xf32>
    %217 = tpu.matmul %215, %216, %cst_72 {dimension_numbers = #tpu.dot_dimension_numbers<[1], [1], [0], [0], [0, 0, 1, 0], [], []>} : vector<32x8xbf16>, vector<32x8xbf16>, vector<32x32xf32> -> vector<32x32xf32>
    %218 = arith.addf %217, %43 : vector<32x32xf32>
    %cst_73 = arith.constant dense<0xFF800000> : vector<32xf32>
    %219 = vector.multi_reduction <maximumf>, %218, %cst_73 [1] : vector<32x32xf32> to vector<32xf32>
    %220 = vector.shape_cast %219 : vector<32xf32> to vector<32x1xf32>
    %221 = vector.broadcast %220 : vector<32x1xf32> to vector<32x32xf32>
    %222 = arith.subf %218, %221 : vector<32x32xf32>
    %223 = math.exp %222 : vector<32x32xf32>
    %cst_74 = arith.constant dense<0.000000e+00> : vector<32xf32>
    %224 = vector.multi_reduction <add>, %223, %cst_74 [1] : vector<32x32xf32> to vector<32xf32>
    %225 = vector.shape_cast %224 : vector<32xf32> to vector<32x1xf32>
    %226 = vector.broadcast %225 : vector<32x1xf32> to vector<32x32xf32>
    %227 = arith.divf %223, %226 : vector<32x32xf32>
    %228 = arith.truncf %227 : vector<32x32xf32> to vector<32x32xbf16>
    %229 = arith.truncf %214 : vector<32x8xf32> to vector<32x8xbf16>
    %cst_75 = arith.constant dense<0.000000e+00> : vector<32x8xf32>
    %230 = tpu.matmul %228, %229, %cst_75 {dimension_numbers = #tpu.dot_dimension_numbers<[1], [0], [0], [1], [0, 0, 1, 1], [], []>} : vector<32x32xbf16>, vector<32x8xbf16>, vector<32x8xf32> -> vector<32x8xf32>
    %231 = vector.extract_strided_slice %211 {offsets = [0, 8], sizes = [32, 8], strides = [1, 1]} : vector<32x96xf32> to vector<32x8xf32>
    %232 = vector.extract_strided_slice %211 {offsets = [0, 40], sizes = [32, 8], strides = [1, 1]} : vector<32x96xf32> to vector<32x8xf32>
    %233 = vector.extract_strided_slice %211 {offsets = [0, 72], sizes = [32, 8], strides = [1, 1]} : vector<32x96xf32> to vector<32x8xf32>
    %234 = arith.truncf %231 : vector<32x8xf32> to vector<32x8xbf16>
    %235 = arith.truncf %232 : vector<32x8xf32> to vector<32x8xbf16>
    %cst_76 = arith.constant dense<0.000000e+00> : vector<32x32xf32>
    %236 = tpu.matmul %234, %235, %cst_76 {dimension_numbers = #tpu.dot_dimension_numbers<[1], [1], [0], [0], [0, 0, 1, 0], [], []>} : vector<32x8xbf16>, vector<32x8xbf16>, vector<32x32xf32> -> vector<32x32xf32>
    %237 = arith.addf %236, %43 : vector<32x32xf32>
    %cst_77 = arith.constant dense<0xFF800000> : vector<32xf32>
    %238 = vector.multi_reduction <maximumf>, %237, %cst_77 [1] : vector<32x32xf32> to vector<32xf32>
    %239 = vector.shape_cast %238 : vector<32xf32> to vector<32x1xf32>
    %240 = vector.broadcast %239 : vector<32x1xf32> to vector<32x32xf32>
    %241 = arith.subf %237, %240 : vector<32x32xf32>
    %242 = math.exp %241 : vector<32x32xf32>
    %cst_78 = arith.constant dense<0.000000e+00> : vector<32xf32>
    %243 = vector.multi_reduction <add>, %242, %cst_78 [1] : vector<32x32xf32> to vector<32xf32>
    %244 = vector.shape_cast %243 : vector<32xf32> to vector<32x1xf32>
    %245 = vector.broadcast %244 : vector<32x1xf32> to vector<32x32xf32>
    %246 = arith.divf %242, %245 : vector<32x32xf32>
    %247 = arith.truncf %246 : vector<32x32xf32> to vector<32x32xbf16>
    %248 = arith.truncf %233 : vector<32x8xf32> to vector<32x8xbf16>
    %cst_79 = arith.constant dense<0.000000e+00> : vector<32x8xf32>
    %249 = tpu.matmul %247, %248, %cst_79 {dimension_numbers = #tpu.dot_dimension_numbers<[1], [0], [0], [1], [0, 0, 1, 1], [], []>} : vector<32x32xbf16>, vector<32x8xbf16>, vector<32x8xf32> -> vector<32x8xf32>
    %250 = vector.extract_strided_slice %211 {offsets = [0, 16], sizes = [32, 8], strides = [1, 1]} : vector<32x96xf32> to vector<32x8xf32>
    %251 = vector.extract_strided_slice %211 {offsets = [0, 48], sizes = [32, 8], strides = [1, 1]} : vector<32x96xf32> to vector<32x8xf32>
    %252 = vector.extract_strided_slice %211 {offsets = [0, 80], sizes = [32, 8], strides = [1, 1]} : vector<32x96xf32> to vector<32x8xf32>
    %253 = arith.truncf %250 : vector<32x8xf32> to vector<32x8xbf16>
    %254 = arith.truncf %251 : vector<32x8xf32> to vector<32x8xbf16>
    %cst_80 = arith.constant dense<0.000000e+00> : vector<32x32xf32>
    %255 = tpu.matmul %253, %254, %cst_80 {dimension_numbers = #tpu.dot_dimension_numbers<[1], [1], [0], [0], [0, 0, 1, 0], [], []>} : vector<32x8xbf16>, vector<32x8xbf16>, vector<32x32xf32> -> vector<32x32xf32>
    %256 = arith.addf %255, %43 : vector<32x32xf32>
    %cst_81 = arith.constant dense<0xFF800000> : vector<32xf32>
    %257 = vector.multi_reduction <maximumf>, %256, %cst_81 [1] : vector<32x32xf32> to vector<32xf32>
    %258 = vector.shape_cast %257 : vector<32xf32> to vector<32x1xf32>
    %259 = vector.broadcast %258 : vector<32x1xf32> to vector<32x32xf32>
    %260 = arith.subf %256, %259 : vector<32x32xf32>
    %261 = math.exp %260 : vector<32x32xf32>
    %cst_82 = arith.constant dense<0.000000e+00> : vector<32xf32>
    %262 = vector.multi_reduction <add>, %261, %cst_82 [1] : vector<32x32xf32> to vector<32xf32>
    %263 = vector.shape_cast %262 : vector<32xf32> to vector<32x1xf32>
    %264 = vector.broadcast %263 : vector<32x1xf32> to vector<32x32xf32>
    %265 = arith.divf %261, %264 : vector<32x32xf32>
    %266 = arith.truncf %265 : vector<32x32xf32> to vector<32x32xbf16>
    %267 = arith.truncf %252 : vector<32x8xf32> to vector<32x8xbf16>
    %cst_83 = arith.constant dense<0.000000e+00> : vector<32x8xf32>
    %268 = tpu.matmul %266, %267, %cst_83 {dimension_numbers = #tpu.dot_dimension_numbers<[1], [0], [0], [1], [0, 0, 1, 1], [], []>} : vector<32x32xbf16>, vector<32x8xbf16>, vector<32x8xf32> -> vector<32x8xf32>
    %269 = vector.extract_strided_slice %211 {offsets = [0, 24], sizes = [32, 8], strides = [1, 1]} : vector<32x96xf32> to vector<32x8xf32>
    %270 = vector.extract_strided_slice %211 {offsets = [0, 56], sizes = [32, 8], strides = [1, 1]} : vector<32x96xf32> to vector<32x8xf32>
    %271 = vector.extract_strided_slice %211 {offsets = [0, 88], sizes = [32, 8], strides = [1, 1]} : vector<32x96xf32> to vector<32x8xf32>
    %272 = arith.truncf %269 : vector<32x8xf32> to vector<32x8xbf16>
    %273 = arith.truncf %270 : vector<32x8xf32> to vector<32x8xbf16>
    %cst_84 = arith.constant dense<0.000000e+00> : vector<32x32xf32>
    %274 = tpu.matmul %272, %273, %cst_84 {dimension_numbers = #tpu.dot_dimension_numbers<[1], [1], [0], [0], [0, 0, 1, 0], [], []>} : vector<32x8xbf16>, vector<32x8xbf16>, vector<32x32xf32> -> vector<32x32xf32>
    %275 = arith.addf %274, %43 : vector<32x32xf32>
    %cst_85 = arith.constant dense<0xFF800000> : vector<32xf32>
    %276 = vector.multi_reduction <maximumf>, %275, %cst_85 [1] : vector<32x32xf32> to vector<32xf32>
    %277 = vector.shape_cast %276 : vector<32xf32> to vector<32x1xf32>
    %278 = vector.broadcast %277 : vector<32x1xf32> to vector<32x32xf32>
    %279 = arith.subf %275, %278 : vector<32x32xf32>
    %280 = math.exp %279 : vector<32x32xf32>
    %cst_86 = arith.constant dense<0.000000e+00> : vector<32xf32>
    %281 = vector.multi_reduction <add>, %280, %cst_86 [1] : vector<32x32xf32> to vector<32xf32>
    %282 = vector.shape_cast %281 : vector<32xf32> to vector<32x1xf32>
    %283 = vector.broadcast %282 : vector<32x1xf32> to vector<32x32xf32>
    %284 = arith.divf %280, %283 : vector<32x32xf32>
    %285 = arith.truncf %284 : vector<32x32xf32> to vector<32x32xbf16>
    %286 = arith.truncf %271 : vector<32x8xf32> to vector<32x8xbf16>
    %cst_87 = arith.constant dense<0.000000e+00> : vector<32x8xf32>
    %287 = tpu.matmul %285, %286, %cst_87 {dimension_numbers = #tpu.dot_dimension_numbers<[1], [0], [0], [1], [0, 0, 1, 1], [], []>} : vector<32x32xbf16>, vector<32x8xbf16>, vector<32x8xf32> -> vector<32x8xf32>
    %288 = tpu.concatenate %230, %249, %268, %287 in 1 : vector<32x8xf32>, vector<32x8xf32>, vector<32x8xf32>, vector<32x8xf32> -> vector<32x32xf32>
    %289 = arith.truncf %288 : vector<32x32xf32> to vector<32x32xbf16>
    %c1_88 = arith.constant 1 : index
    %c0_89 = arith.constant 0 : index
    %c0_90 = arith.constant 0 : index
    %290 = vector.load %arg5[%c1_88, %c0_89, %c0_90] : memref<4x32x32xbf16, #tpu.memory_space<vmem>>, vector<1x32x32xbf16>
    %291 = vector.shape_cast %290 : vector<1x32x32xbf16> to vector<32x32xbf16>
    %cst_91 = arith.constant dense<0.000000e+00> : vector<32x32xf32>
    %292 = tpu.matmul %289, %291, %cst_91 {dimension_numbers = #tpu.dot_dimension_numbers<[1], [0], [0], [1], [0, 0, 1, 1], [], []>} : vector<32x32xbf16>, vector<32x32xbf16>, vector<32x32xf32> -> vector<32x32xf32>
    %c6 = arith.constant 6 : index
    %c0_92 = arith.constant 0 : index
    %293 = vector.load %arg11[%c6, %c0_92] : memref<37x96xf32, #tpu.memory_space<vmem>>, vector<1x32xf32>
    %294 = vector.broadcast %293 : vector<1x32xf32> to vector<32x32xf32>
    %295 = arith.addf %292, %294 : vector<32x32xf32>
    %296 = arith.addf %204, %295 : vector<32x32xf32>
    %cst_93 = arith.constant dense<0.000000e+00> : vector<32xf32>
    %297 = vector.multi_reduction <add>, %296, %cst_93 [1] : vector<32x32xf32> to vector<32xf32>
    %298 = vector.shape_cast %297 : vector<32xf32> to vector<32x1xf32>
    %cst_94 = arith.constant 3.200000e+01 : f32
    %299 = vector.broadcast %cst_94 : f32 to vector<32x1xf32>
    %300 = arith.divf %298, %299 : vector<32x1xf32>
    %301 = vector.broadcast %300 : vector<32x1xf32> to vector<32x32xf32>
    %302 = arith.subf %296, %301 : vector<32x32xf32>
    %303 = vector.broadcast %300 : vector<32x1xf32> to vector<32x32xf32>
    %304 = arith.subf %296, %303 : vector<32x32xf32>
    %305 = arith.mulf %302, %304 : vector<32x32xf32>
    %cst_95 = arith.constant dense<0.000000e+00> : vector<32xf32>
    %306 = vector.multi_reduction <add>, %305, %cst_95 [1] : vector<32x32xf32> to vector<32xf32>
    %307 = vector.shape_cast %306 : vector<32xf32> to vector<32x1xf32>
    %cst_96 = arith.constant 3.200000e+01 : f32
    %308 = vector.broadcast %cst_96 : f32 to vector<32x1xf32>
    %309 = arith.divf %307, %308 : vector<32x1xf32>
    %310 = vector.broadcast %300 : vector<32x1xf32> to vector<32x32xf32>
    %311 = arith.subf %296, %310 : vector<32x32xf32>
    %cst_97 = arith.constant 9.99999974E-6 : f32
    %312 = vector.broadcast %cst_97 : f32 to vector<32x1xf32>
    %313 = arith.addf %309, %312 : vector<32x1xf32>
    %314 = math.rsqrt %313 : vector<32x1xf32>
    %315 = vector.broadcast %314 : vector<32x1xf32> to vector<32x32xf32>
    %316 = arith.mulf %311, %315 : vector<32x32xf32>
    %c13 = arith.constant 13 : index
    %c0_98 = arith.constant 0 : index
    %317 = vector.load %arg11[%c13, %c0_98] : memref<37x96xf32, #tpu.memory_space<vmem>>, vector<1x32xf32>
    %318 = vector.broadcast %317 : vector<1x32xf32> to vector<32x32xf32>
    %319 = arith.mulf %316, %318 : vector<32x32xf32>
    %c14 = arith.constant 14 : index
    %c0_99 = arith.constant 0 : index
    %320 = vector.load %arg11[%c14, %c0_99] : memref<37x96xf32, #tpu.memory_space<vmem>>, vector<1x32xf32>
    %321 = vector.broadcast %320 : vector<1x32xf32> to vector<32x32xf32>
    %322 = arith.addf %319, %321 : vector<32x32xf32>
    %323 = arith.truncf %322 : vector<32x32xf32> to vector<32x32xbf16>
    %c1_100 = arith.constant 1 : index
    %c0_101 = arith.constant 0 : index
    %c0_102 = arith.constant 0 : index
    %324 = vector.load %arg6[%c1_100, %c0_101, %c0_102] : memref<4x32x64xbf16, #tpu.memory_space<vmem>>, vector<1x32x64xbf16>
    %325 = vector.shape_cast %324 : vector<1x32x64xbf16> to vector<32x64xbf16>
    %cst_103 = arith.constant dense<0.000000e+00> : vector<32x64xf32>
    %326 = tpu.matmul %323, %325, %cst_103 {dimension_numbers = #tpu.dot_dimension_numbers<[1], [0], [0], [1], [0, 0, 1, 1], [], []>} : vector<32x32xbf16>, vector<32x64xbf16>, vector<32x64xf32> -> vector<32x64xf32>
    %c26 = arith.constant 26 : index
    %c0_104 = arith.constant 0 : index
    %327 = vector.load %arg11[%c26, %c0_104] : memref<37x96xf32, #tpu.memory_space<vmem>>, vector<1x64xf32>
    %328 = vector.broadcast %327 : vector<1x64xf32> to vector<32x64xf32>
    %329 = arith.addf %326, %328 : vector<32x64xf32>
    %cst_105 = arith.constant 0.000000e+00 : f32
    %330 = vector.broadcast %cst_105 : f32 to vector<32x64xf32>
    %331 = arith.maximumf %329, %330 : vector<32x64xf32>
    %332 = arith.truncf %331 : vector<32x64xf32> to vector<32x64xbf16>
    %c1_106 = arith.constant 1 : index
    %c0_107 = arith.constant 0 : index
    %c0_108 = arith.constant 0 : index
    %333 = vector.load %arg7[%c1_106, %c0_107, %c0_108] : memref<4x64x32xbf16, #tpu.memory_space<vmem>>, vector<1x64x32xbf16>
    %334 = vector.shape_cast %333 : vector<1x64x32xbf16> to vector<64x32xbf16>
    %cst_109 = arith.constant dense<0.000000e+00> : vector<32x32xf32>
    %335 = tpu.matmul %332, %334, %cst_109 {dimension_numbers = #tpu.dot_dimension_numbers<[1], [0], [0], [1], [0, 0, 1, 1], [], []>} : vector<32x64xbf16>, vector<64x32xbf16>, vector<32x32xf32> -> vector<32x32xf32>
    %c30 = arith.constant 30 : index
    %c0_110 = arith.constant 0 : index
    %336 = vector.load %arg11[%c30, %c0_110] : memref<37x96xf32, #tpu.memory_space<vmem>>, vector<1x32xf32>
    %337 = vector.broadcast %336 : vector<1x32xf32> to vector<32x32xf32>
    %338 = arith.addf %335, %337 : vector<32x32xf32>
    %339 = arith.addf %322, %338 : vector<32x32xf32>
    %cst_111 = arith.constant dense<0.000000e+00> : vector<32xf32>
    %340 = vector.multi_reduction <add>, %339, %cst_111 [1] : vector<32x32xf32> to vector<32xf32>
    %341 = vector.shape_cast %340 : vector<32xf32> to vector<32x1xf32>
    %cst_112 = arith.constant 3.200000e+01 : f32
    %342 = vector.broadcast %cst_112 : f32 to vector<32x1xf32>
    %343 = arith.divf %341, %342 : vector<32x1xf32>
    %344 = vector.broadcast %343 : vector<32x1xf32> to vector<32x32xf32>
    %345 = arith.subf %339, %344 : vector<32x32xf32>
    %346 = vector.broadcast %343 : vector<32x1xf32> to vector<32x32xf32>
    %347 = arith.subf %339, %346 : vector<32x32xf32>
    %348 = arith.mulf %345, %347 : vector<32x32xf32>
    %cst_113 = arith.constant dense<0.000000e+00> : vector<32xf32>
    %349 = vector.multi_reduction <add>, %348, %cst_113 [1] : vector<32x32xf32> to vector<32xf32>
    %350 = vector.shape_cast %349 : vector<32xf32> to vector<32x1xf32>
    %cst_114 = arith.constant 3.200000e+01 : f32
    %351 = vector.broadcast %cst_114 : f32 to vector<32x1xf32>
    %352 = arith.divf %350, %351 : vector<32x1xf32>
    %353 = vector.broadcast %343 : vector<32x1xf32> to vector<32x32xf32>
    %354 = arith.subf %339, %353 : vector<32x32xf32>
    %cst_115 = arith.constant 9.99999974E-6 : f32
    %355 = vector.broadcast %cst_115 : f32 to vector<32x1xf32>
    %356 = arith.addf %352, %355 : vector<32x1xf32>
    %357 = math.rsqrt %356 : vector<32x1xf32>
    %358 = vector.broadcast %357 : vector<32x1xf32> to vector<32x32xf32>
    %359 = arith.mulf %354, %358 : vector<32x32xf32>
    %c15 = arith.constant 15 : index
    %c0_116 = arith.constant 0 : index
    %360 = vector.load %arg11[%c15, %c0_116] : memref<37x96xf32, #tpu.memory_space<vmem>>, vector<1x32xf32>
    %361 = vector.broadcast %360 : vector<1x32xf32> to vector<32x32xf32>
    %362 = arith.mulf %359, %361 : vector<32x32xf32>
    %c16 = arith.constant 16 : index
    %c0_117 = arith.constant 0 : index
    %363 = vector.load %arg11[%c16, %c0_117] : memref<37x96xf32, #tpu.memory_space<vmem>>, vector<1x32xf32>
    %364 = vector.broadcast %363 : vector<1x32xf32> to vector<32x32xf32>
    %365 = arith.addf %362, %364 : vector<32x32xf32>
    %c0_118 = arith.constant 0 : index
    %c0_119 = arith.constant 0 : index
    %366 = vector.load %arg1[%c0_118, %c0_119] : memref<8x16xf32, #tpu.memory_space<vmem>>, vector<8x16xf32>
    %367 = arith.truncf %366 : vector<8x16xf32> to vector<8x16xbf16>
    %c4 = arith.constant 4 : index
    %c0_120 = arith.constant 0 : index
    %368 = vector.load %arg3[%c4, %c0_120] : memref<20x32xbf16, #tpu.memory_space<vmem>>, vector<16x32xbf16>
    %cst_121 = arith.constant dense<0.000000e+00> : vector<8x32xf32>
    %369 = tpu.matmul %367, %368, %cst_121 {dimension_numbers = #tpu.dot_dimension_numbers<[1], [0], [0], [1], [0, 0, 1, 1], [], []>} : vector<8x16xbf16>, vector<16x32xbf16>, vector<8x32xf32> -> vector<8x32xf32>
    %c0_122 = arith.constant 0 : index
    %c0_123 = arith.constant 0 : index
    %370 = vector.load %arg11[%c0_122, %c0_123] : memref<37x96xf32, #tpu.memory_space<vmem>>, vector<1x32xf32>
    %371 = vector.broadcast %370 : vector<1x32xf32> to vector<8x32xf32>
    %372 = arith.addf %369, %371 : vector<8x32xf32>
    %373 = tpu.iota {dimensions = array<i32: 0>} : vector<8x8xi32>
    %c2_i32_124 = arith.constant 2 : i32
    %c0_i32_125 = arith.constant 0 : i32
    %374 = arith.cmpi eq, %c2_i32_124, %c0_i32_125 : i32
    %c1_i32_126 = arith.constant 1 : i32
    %375 = arith.select %374, %c1_i32_126, %c2_i32_124 : i32
    %376 = vector.broadcast %375 : i32 to vector<8x8xi32>
    %377 = arith.remsi %373, %376 : vector<8x8xi32>
    %c0_i32_127 = arith.constant 0 : i32
    %378 = vector.broadcast %c0_i32_127 : i32 to vector<8x8xi32>
    %379 = arith.cmpi ne, %377, %378 : vector<8x8xi32>
    %c0_i32_128 = arith.constant 0 : i32
    %380 = vector.broadcast %c0_i32_128 : i32 to vector<8x8xi32>
    %381 = arith.cmpi slt, %377, %380 : vector<8x8xi32>
    %c0_i32_129 = arith.constant 0 : i32
    %382 = arith.cmpi slt, %375, %c0_i32_129 : i32
    %383 = vector.broadcast %382 : i1 to vector<8x8xi1>
    %384 = vector.broadcast %383 : vector<8x8xi1> to vector<8x8xi1>
    %385 = arith.xori %381, %384 : vector<8x8xi1>
    %386 = arith.andi %385, %379 : vector<8x8xi1>
    %387 = vector.broadcast %375 : i32 to vector<8x8xi32>
    %388 = arith.addi %377, %387 : vector<8x8xi32>
    %389 = arith.select %386, %388, %377 : vector<8x8xi1>, vector<8x8xi32>
    %390 = tpu.iota {dimensions = array<i32: 1>} : vector<8x8xi32>
    %c2_i32_130 = arith.constant 2 : i32
    %c0_i32_131 = arith.constant 0 : i32
    %391 = arith.cmpi eq, %c2_i32_130, %c0_i32_131 : i32
    %c1_i32_132 = arith.constant 1 : i32
    %392 = arith.select %391, %c1_i32_132, %c2_i32_130 : i32
    %393 = vector.broadcast %392 : i32 to vector<8x8xi32>
    %394 = arith.remsi %390, %393 : vector<8x8xi32>
    %c0_i32_133 = arith.constant 0 : i32
    %395 = vector.broadcast %c0_i32_133 : i32 to vector<8x8xi32>
    %396 = arith.cmpi ne, %394, %395 : vector<8x8xi32>
    %c0_i32_134 = arith.constant 0 : i32
    %397 = vector.broadcast %c0_i32_134 : i32 to vector<8x8xi32>
    %398 = arith.cmpi slt, %394, %397 : vector<8x8xi32>
    %c0_i32_135 = arith.constant 0 : i32
    %399 = arith.cmpi slt, %392, %c0_i32_135 : i32
    %400 = vector.broadcast %399 : i1 to vector<8x8xi1>
    %401 = vector.broadcast %400 : vector<8x8xi1> to vector<8x8xi1>
    %402 = arith.xori %398, %401 : vector<8x8xi1>
    %403 = arith.andi %402, %396 : vector<8x8xi1>
    %404 = vector.broadcast %392 : i32 to vector<8x8xi32>
    %405 = arith.addi %394, %404 : vector<8x8xi32>
    %406 = arith.select %403, %405, %394 : vector<8x8xi1>, vector<8x8xi32>
    %407 = arith.cmpi eq, %389, %406 : vector<8x8xi32>
    %cst_136 = arith.constant 0.000000e+00 : f32
    %cst_137 = arith.constant -1.000000e+30 : f32
    %408 = vector.broadcast %cst_136 : f32 to vector<8x8xf32>
    %409 = vector.broadcast %cst_137 : f32 to vector<8x8xf32>
    %410 = arith.select %407, %408, %409 : vector<8x8xi1>, vector<8x8xf32>
    %411 = arith.truncf %372 : vector<8x32xf32> to vector<8x32xbf16>
    %c2_138 = arith.constant 2 : index
    %c0_139 = arith.constant 0 : index
    %c0_140 = arith.constant 0 : index
    %412 = vector.load %arg4[%c2_138, %c0_139, %c0_140] : memref<4x32x96xbf16, #tpu.memory_space<vmem>>, vector<1x32x96xbf16>
    %413 = vector.shape_cast %412 : vector<1x32x96xbf16> to vector<32x96xbf16>
    %cst_141 = arith.constant dense<0.000000e+00> : vector<8x96xf32>
    %414 = tpu.matmul %411, %413, %cst_141 {dimension_numbers = #tpu.dot_dimension_numbers<[1], [0], [0], [1], [0, 0, 1, 1], [], []>} : vector<8x32xbf16>, vector<32x96xbf16>, vector<8x96xf32> -> vector<8x96xf32>
    %c3 = arith.constant 3 : index
    %c0_142 = arith.constant 0 : index
    %415 = vector.load %arg11[%c3, %c0_142] : memref<37x96xf32, #tpu.memory_space<vmem>>, vector<1x96xf32>
    %416 = vector.broadcast %415 : vector<1x96xf32> to vector<8x96xf32>
    %417 = arith.addf %414, %416 : vector<8x96xf32>
    %418 = vector.extract_strided_slice %417 {offsets = [0, 0], sizes = [8, 8], strides = [1, 1]} : vector<8x96xf32> to vector<8x8xf32>
    %419 = vector.extract_strided_slice %417 {offsets = [0, 32], sizes = [8, 8], strides = [1, 1]} : vector<8x96xf32> to vector<8x8xf32>
    %420 = vector.extract_strided_slice %417 {offsets = [0, 64], sizes = [8, 8], strides = [1, 1]} : vector<8x96xf32> to vector<8x8xf32>
    %421 = arith.truncf %418 : vector<8x8xf32> to vector<8x8xbf16>
    %422 = arith.truncf %419 : vector<8x8xf32> to vector<8x8xbf16>
    %cst_143 = arith.constant dense<0.000000e+00> : vector<8x8xf32>
    %423 = tpu.matmul %421, %422, %cst_143 {dimension_numbers = #tpu.dot_dimension_numbers<[1], [1], [0], [0], [0, 0, 1, 0], [], []>} : vector<8x8xbf16>, vector<8x8xbf16>, vector<8x8xf32> -> vector<8x8xf32>
    %424 = arith.addf %423, %410 : vector<8x8xf32>
    %cst_144 = arith.constant dense<0xFF800000> : vector<8xf32>
    %425 = vector.multi_reduction <maximumf>, %424, %cst_144 [1] : vector<8x8xf32> to vector<8xf32>
    %426 = vector.shape_cast %425 : vector<8xf32> to vector<8x1xf32>
    %427 = vector.broadcast %426 : vector<8x1xf32> to vector<8x8xf32>
    %428 = arith.subf %424, %427 : vector<8x8xf32>
    %429 = math.exp %428 : vector<8x8xf32>
    %cst_145 = arith.constant dense<0.000000e+00> : vector<8xf32>
    %430 = vector.multi_reduction <add>, %429, %cst_145 [1] : vector<8x8xf32> to vector<8xf32>
    %431 = vector.shape_cast %430 : vector<8xf32> to vector<8x1xf32>
    %432 = vector.broadcast %431 : vector<8x1xf32> to vector<8x8xf32>
    %433 = arith.divf %429, %432 : vector<8x8xf32>
    %434 = arith.truncf %433 : vector<8x8xf32> to vector<8x8xbf16>
    %435 = arith.truncf %420 : vector<8x8xf32> to vector<8x8xbf16>
    %cst_146 = arith.constant dense<0.000000e+00> : vector<8x8xf32>
    %436 = tpu.matmul %434, %435, %cst_146 {dimension_numbers = #tpu.dot_dimension_numbers<[1], [0], [0], [1], [0, 0, 1, 1], [], []>} : vector<8x8xbf16>, vector<8x8xbf16>, vector<8x8xf32> -> vector<8x8xf32>
    %437 = vector.extract_strided_slice %417 {offsets = [0, 8], sizes = [8, 8], strides = [1, 1]} : vector<8x96xf32> to vector<8x8xf32>
    %438 = vector.extract_strided_slice %417 {offsets = [0, 40], sizes = [8, 8], strides = [1, 1]} : vector<8x96xf32> to vector<8x8xf32>
    %439 = vector.extract_strided_slice %417 {offsets = [0, 72], sizes = [8, 8], strides = [1, 1]} : vector<8x96xf32> to vector<8x8xf32>
    %440 = arith.truncf %437 : vector<8x8xf32> to vector<8x8xbf16>
    %441 = arith.truncf %438 : vector<8x8xf32> to vector<8x8xbf16>
    %cst_147 = arith.constant dense<0.000000e+00> : vector<8x8xf32>
    %442 = tpu.matmul %440, %441, %cst_147 {dimension_numbers = #tpu.dot_dimension_numbers<[1], [1], [0], [0], [0, 0, 1, 0], [], []>} : vector<8x8xbf16>, vector<8x8xbf16>, vector<8x8xf32> -> vector<8x8xf32>
    %443 = arith.addf %442, %410 : vector<8x8xf32>
    %cst_148 = arith.constant dense<0xFF800000> : vector<8xf32>
    %444 = vector.multi_reduction <maximumf>, %443, %cst_148 [1] : vector<8x8xf32> to vector<8xf32>
    %445 = vector.shape_cast %444 : vector<8xf32> to vector<8x1xf32>
    %446 = vector.broadcast %445 : vector<8x1xf32> to vector<8x8xf32>
    %447 = arith.subf %443, %446 : vector<8x8xf32>
    %448 = math.exp %447 : vector<8x8xf32>
    %cst_149 = arith.constant dense<0.000000e+00> : vector<8xf32>
    %449 = vector.multi_reduction <add>, %448, %cst_149 [1] : vector<8x8xf32> to vector<8xf32>
    %450 = vector.shape_cast %449 : vector<8xf32> to vector<8x1xf32>
    %451 = vector.broadcast %450 : vector<8x1xf32> to vector<8x8xf32>
    %452 = arith.divf %448, %451 : vector<8x8xf32>
    %453 = arith.truncf %452 : vector<8x8xf32> to vector<8x8xbf16>
    %454 = arith.truncf %439 : vector<8x8xf32> to vector<8x8xbf16>
    %cst_150 = arith.constant dense<0.000000e+00> : vector<8x8xf32>
    %455 = tpu.matmul %453, %454, %cst_150 {dimension_numbers = #tpu.dot_dimension_numbers<[1], [0], [0], [1], [0, 0, 1, 1], [], []>} : vector<8x8xbf16>, vector<8x8xbf16>, vector<8x8xf32> -> vector<8x8xf32>
    %456 = vector.extract_strided_slice %417 {offsets = [0, 16], sizes = [8, 8], strides = [1, 1]} : vector<8x96xf32> to vector<8x8xf32>
    %457 = vector.extract_strided_slice %417 {offsets = [0, 48], sizes = [8, 8], strides = [1, 1]} : vector<8x96xf32> to vector<8x8xf32>
    %458 = vector.extract_strided_slice %417 {offsets = [0, 80], sizes = [8, 8], strides = [1, 1]} : vector<8x96xf32> to vector<8x8xf32>
    %459 = arith.truncf %456 : vector<8x8xf32> to vector<8x8xbf16>
    %460 = arith.truncf %457 : vector<8x8xf32> to vector<8x8xbf16>
    %cst_151 = arith.constant dense<0.000000e+00> : vector<8x8xf32>
    %461 = tpu.matmul %459, %460, %cst_151 {dimension_numbers = #tpu.dot_dimension_numbers<[1], [1], [0], [0], [0, 0, 1, 0], [], []>} : vector<8x8xbf16>, vector<8x8xbf16>, vector<8x8xf32> -> vector<8x8xf32>
    %462 = arith.addf %461, %410 : vector<8x8xf32>
    %cst_152 = arith.constant dense<0xFF800000> : vector<8xf32>
    %463 = vector.multi_reduction <maximumf>, %462, %cst_152 [1] : vector<8x8xf32> to vector<8xf32>
    %464 = vector.shape_cast %463 : vector<8xf32> to vector<8x1xf32>
    %465 = vector.broadcast %464 : vector<8x1xf32> to vector<8x8xf32>
    %466 = arith.subf %462, %465 : vector<8x8xf32>
    %467 = math.exp %466 : vector<8x8xf32>
    %cst_153 = arith.constant dense<0.000000e+00> : vector<8xf32>
    %468 = vector.multi_reduction <add>, %467, %cst_153 [1] : vector<8x8xf32> to vector<8xf32>
    %469 = vector.shape_cast %468 : vector<8xf32> to vector<8x1xf32>
    %470 = vector.broadcast %469 : vector<8x1xf32> to vector<8x8xf32>
    %471 = arith.divf %467, %470 : vector<8x8xf32>
    %472 = arith.truncf %471 : vector<8x8xf32> to vector<8x8xbf16>
    %473 = arith.truncf %458 : vector<8x8xf32> to vector<8x8xbf16>
    %cst_154 = arith.constant dense<0.000000e+00> : vector<8x8xf32>
    %474 = tpu.matmul %472, %473, %cst_154 {dimension_numbers = #tpu.dot_dimension_numbers<[1], [0], [0], [1], [0, 0, 1, 1], [], []>} : vector<8x8xbf16>, vector<8x8xbf16>, vector<8x8xf32> -> vector<8x8xf32>
    %475 = vector.extract_strided_slice %417 {offsets = [0, 24], sizes = [8, 8], strides = [1, 1]} : vector<8x96xf32> to vector<8x8xf32>
    %476 = vector.extract_strided_slice %417 {offsets = [0, 56], sizes = [8, 8], strides = [1, 1]} : vector<8x96xf32> to vector<8x8xf32>
    %477 = vector.extract_strided_slice %417 {offsets = [0, 88], sizes = [8, 8], strides = [1, 1]} : vector<8x96xf32> to vector<8x8xf32>
    %478 = arith.truncf %475 : vector<8x8xf32> to vector<8x8xbf16>
    %479 = arith.truncf %476 : vector<8x8xf32> to vector<8x8xbf16>
    %cst_155 = arith.constant dense<0.000000e+00> : vector<8x8xf32>
    %480 = tpu.matmul %478, %479, %cst_155 {dimension_numbers = #tpu.dot_dimension_numbers<[1], [1], [0], [0], [0, 0, 1, 0], [], []>} : vector<8x8xbf16>, vector<8x8xbf16>, vector<8x8xf32> -> vector<8x8xf32>
    %481 = arith.addf %480, %410 : vector<8x8xf32>
    %cst_156 = arith.constant dense<0xFF800000> : vector<8xf32>
    %482 = vector.multi_reduction <maximumf>, %481, %cst_156 [1] : vector<8x8xf32> to vector<8xf32>
    %483 = vector.shape_cast %482 : vector<8xf32> to vector<8x1xf32>
    %484 = vector.broadcast %483 : vector<8x1xf32> to vector<8x8xf32>
    %485 = arith.subf %481, %484 : vector<8x8xf32>
    %486 = math.exp %485 : vector<8x8xf32>
    %cst_157 = arith.constant dense<0.000000e+00> : vector<8xf32>
    %487 = vector.multi_reduction <add>, %486, %cst_157 [1] : vector<8x8xf32> to vector<8xf32>
    %488 = vector.shape_cast %487 : vector<8xf32> to vector<8x1xf32>
    %489 = vector.broadcast %488 : vector<8x1xf32> to vector<8x8xf32>
    %490 = arith.divf %486, %489 : vector<8x8xf32>
    %491 = arith.truncf %490 : vector<8x8xf32> to vector<8x8xbf16>
    %492 = arith.truncf %477 : vector<8x8xf32> to vector<8x8xbf16>
    %cst_158 = arith.constant dense<0.000000e+00> : vector<8x8xf32>
    %493 = tpu.matmul %491, %492, %cst_158 {dimension_numbers = #tpu.dot_dimension_numbers<[1], [0], [0], [1], [0, 0, 1, 1], [], []>} : vector<8x8xbf16>, vector<8x8xbf16>, vector<8x8xf32> -> vector<8x8xf32>
    %494 = tpu.concatenate %436, %455, %474, %493 in 1 : vector<8x8xf32>, vector<8x8xf32>, vector<8x8xf32>, vector<8x8xf32> -> vector<8x32xf32>
    %495 = arith.truncf %494 : vector<8x32xf32> to vector<8x32xbf16>
    %c2_159 = arith.constant 2 : index
    %c0_160 = arith.constant 0 : index
    %c0_161 = arith.constant 0 : index
    %496 = vector.load %arg5[%c2_159, %c0_160, %c0_161] : memref<4x32x32xbf16, #tpu.memory_space<vmem>>, vector<1x32x32xbf16>
    %497 = vector.shape_cast %496 : vector<1x32x32xbf16> to vector<32x32xbf16>
    %cst_162 = arith.constant dense<0.000000e+00> : vector<8x32xf32>
    %498 = tpu.matmul %495, %497, %cst_162 {dimension_numbers = #tpu.dot_dimension_numbers<[1], [0], [0], [1], [0, 0, 1, 1], [], []>} : vector<8x32xbf16>, vector<32x32xbf16>, vector<8x32xf32> -> vector<8x32xf32>
    %c7 = arith.constant 7 : index
    %c0_163 = arith.constant 0 : index
    %499 = vector.load %arg11[%c7, %c0_163] : memref<37x96xf32, #tpu.memory_space<vmem>>, vector<1x32xf32>
    %500 = vector.broadcast %499 : vector<1x32xf32> to vector<8x32xf32>
    %501 = arith.addf %498, %500 : vector<8x32xf32>
    %502 = arith.addf %372, %501 : vector<8x32xf32>
    %cst_164 = arith.constant dense<0.000000e+00> : vector<8xf32>
    %503 = vector.multi_reduction <add>, %502, %cst_164 [1] : vector<8x32xf32> to vector<8xf32>
    %504 = vector.shape_cast %503 : vector<8xf32> to vector<8x1xf32>
    %cst_165 = arith.constant 3.200000e+01 : f32
    %505 = vector.broadcast %cst_165 : f32 to vector<8x1xf32>
    %506 = arith.divf %504, %505 : vector<8x1xf32>
    %507 = vector.broadcast %506 : vector<8x1xf32> to vector<8x32xf32>
    %508 = arith.subf %502, %507 : vector<8x32xf32>
    %509 = vector.broadcast %506 : vector<8x1xf32> to vector<8x32xf32>
    %510 = arith.subf %502, %509 : vector<8x32xf32>
    %511 = arith.mulf %508, %510 : vector<8x32xf32>
    %cst_166 = arith.constant dense<0.000000e+00> : vector<8xf32>
    %512 = vector.multi_reduction <add>, %511, %cst_166 [1] : vector<8x32xf32> to vector<8xf32>
    %513 = vector.shape_cast %512 : vector<8xf32> to vector<8x1xf32>
    %cst_167 = arith.constant 3.200000e+01 : f32
    %514 = vector.broadcast %cst_167 : f32 to vector<8x1xf32>
    %515 = arith.divf %513, %514 : vector<8x1xf32>
    %516 = vector.broadcast %506 : vector<8x1xf32> to vector<8x32xf32>
    %517 = arith.subf %502, %516 : vector<8x32xf32>
    %cst_168 = arith.constant 9.99999974E-6 : f32
    %518 = vector.broadcast %cst_168 : f32 to vector<8x1xf32>
    %519 = arith.addf %515, %518 : vector<8x1xf32>
    %520 = math.rsqrt %519 : vector<8x1xf32>
    %521 = vector.broadcast %520 : vector<8x1xf32> to vector<8x32xf32>
    %522 = arith.mulf %517, %521 : vector<8x32xf32>
    %c17 = arith.constant 17 : index
    %c0_169 = arith.constant 0 : index
    %523 = vector.load %arg11[%c17, %c0_169] : memref<37x96xf32, #tpu.memory_space<vmem>>, vector<1x32xf32>
    %524 = vector.broadcast %523 : vector<1x32xf32> to vector<8x32xf32>
    %525 = arith.mulf %522, %524 : vector<8x32xf32>
    %c18 = arith.constant 18 : index
    %c0_170 = arith.constant 0 : index
    %526 = vector.load %arg11[%c18, %c0_170] : memref<37x96xf32, #tpu.memory_space<vmem>>, vector<1x32xf32>
    %527 = vector.broadcast %526 : vector<1x32xf32> to vector<8x32xf32>
    %528 = arith.addf %525, %527 : vector<8x32xf32>
    %529 = arith.truncf %528 : vector<8x32xf32> to vector<8x32xbf16>
    %c2_171 = arith.constant 2 : index
    %c0_172 = arith.constant 0 : index
    %c0_173 = arith.constant 0 : index
    %530 = vector.load %arg6[%c2_171, %c0_172, %c0_173] : memref<4x32x64xbf16, #tpu.memory_space<vmem>>, vector<1x32x64xbf16>
    %531 = vector.shape_cast %530 : vector<1x32x64xbf16> to vector<32x64xbf16>
    %cst_174 = arith.constant dense<0.000000e+00> : vector<8x64xf32>
    %532 = tpu.matmul %529, %531, %cst_174 {dimension_numbers = #tpu.dot_dimension_numbers<[1], [0], [0], [1], [0, 0, 1, 1], [], []>} : vector<8x32xbf16>, vector<32x64xbf16>, vector<8x64xf32> -> vector<8x64xf32>
    %c27 = arith.constant 27 : index
    %c0_175 = arith.constant 0 : index
    %533 = vector.load %arg11[%c27, %c0_175] : memref<37x96xf32, #tpu.memory_space<vmem>>, vector<1x64xf32>
    %534 = vector.broadcast %533 : vector<1x64xf32> to vector<8x64xf32>
    %535 = arith.addf %532, %534 : vector<8x64xf32>
    %cst_176 = arith.constant 0.000000e+00 : f32
    %536 = vector.broadcast %cst_176 : f32 to vector<8x64xf32>
    %537 = arith.maximumf %535, %536 : vector<8x64xf32>
    %538 = arith.truncf %537 : vector<8x64xf32> to vector<8x64xbf16>
    %c2_177 = arith.constant 2 : index
    %c0_178 = arith.constant 0 : index
    %c0_179 = arith.constant 0 : index
    %539 = vector.load %arg7[%c2_177, %c0_178, %c0_179] : memref<4x64x32xbf16, #tpu.memory_space<vmem>>, vector<1x64x32xbf16>
    %540 = vector.shape_cast %539 : vector<1x64x32xbf16> to vector<64x32xbf16>
    %cst_180 = arith.constant dense<0.000000e+00> : vector<8x32xf32>
    %541 = tpu.matmul %538, %540, %cst_180 {dimension_numbers = #tpu.dot_dimension_numbers<[1], [0], [0], [1], [0, 0, 1, 1], [], []>} : vector<8x64xbf16>, vector<64x32xbf16>, vector<8x32xf32> -> vector<8x32xf32>
    %c31 = arith.constant 31 : index
    %c0_181 = arith.constant 0 : index
    %542 = vector.load %arg11[%c31, %c0_181] : memref<37x96xf32, #tpu.memory_space<vmem>>, vector<1x32xf32>
    %543 = vector.broadcast %542 : vector<1x32xf32> to vector<8x32xf32>
    %544 = arith.addf %541, %543 : vector<8x32xf32>
    %545 = arith.addf %528, %544 : vector<8x32xf32>
    %cst_182 = arith.constant dense<0.000000e+00> : vector<8xf32>
    %546 = vector.multi_reduction <add>, %545, %cst_182 [1] : vector<8x32xf32> to vector<8xf32>
    %547 = vector.shape_cast %546 : vector<8xf32> to vector<8x1xf32>
    %cst_183 = arith.constant 3.200000e+01 : f32
    %548 = vector.broadcast %cst_183 : f32 to vector<8x1xf32>
    %549 = arith.divf %547, %548 : vector<8x1xf32>
    %550 = vector.broadcast %549 : vector<8x1xf32> to vector<8x32xf32>
    %551 = arith.subf %545, %550 : vector<8x32xf32>
    %552 = vector.broadcast %549 : vector<8x1xf32> to vector<8x32xf32>
    %553 = arith.subf %545, %552 : vector<8x32xf32>
    %554 = arith.mulf %551, %553 : vector<8x32xf32>
    %cst_184 = arith.constant dense<0.000000e+00> : vector<8xf32>
    %555 = vector.multi_reduction <add>, %554, %cst_184 [1] : vector<8x32xf32> to vector<8xf32>
    %556 = vector.shape_cast %555 : vector<8xf32> to vector<8x1xf32>
    %cst_185 = arith.constant 3.200000e+01 : f32
    %557 = vector.broadcast %cst_185 : f32 to vector<8x1xf32>
    %558 = arith.divf %556, %557 : vector<8x1xf32>
    %559 = vector.broadcast %549 : vector<8x1xf32> to vector<8x32xf32>
    %560 = arith.subf %545, %559 : vector<8x32xf32>
    %cst_186 = arith.constant 9.99999974E-6 : f32
    %561 = vector.broadcast %cst_186 : f32 to vector<8x1xf32>
    %562 = arith.addf %558, %561 : vector<8x1xf32>
    %563 = math.rsqrt %562 : vector<8x1xf32>
    %564 = vector.broadcast %563 : vector<8x1xf32> to vector<8x32xf32>
    %565 = arith.mulf %560, %564 : vector<8x32xf32>
    %c19 = arith.constant 19 : index
    %c0_187 = arith.constant 0 : index
    %566 = vector.load %arg11[%c19, %c0_187] : memref<37x96xf32, #tpu.memory_space<vmem>>, vector<1x32xf32>
    %567 = vector.broadcast %566 : vector<1x32xf32> to vector<8x32xf32>
    %568 = arith.mulf %565, %567 : vector<8x32xf32>
    %c20 = arith.constant 20 : index
    %c0_188 = arith.constant 0 : index
    %569 = vector.load %arg11[%c20, %c0_188] : memref<37x96xf32, #tpu.memory_space<vmem>>, vector<1x32xf32>
    %570 = vector.broadcast %569 : vector<1x32xf32> to vector<8x32xf32>
    %571 = arith.addf %568, %570 : vector<8x32xf32>
    %572 = arith.truncf %571 : vector<8x32xf32> to vector<8x32xbf16>
    %c3_189 = arith.constant 3 : index
    %c0_190 = arith.constant 0 : index
    %c0_191 = arith.constant 0 : index
    %573 = vector.load %arg4[%c3_189, %c0_190, %c0_191] : memref<4x32x96xbf16, #tpu.memory_space<vmem>>, vector<1x32x96xbf16>
    %574 = vector.shape_cast %573 : vector<1x32x96xbf16> to vector<32x96xbf16>
    %cst_192 = arith.constant dense<0.000000e+00> : vector<8x96xf32>
    %575 = tpu.matmul %572, %574, %cst_192 {dimension_numbers = #tpu.dot_dimension_numbers<[1], [0], [0], [1], [0, 0, 1, 1], [], []>} : vector<8x32xbf16>, vector<32x96xbf16>, vector<8x96xf32> -> vector<8x96xf32>
    %c4_193 = arith.constant 4 : index
    %c0_194 = arith.constant 0 : index
    %576 = vector.load %arg11[%c4_193, %c0_194] : memref<37x96xf32, #tpu.memory_space<vmem>>, vector<1x96xf32>
    %577 = vector.broadcast %576 : vector<1x96xf32> to vector<8x96xf32>
    %578 = arith.addf %575, %577 : vector<8x96xf32>
    %579 = vector.extract_strided_slice %578 {offsets = [0, 0], sizes = [8, 8], strides = [1, 1]} : vector<8x96xf32> to vector<8x8xf32>
    %580 = vector.extract_strided_slice %578 {offsets = [0, 32], sizes = [8, 8], strides = [1, 1]} : vector<8x96xf32> to vector<8x8xf32>
    %581 = vector.extract_strided_slice %578 {offsets = [0, 64], sizes = [8, 8], strides = [1, 1]} : vector<8x96xf32> to vector<8x8xf32>
    %582 = arith.truncf %579 : vector<8x8xf32> to vector<8x8xbf16>
    %583 = arith.truncf %580 : vector<8x8xf32> to vector<8x8xbf16>
    %cst_195 = arith.constant dense<0.000000e+00> : vector<8x8xf32>
    %584 = tpu.matmul %582, %583, %cst_195 {dimension_numbers = #tpu.dot_dimension_numbers<[1], [1], [0], [0], [0, 0, 1, 0], [], []>} : vector<8x8xbf16>, vector<8x8xbf16>, vector<8x8xf32> -> vector<8x8xf32>
    %585 = arith.addf %584, %410 : vector<8x8xf32>
    %cst_196 = arith.constant dense<0xFF800000> : vector<8xf32>
    %586 = vector.multi_reduction <maximumf>, %585, %cst_196 [1] : vector<8x8xf32> to vector<8xf32>
    %587 = vector.shape_cast %586 : vector<8xf32> to vector<8x1xf32>
    %588 = vector.broadcast %587 : vector<8x1xf32> to vector<8x8xf32>
    %589 = arith.subf %585, %588 : vector<8x8xf32>
    %590 = math.exp %589 : vector<8x8xf32>
    %cst_197 = arith.constant dense<0.000000e+00> : vector<8xf32>
    %591 = vector.multi_reduction <add>, %590, %cst_197 [1] : vector<8x8xf32> to vector<8xf32>
    %592 = vector.shape_cast %591 : vector<8xf32> to vector<8x1xf32>
    %593 = vector.broadcast %592 : vector<8x1xf32> to vector<8x8xf32>
    %594 = arith.divf %590, %593 : vector<8x8xf32>
    %595 = arith.truncf %594 : vector<8x8xf32> to vector<8x8xbf16>
    %596 = arith.truncf %581 : vector<8x8xf32> to vector<8x8xbf16>
    %cst_198 = arith.constant dense<0.000000e+00> : vector<8x8xf32>
    %597 = tpu.matmul %595, %596, %cst_198 {dimension_numbers = #tpu.dot_dimension_numbers<[1], [0], [0], [1], [0, 0, 1, 1], [], []>} : vector<8x8xbf16>, vector<8x8xbf16>, vector<8x8xf32> -> vector<8x8xf32>
    %598 = vector.extract_strided_slice %578 {offsets = [0, 8], sizes = [8, 8], strides = [1, 1]} : vector<8x96xf32> to vector<8x8xf32>
    %599 = vector.extract_strided_slice %578 {offsets = [0, 40], sizes = [8, 8], strides = [1, 1]} : vector<8x96xf32> to vector<8x8xf32>
    %600 = vector.extract_strided_slice %578 {offsets = [0, 72], sizes = [8, 8], strides = [1, 1]} : vector<8x96xf32> to vector<8x8xf32>
    %601 = arith.truncf %598 : vector<8x8xf32> to vector<8x8xbf16>
    %602 = arith.truncf %599 : vector<8x8xf32> to vector<8x8xbf16>
    %cst_199 = arith.constant dense<0.000000e+00> : vector<8x8xf32>
    %603 = tpu.matmul %601, %602, %cst_199 {dimension_numbers = #tpu.dot_dimension_numbers<[1], [1], [0], [0], [0, 0, 1, 0], [], []>} : vector<8x8xbf16>, vector<8x8xbf16>, vector<8x8xf32> -> vector<8x8xf32>
    %604 = arith.addf %603, %410 : vector<8x8xf32>
    %cst_200 = arith.constant dense<0xFF800000> : vector<8xf32>
    %605 = vector.multi_reduction <maximumf>, %604, %cst_200 [1] : vector<8x8xf32> to vector<8xf32>
    %606 = vector.shape_cast %605 : vector<8xf32> to vector<8x1xf32>
    %607 = vector.broadcast %606 : vector<8x1xf32> to vector<8x8xf32>
    %608 = arith.subf %604, %607 : vector<8x8xf32>
    %609 = math.exp %608 : vector<8x8xf32>
    %cst_201 = arith.constant dense<0.000000e+00> : vector<8xf32>
    %610 = vector.multi_reduction <add>, %609, %cst_201 [1] : vector<8x8xf32> to vector<8xf32>
    %611 = vector.shape_cast %610 : vector<8xf32> to vector<8x1xf32>
    %612 = vector.broadcast %611 : vector<8x1xf32> to vector<8x8xf32>
    %613 = arith.divf %609, %612 : vector<8x8xf32>
    %614 = arith.truncf %613 : vector<8x8xf32> to vector<8x8xbf16>
    %615 = arith.truncf %600 : vector<8x8xf32> to vector<8x8xbf16>
    %cst_202 = arith.constant dense<0.000000e+00> : vector<8x8xf32>
    %616 = tpu.matmul %614, %615, %cst_202 {dimension_numbers = #tpu.dot_dimension_numbers<[1], [0], [0], [1], [0, 0, 1, 1], [], []>} : vector<8x8xbf16>, vector<8x8xbf16>, vector<8x8xf32> -> vector<8x8xf32>
    %617 = vector.extract_strided_slice %578 {offsets = [0, 16], sizes = [8, 8], strides = [1, 1]} : vector<8x96xf32> to vector<8x8xf32>
    %618 = vector.extract_strided_slice %578 {offsets = [0, 48], sizes = [8, 8], strides = [1, 1]} : vector<8x96xf32> to vector<8x8xf32>
    %619 = vector.extract_strided_slice %578 {offsets = [0, 80], sizes = [8, 8], strides = [1, 1]} : vector<8x96xf32> to vector<8x8xf32>
    %620 = arith.truncf %617 : vector<8x8xf32> to vector<8x8xbf16>
    %621 = arith.truncf %618 : vector<8x8xf32> to vector<8x8xbf16>
    %cst_203 = arith.constant dense<0.000000e+00> : vector<8x8xf32>
    %622 = tpu.matmul %620, %621, %cst_203 {dimension_numbers = #tpu.dot_dimension_numbers<[1], [1], [0], [0], [0, 0, 1, 0], [], []>} : vector<8x8xbf16>, vector<8x8xbf16>, vector<8x8xf32> -> vector<8x8xf32>
    %623 = arith.addf %622, %410 : vector<8x8xf32>
    %cst_204 = arith.constant dense<0xFF800000> : vector<8xf32>
    %624 = vector.multi_reduction <maximumf>, %623, %cst_204 [1] : vector<8x8xf32> to vector<8xf32>
    %625 = vector.shape_cast %624 : vector<8xf32> to vector<8x1xf32>
    %626 = vector.broadcast %625 : vector<8x1xf32> to vector<8x8xf32>
    %627 = arith.subf %623, %626 : vector<8x8xf32>
    %628 = math.exp %627 : vector<8x8xf32>
    %cst_205 = arith.constant dense<0.000000e+00> : vector<8xf32>
    %629 = vector.multi_reduction <add>, %628, %cst_205 [1] : vector<8x8xf32> to vector<8xf32>
    %630 = vector.shape_cast %629 : vector<8xf32> to vector<8x1xf32>
    %631 = vector.broadcast %630 : vector<8x1xf32> to vector<8x8xf32>
    %632 = arith.divf %628, %631 : vector<8x8xf32>
    %633 = arith.truncf %632 : vector<8x8xf32> to vector<8x8xbf16>
    %634 = arith.truncf %619 : vector<8x8xf32> to vector<8x8xbf16>
    %cst_206 = arith.constant dense<0.000000e+00> : vector<8x8xf32>
    %635 = tpu.matmul %633, %634, %cst_206 {dimension_numbers = #tpu.dot_dimension_numbers<[1], [0], [0], [1], [0, 0, 1, 1], [], []>} : vector<8x8xbf16>, vector<8x8xbf16>, vector<8x8xf32> -> vector<8x8xf32>
    %636 = vector.extract_strided_slice %578 {offsets = [0, 24], sizes = [8, 8], strides = [1, 1]} : vector<8x96xf32> to vector<8x8xf32>
    %637 = vector.extract_strided_slice %578 {offsets = [0, 56], sizes = [8, 8], strides = [1, 1]} : vector<8x96xf32> to vector<8x8xf32>
    %638 = vector.extract_strided_slice %578 {offsets = [0, 88], sizes = [8, 8], strides = [1, 1]} : vector<8x96xf32> to vector<8x8xf32>
    %639 = arith.truncf %636 : vector<8x8xf32> to vector<8x8xbf16>
    %640 = arith.truncf %637 : vector<8x8xf32> to vector<8x8xbf16>
    %cst_207 = arith.constant dense<0.000000e+00> : vector<8x8xf32>
    %641 = tpu.matmul %639, %640, %cst_207 {dimension_numbers = #tpu.dot_dimension_numbers<[1], [1], [0], [0], [0, 0, 1, 0], [], []>} : vector<8x8xbf16>, vector<8x8xbf16>, vector<8x8xf32> -> vector<8x8xf32>
    %642 = arith.addf %641, %410 : vector<8x8xf32>
    %cst_208 = arith.constant dense<0xFF800000> : vector<8xf32>
    %643 = vector.multi_reduction <maximumf>, %642, %cst_208 [1] : vector<8x8xf32> to vector<8xf32>
    %644 = vector.shape_cast %643 : vector<8xf32> to vector<8x1xf32>
    %645 = vector.broadcast %644 : vector<8x1xf32> to vector<8x8xf32>
    %646 = arith.subf %642, %645 : vector<8x8xf32>
    %647 = math.exp %646 : vector<8x8xf32>
    %cst_209 = arith.constant dense<0.000000e+00> : vector<8xf32>
    %648 = vector.multi_reduction <add>, %647, %cst_209 [1] : vector<8x8xf32> to vector<8xf32>
    %649 = vector.shape_cast %648 : vector<8xf32> to vector<8x1xf32>
    %650 = vector.broadcast %649 : vector<8x1xf32> to vector<8x8xf32>
    %651 = arith.divf %647, %650 : vector<8x8xf32>
    %652 = arith.truncf %651 : vector<8x8xf32> to vector<8x8xbf16>
    %653 = arith.truncf %638 : vector<8x8xf32> to vector<8x8xbf16>
    %cst_210 = arith.constant dense<0.000000e+00> : vector<8x8xf32>
    %654 = tpu.matmul %652, %653, %cst_210 {dimension_numbers = #tpu.dot_dimension_numbers<[1], [0], [0], [1], [0, 0, 1, 1], [], []>} : vector<8x8xbf16>, vector<8x8xbf16>, vector<8x8xf32> -> vector<8x8xf32>
    %655 = tpu.concatenate %597, %616, %635, %654 in 1 : vector<8x8xf32>, vector<8x8xf32>, vector<8x8xf32>, vector<8x8xf32> -> vector<8x32xf32>
    %656 = arith.truncf %655 : vector<8x32xf32> to vector<8x32xbf16>
    %c3_211 = arith.constant 3 : index
    %c0_212 = arith.constant 0 : index
    %c0_213 = arith.constant 0 : index
    %657 = vector.load %arg5[%c3_211, %c0_212, %c0_213] : memref<4x32x32xbf16, #tpu.memory_space<vmem>>, vector<1x32x32xbf16>
    %658 = vector.shape_cast %657 : vector<1x32x32xbf16> to vector<32x32xbf16>
    %cst_214 = arith.constant dense<0.000000e+00> : vector<8x32xf32>
    %659 = tpu.matmul %656, %658, %cst_214 {dimension_numbers = #tpu.dot_dimension_numbers<[1], [0], [0], [1], [0, 0, 1, 1], [], []>} : vector<8x32xbf16>, vector<32x32xbf16>, vector<8x32xf32> -> vector<8x32xf32>
    %c8 = arith.constant 8 : index
    %c0_215 = arith.constant 0 : index
    %660 = vector.load %arg11[%c8, %c0_215] : memref<37x96xf32, #tpu.memory_space<vmem>>, vector<1x32xf32>
    %661 = vector.broadcast %660 : vector<1x32xf32> to vector<8x32xf32>
    %662 = arith.addf %659, %661 : vector<8x32xf32>
    %663 = arith.addf %571, %662 : vector<8x32xf32>
    %cst_216 = arith.constant dense<0.000000e+00> : vector<8xf32>
    %664 = vector.multi_reduction <add>, %663, %cst_216 [1] : vector<8x32xf32> to vector<8xf32>
    %665 = vector.shape_cast %664 : vector<8xf32> to vector<8x1xf32>
    %cst_217 = arith.constant 3.200000e+01 : f32
    %666 = vector.broadcast %cst_217 : f32 to vector<8x1xf32>
    %667 = arith.divf %665, %666 : vector<8x1xf32>
    %668 = vector.broadcast %667 : vector<8x1xf32> to vector<8x32xf32>
    %669 = arith.subf %663, %668 : vector<8x32xf32>
    %670 = vector.broadcast %667 : vector<8x1xf32> to vector<8x32xf32>
    %671 = arith.subf %663, %670 : vector<8x32xf32>
    %672 = arith.mulf %669, %671 : vector<8x32xf32>
    %cst_218 = arith.constant dense<0.000000e+00> : vector<8xf32>
    %673 = vector.multi_reduction <add>, %672, %cst_218 [1] : vector<8x32xf32> to vector<8xf32>
    %674 = vector.shape_cast %673 : vector<8xf32> to vector<8x1xf32>
    %cst_219 = arith.constant 3.200000e+01 : f32
    %675 = vector.broadcast %cst_219 : f32 to vector<8x1xf32>
    %676 = arith.divf %674, %675 : vector<8x1xf32>
    %677 = vector.broadcast %667 : vector<8x1xf32> to vector<8x32xf32>
    %678 = arith.subf %663, %677 : vector<8x32xf32>
    %cst_220 = arith.constant 9.99999974E-6 : f32
    %679 = vector.broadcast %cst_220 : f32 to vector<8x1xf32>
    %680 = arith.addf %676, %679 : vector<8x1xf32>
    %681 = math.rsqrt %680 : vector<8x1xf32>
    %682 = vector.broadcast %681 : vector<8x1xf32> to vector<8x32xf32>
    %683 = arith.mulf %678, %682 : vector<8x32xf32>
    %c21 = arith.constant 21 : index
    %c0_221 = arith.constant 0 : index
    %684 = vector.load %arg11[%c21, %c0_221] : memref<37x96xf32, #tpu.memory_space<vmem>>, vector<1x32xf32>
    %685 = vector.broadcast %684 : vector<1x32xf32> to vector<8x32xf32>
    %686 = arith.mulf %683, %685 : vector<8x32xf32>
    %c22 = arith.constant 22 : index
    %c0_222 = arith.constant 0 : index
    %687 = vector.load %arg11[%c22, %c0_222] : memref<37x96xf32, #tpu.memory_space<vmem>>, vector<1x32xf32>
    %688 = vector.broadcast %687 : vector<1x32xf32> to vector<8x32xf32>
    %689 = arith.addf %686, %688 : vector<8x32xf32>
    %690 = arith.truncf %689 : vector<8x32xf32> to vector<8x32xbf16>
    %c3_223 = arith.constant 3 : index
    %c0_224 = arith.constant 0 : index
    %c0_225 = arith.constant 0 : index
    %691 = vector.load %arg6[%c3_223, %c0_224, %c0_225] : memref<4x32x64xbf16, #tpu.memory_space<vmem>>, vector<1x32x64xbf16>
    %692 = vector.shape_cast %691 : vector<1x32x64xbf16> to vector<32x64xbf16>
    %cst_226 = arith.constant dense<0.000000e+00> : vector<8x64xf32>
    %693 = tpu.matmul %690, %692, %cst_226 {dimension_numbers = #tpu.dot_dimension_numbers<[1], [0], [0], [1], [0, 0, 1, 1], [], []>} : vector<8x32xbf16>, vector<32x64xbf16>, vector<8x64xf32> -> vector<8x64xf32>
    %c28 = arith.constant 28 : index
    %c0_227 = arith.constant 0 : index
    %694 = vector.load %arg11[%c28, %c0_227] : memref<37x96xf32, #tpu.memory_space<vmem>>, vector<1x64xf32>
    %695 = vector.broadcast %694 : vector<1x64xf32> to vector<8x64xf32>
    %696 = arith.addf %693, %695 : vector<8x64xf32>
    %cst_228 = arith.constant 0.000000e+00 : f32
    %697 = vector.broadcast %cst_228 : f32 to vector<8x64xf32>
    %698 = arith.maximumf %696, %697 : vector<8x64xf32>
    %699 = arith.truncf %698 : vector<8x64xf32> to vector<8x64xbf16>
    %c3_229 = arith.constant 3 : index
    %c0_230 = arith.constant 0 : index
    %c0_231 = arith.constant 0 : index
    %700 = vector.load %arg7[%c3_229, %c0_230, %c0_231] : memref<4x64x32xbf16, #tpu.memory_space<vmem>>, vector<1x64x32xbf16>
    %701 = vector.shape_cast %700 : vector<1x64x32xbf16> to vector<64x32xbf16>
    %cst_232 = arith.constant dense<0.000000e+00> : vector<8x32xf32>
    %702 = tpu.matmul %699, %701, %cst_232 {dimension_numbers = #tpu.dot_dimension_numbers<[1], [0], [0], [1], [0, 0, 1, 1], [], []>} : vector<8x64xbf16>, vector<64x32xbf16>, vector<8x32xf32> -> vector<8x32xf32>
    %c32 = arith.constant 32 : index
    %c0_233 = arith.constant 0 : index
    %703 = vector.load %arg11[%c32, %c0_233] : memref<37x96xf32, #tpu.memory_space<vmem>>, vector<1x32xf32>
    %704 = vector.broadcast %703 : vector<1x32xf32> to vector<8x32xf32>
    %705 = arith.addf %702, %704 : vector<8x32xf32>
    %706 = arith.addf %689, %705 : vector<8x32xf32>
    %cst_234 = arith.constant dense<0.000000e+00> : vector<8xf32>
    %707 = vector.multi_reduction <add>, %706, %cst_234 [1] : vector<8x32xf32> to vector<8xf32>
    %708 = vector.shape_cast %707 : vector<8xf32> to vector<8x1xf32>
    %cst_235 = arith.constant 3.200000e+01 : f32
    %709 = vector.broadcast %cst_235 : f32 to vector<8x1xf32>
    %710 = arith.divf %708, %709 : vector<8x1xf32>
    %711 = vector.broadcast %710 : vector<8x1xf32> to vector<8x32xf32>
    %712 = arith.subf %706, %711 : vector<8x32xf32>
    %713 = vector.broadcast %710 : vector<8x1xf32> to vector<8x32xf32>
    %714 = arith.subf %706, %713 : vector<8x32xf32>
    %715 = arith.mulf %712, %714 : vector<8x32xf32>
    %cst_236 = arith.constant dense<0.000000e+00> : vector<8xf32>
    %716 = vector.multi_reduction <add>, %715, %cst_236 [1] : vector<8x32xf32> to vector<8xf32>
    %717 = vector.shape_cast %716 : vector<8xf32> to vector<8x1xf32>
    %cst_237 = arith.constant 3.200000e+01 : f32
    %718 = vector.broadcast %cst_237 : f32 to vector<8x1xf32>
    %719 = arith.divf %717, %718 : vector<8x1xf32>
    %720 = vector.broadcast %710 : vector<8x1xf32> to vector<8x32xf32>
    %721 = arith.subf %706, %720 : vector<8x32xf32>
    %cst_238 = arith.constant 9.99999974E-6 : f32
    %722 = vector.broadcast %cst_238 : f32 to vector<8x1xf32>
    %723 = arith.addf %719, %722 : vector<8x1xf32>
    %724 = math.rsqrt %723 : vector<8x1xf32>
    %725 = vector.broadcast %724 : vector<8x1xf32> to vector<8x32xf32>
    %726 = arith.mulf %721, %725 : vector<8x32xf32>
    %c23 = arith.constant 23 : index
    %c0_239 = arith.constant 0 : index
    %727 = vector.load %arg11[%c23, %c0_239] : memref<37x96xf32, #tpu.memory_space<vmem>>, vector<1x32xf32>
    %728 = vector.broadcast %727 : vector<1x32xf32> to vector<8x32xf32>
    %729 = arith.mulf %726, %728 : vector<8x32xf32>
    %c24 = arith.constant 24 : index
    %c0_240 = arith.constant 0 : index
    %730 = vector.load %arg11[%c24, %c0_240] : memref<37x96xf32, #tpu.memory_space<vmem>>, vector<1x32xf32>
    %731 = vector.broadcast %730 : vector<1x32xf32> to vector<8x32xf32>
    %732 = arith.addf %729, %731 : vector<8x32xf32>
    %733 = vector.extract_strided_slice %365 {offsets = [0, 0], sizes = [2, 32], strides = [1, 1]} : vector<32x32xf32> to vector<2x32xf32>
    %734 = vector.extract_strided_slice %365 {offsets = [2, 0], sizes = [2, 32], strides = [1, 1]} : vector<32x32xf32> to vector<2x32xf32>
    %735 = vector.extract_strided_slice %365 {offsets = [4, 0], sizes = [2, 32], strides = [1, 1]} : vector<32x32xf32> to vector<2x32xf32>
    %736 = vector.extract_strided_slice %365 {offsets = [6, 0], sizes = [2, 32], strides = [1, 1]} : vector<32x32xf32> to vector<2x32xf32>
    %737 = vector.extract_strided_slice %365 {offsets = [8, 0], sizes = [2, 32], strides = [1, 1]} : vector<32x32xf32> to vector<2x32xf32>
    %738 = vector.extract_strided_slice %365 {offsets = [10, 0], sizes = [2, 32], strides = [1, 1]} : vector<32x32xf32> to vector<2x32xf32>
    %739 = vector.extract_strided_slice %365 {offsets = [12, 0], sizes = [2, 32], strides = [1, 1]} : vector<32x32xf32> to vector<2x32xf32>
    %740 = vector.extract_strided_slice %365 {offsets = [14, 0], sizes = [2, 32], strides = [1, 1]} : vector<32x32xf32> to vector<2x32xf32>
    %741 = vector.extract_strided_slice %365 {offsets = [16, 0], sizes = [2, 32], strides = [1, 1]} : vector<32x32xf32> to vector<2x32xf32>
    %742 = vector.extract_strided_slice %365 {offsets = [18, 0], sizes = [2, 32], strides = [1, 1]} : vector<32x32xf32> to vector<2x32xf32>
    %743 = vector.extract_strided_slice %365 {offsets = [20, 0], sizes = [2, 32], strides = [1, 1]} : vector<32x32xf32> to vector<2x32xf32>
    %744 = vector.extract_strided_slice %365 {offsets = [22, 0], sizes = [2, 32], strides = [1, 1]} : vector<32x32xf32> to vector<2x32xf32>
    %745 = vector.extract_strided_slice %365 {offsets = [24, 0], sizes = [2, 32], strides = [1, 1]} : vector<32x32xf32> to vector<2x32xf32>
    %746 = vector.extract_strided_slice %365 {offsets = [26, 0], sizes = [2, 32], strides = [1, 1]} : vector<32x32xf32> to vector<2x32xf32>
    %747 = vector.extract_strided_slice %365 {offsets = [28, 0], sizes = [2, 32], strides = [1, 1]} : vector<32x32xf32> to vector<2x32xf32>
    %748 = vector.extract_strided_slice %365 {offsets = [30, 0], sizes = [2, 32], strides = [1, 1]} : vector<32x32xf32> to vector<2x32xf32>
    %749 = tpu.concatenate %733, %734, %735, %736, %737, %738, %739, %740, %741, %742, %743, %744, %745, %746, %747, %748 in 1 : vector<2x32xf32>, vector<2x32xf32>, vector<2x32xf32>, vector<2x32xf32>, vector<2x32xf32>, vector<2x32xf32>, vector<2x32xf32>, vector<2x32xf32>, vector<2x32xf32>, vector<2x32xf32>, vector<2x32xf32>, vector<2x32xf32>, vector<2x32xf32>, vector<2x32xf32>, vector<2x32xf32>, vector<2x32xf32> -> vector<2x512xf32>
    %750 = vector.extract_strided_slice %732 {offsets = [0, 0], sizes = [2, 32], strides = [1, 1]} : vector<8x32xf32> to vector<2x32xf32>
    %751 = vector.extract_strided_slice %732 {offsets = [2, 0], sizes = [2, 32], strides = [1, 1]} : vector<8x32xf32> to vector<2x32xf32>
    %752 = vector.extract_strided_slice %732 {offsets = [4, 0], sizes = [2, 32], strides = [1, 1]} : vector<8x32xf32> to vector<2x32xf32>
    %753 = vector.extract_strided_slice %732 {offsets = [6, 0], sizes = [2, 32], strides = [1, 1]} : vector<8x32xf32> to vector<2x32xf32>
    %754 = tpu.concatenate %750, %751, %752, %753 in 1 : vector<2x32xf32>, vector<2x32xf32>, vector<2x32xf32>, vector<2x32xf32> -> vector<2x128xf32>
    %755 = arith.truncf %749 : vector<2x512xf32> to vector<2x512xbf16>
    %c0_241 = arith.constant 0 : index
    %c0_242 = arith.constant 0 : index
    %756 = vector.load %arg8[%c0_241, %c0_242] : memref<512x34xbf16, #tpu.memory_space<vmem>>, vector<512x34xbf16>
    %cst_243 = arith.constant dense<0.000000e+00> : vector<2x34xf32>
    %757 = tpu.matmul %755, %756, %cst_243 {dimension_numbers = #tpu.dot_dimension_numbers<[1], [0], [0], [1], [0, 0, 1, 1], [], []>} : vector<2x512xbf16>, vector<512x34xbf16>, vector<2x34xf32> -> vector<2x34xf32>
    %758 = arith.truncf %754 : vector<2x128xf32> to vector<2x128xbf16>
    %c0_244 = arith.constant 0 : index
    %c0_245 = arith.constant 0 : index
    %759 = vector.load %arg9[%c0_244, %c0_245] : memref<128x34xbf16, #tpu.memory_space<vmem>>, vector<128x34xbf16>
    %cst_246 = arith.constant dense<0.000000e+00> : vector<2x34xf32>
    %760 = tpu.matmul %758, %759, %cst_246 {dimension_numbers = #tpu.dot_dimension_numbers<[1], [0], [0], [1], [0, 0, 1, 1], [], []>} : vector<2x128xbf16>, vector<128x34xbf16>, vector<2x34xf32> -> vector<2x34xf32>
    %761 = vector.extract_strided_slice %757 {offsets = [0, 32], sizes = [2, 2], strides = [1, 1]} : vector<2x34xf32> to vector<2x2xf32>
    %762 = vector.extract_strided_slice %760 {offsets = [0, 32], sizes = [2, 2], strides = [1, 1]} : vector<2x34xf32> to vector<2x2xf32>
    %763 = arith.addf %761, %762 : vector<2x2xf32>
    %c33 = arith.constant 33 : index
    %c0_247 = arith.constant 0 : index
    %764 = vector.load %arg11[%c33, %c0_247] : memref<37x96xf32, #tpu.memory_space<vmem>>, vector<1x2xf32>
    %765 = vector.broadcast %764 : vector<1x2xf32> to vector<2x2xf32>
    %766 = arith.addf %763, %765 : vector<2x2xf32>
    %cst_248 = arith.constant dense<0xFF800000> : vector<2xf32>
    %767 = vector.multi_reduction <maximumf>, %766, %cst_248 [1] : vector<2x2xf32> to vector<2xf32>
    %768 = vector.shape_cast %767 : vector<2xf32> to vector<2x1xf32>
    %769 = vector.broadcast %768 : vector<2x1xf32> to vector<2x2xf32>
    %770 = arith.subf %766, %769 : vector<2x2xf32>
    %771 = math.exp %770 : vector<2x2xf32>
    %cst_249 = arith.constant dense<0.000000e+00> : vector<2xf32>
    %772 = vector.multi_reduction <add>, %771, %cst_249 [1] : vector<2x2xf32> to vector<2xf32>
    %773 = vector.shape_cast %772 : vector<2xf32> to vector<2x1xf32>
    %774 = vector.broadcast %773 : vector<2x1xf32> to vector<2x2xf32>
    %775 = arith.divf %771, %774 : vector<2x2xf32>
    %776 = vector.extract_strided_slice %775 {offsets = [0, 0], sizes = [2, 1], strides = [1, 1]} : vector<2x2xf32> to vector<2x1xf32>
    %777 = vector.extract_strided_slice %757 {offsets = [0, 0], sizes = [2, 32], strides = [1, 1]} : vector<2x34xf32> to vector<2x32xf32>
    %778 = vector.broadcast %776 : vector<2x1xf32> to vector<2x32xf32>
    %779 = arith.mulf %778, %777 : vector<2x32xf32>
    %780 = vector.extract_strided_slice %775 {offsets = [0, 1], sizes = [2, 1], strides = [1, 1]} : vector<2x2xf32> to vector<2x1xf32>
    %781 = vector.extract_strided_slice %760 {offsets = [0, 0], sizes = [2, 32], strides = [1, 1]} : vector<2x34xf32> to vector<2x32xf32>
    %782 = vector.broadcast %780 : vector<2x1xf32> to vector<2x32xf32>
    %783 = arith.mulf %782, %781 : vector<2x32xf32>
    %784 = arith.addf %779, %783 : vector<2x32xf32>
    %c34 = arith.constant 34 : index
    %c0_250 = arith.constant 0 : index
    %785 = vector.load %arg11[%c34, %c0_250] : memref<37x96xf32, #tpu.memory_space<vmem>>, vector<1x32xf32>
    %786 = vector.broadcast %785 : vector<1x32xf32> to vector<2x32xf32>
    %787 = arith.addf %784, %786 : vector<2x32xf32>
    %788 = math.tanh %787 : vector<2x32xf32>
    %789 = arith.truncf %788 : vector<2x32xf32> to vector<2x32xbf16>
    %c0_251 = arith.constant 0 : index
    %c0_252 = arith.constant 0 : index
    %790 = vector.load %arg10[%c0_251, %c0_252] : memref<64x32xbf16, #tpu.memory_space<vmem>>, vector<32x32xbf16>
    %cst_253 = arith.constant dense<0.000000e+00> : vector<2x32xf32>
    %791 = tpu.matmul %789, %790, %cst_253 {dimension_numbers = #tpu.dot_dimension_numbers<[1], [0], [0], [1], [0, 0, 1, 1], [], []>} : vector<2x32xbf16>, vector<32x32xbf16>, vector<2x32xf32> -> vector<2x32xf32>
    %c35 = arith.constant 35 : index
    %c0_254 = arith.constant 0 : index
    %792 = vector.load %arg11[%c35, %c0_254] : memref<37x96xf32, #tpu.memory_space<vmem>>, vector<1x32xf32>
    %793 = vector.broadcast %792 : vector<1x32xf32> to vector<2x32xf32>
    %794 = arith.addf %791, %793 : vector<2x32xf32>
    %795 = math.tanh %794 : vector<2x32xf32>
    %796 = arith.truncf %795 : vector<2x32xf32> to vector<2x32xbf16>
    %c32_255 = arith.constant 32 : index
    %c0_256 = arith.constant 0 : index
    %797 = vector.load %arg10[%c32_255, %c0_256] : memref<64x32xbf16, #tpu.memory_space<vmem>>, vector<32x32xbf16>
    %cst_257 = arith.constant dense<0.000000e+00> : vector<2x32xf32>
    %798 = tpu.matmul %796, %797, %cst_257 {dimension_numbers = #tpu.dot_dimension_numbers<[1], [0], [0], [1], [0, 0, 1, 1], [], []>} : vector<2x32xbf16>, vector<32x32xbf16>, vector<2x32xf32> -> vector<2x32xf32>
    %799 = vector.extract_strided_slice %798 {offsets = [0, 0], sizes = [2, 7], strides = [1, 1]} : vector<2x32xf32> to vector<2x7xf32>
    %c36 = arith.constant 36 : index
    %c0_258 = arith.constant 0 : index
    %800 = vector.load %arg11[%c36, %c0_258] : memref<37x96xf32, #tpu.memory_space<vmem>>, vector<1x7xf32>
    %801 = vector.broadcast %800 : vector<1x7xf32> to vector<2x7xf32>
    %802 = arith.addf %799, %801 : vector<2x7xf32>
    %c0_259 = arith.constant 0 : index
    %c0_260 = arith.constant 0 : index
    %803 = vector.load %arg12[%c0_259, %c0_260] : memref<2x7xf32, #tpu.memory_space<vmem>>, vector<2x7xf32>
    tpu.vector_store %arg12[%c0_259, %c0_260], %802 {strides = array<i32>} : memref<2x7xf32, #tpu.memory_space<vmem>>, vector<2x7xf32>,
    return
  }
}

</mosaic_0001>

<llo_original>
// kernel: forward.1
$region0: #{forward.1}
  #allocation0 [shape = 'u32[]', space=smem, size = 0x4, offset = 0x4, fixed_abs, tag = 'smem constant byte address 0x4 - core index']
  #allocation1 [shape = 'u32[72,128]{1,0:T(1,128)}', space=vmem, size = 0x9000, scoped, tag = 'internal scratch']
  %s0 = inlined_call_operand.vmem [shape: f32[32,4], index: 0, kind: input, shape index: {}]
  %s1 = inlined_call_operand.vmem [shape: f32[8,16], index: 1, kind: input, shape index: {}]
  %s2 = inlined_call_operand.vmem [shape: f32[32,32], index: 2, kind: input, shape index: {}]
  %s3 = inlined_call_operand.vmem [shape: bf16[20,32], index: 3, kind: input, shape index: {}]
  %s4 = inlined_call_operand.vmem [shape: bf16[4,32,96], index: 4, kind: input, shape index: {}]
  %s5 = inlined_call_operand.vmem [shape: bf16[4,32,32], index: 5, kind: input, shape index: {}]
  %s6 = inlined_call_operand.vmem [shape: bf16[4,32,64], index: 6, kind: input, shape index: {}]
  %s7 = inlined_call_operand.vmem [shape: bf16[4,64,32], index: 7, kind: input, shape index: {}]
  %s8 = inlined_call_operand.vmem [shape: bf16[512,34], index: 8, kind: input, shape index: {}]
  %s9 = inlined_call_operand.vmem [shape: bf16[128,34], index: 9, kind: input, shape index: {}]
  %s10 = inlined_call_operand.vmem [shape: bf16[64,32], index: 10, kind: input, shape index: {}]
  %s11 = inlined_call_operand.vmem [shape: f32[37,96], index: 11, kind: input, shape index: {}]
  %s12 = inlined_call_operand.hbm [shape: f32[2,7], index: 12, kind: output, shape index: {}]
  %s13 = sld [smem:[#allocation0]]
  $region58: #{forward.1} parent=0
    _
  %s15 = ssub.s32 1, %s13
  %s16 = scalar_select 0, %s15, %s13
  $region1: #{forward.1} parent=0
    #allocation2 [shape = 'u8[1024]{0}', space=vmem, size = 0x400, scoped, tag = 'output window, operand 0, single buffered']
    #allocation3 [shape = 's32[1]{0}', space=sflag, size = 0x4, scoped, tag = 'scoped memory for forward.1']
    %17 = vsyncpa [#allocation3], 0
    // Predicated region
    $region2: #{forward.1} parent=1 // pred_check
      _
    $region3: #{forward.1} parent=1 // pred_check_branch
      %19 = sbr.rel (0) target = $region5
    $region4: #{forward.1} parent=1 // pred_region
      _
    $region5: #{forward.1} parent=1 // pred_fallthru
      _
    // Predicated region
    $region6: #{forward.1} parent=1 // pred_check
      _
    $region7: #{forward.1} parent=1 // pred_check_branch
      %21 = sbr.rel (0) target = $region9
    $region8: #{forward.1} parent=1 // pred_region
      _
    $region9: #{forward.1} parent=1 // pred_fallthru
      _
    // Predicated region
    $region10: #{forward.1} parent=1 // pred_check
      _
    $region11: #{forward.1} parent=1 // pred_check_branch
      %23 = sbr.rel (0) target = $region13
    $region12: #{forward.1} parent=1 // pred_region
      _
    $region13: #{forward.1} parent=1 // pred_fallthru
      _
    // Predicated region
    $region14: #{forward.1} parent=1 // pred_check
      _
    $region15: #{forward.1} parent=1 // pred_check_branch
      %25 = sbr.rel (0) target = $region17
    $region16: #{forward.1} parent=1 // pred_region
      _
    $region17: #{forward.1} parent=1 // pred_fallthru
      _
    // Predicated region
    $region18: #{forward.1} parent=1 // pred_check
      _
    $region19: #{forward.1} parent=1 // pred_check_branch
      %27 = sbr.rel (0) target = $region21
    $region20: #{forward.1} parent=1 // pred_region
      _
    $region21: #{forward.1} parent=1 // pred_fallthru
      _
    // Predicated region
    $region22: #{forward.1} parent=1 // pred_check
      _
    $region23: #{forward.1} parent=1 // pred_check_branch
      %29 = sbr.rel (0) target = $region25
    $region24: #{forward.1} parent=1 // pred_region
      _
    $region25: #{forward.1} parent=1 // pred_fallthru
      _
    // Predicated region
    $region26: #{forward.1} parent=1 // pred_check
      _
    $region27: #{forward.1} parent=1 // pred_check_branch
      %31 = sbr.rel (0) target = $region29
    $region28: #{forward.1} parent=1 // pred_region
      _
    $region29: #{forward.1} parent=1 // pred_fallthru
      _
    // Predicated region
    $region30: #{forward.1} parent=1 // pred_check
      _
    $region31: #{forward.1} parent=1 // pred_check_branch
      %33 = sbr.rel (0) target = $region33
    $region32: #{forward.1} parent=1 // pred_region
      _
    $region33: #{forward.1} parent=1 // pred_fallthru
      _
    // Predicated region
    $region34: #{forward.1} parent=1 // pred_check
      _
    $region35: #{forward.1} parent=1 // pred_check_branch
      %35 = sbr.rel (0) target = $region37
    $region36: #{forward.1} parent=1 // pred_region
      _
    $region37: #{forward.1} parent=1 // pred_fallthru
      _
    // Predicated region
    $region38: #{forward.1} parent=1 // pred_check
      _
    $region39: #{forward.1} parent=1 // pred_check_branch
      %37 = sbr.rel (0) target = $region41
    $region40: #{forward.1} parent=1 // pred_region
      _
    $region41: #{forward.1} parent=1 // pred_fallthru
      _
    // Predicated region
    $region42: #{forward.1} parent=1 // pred_check
      _
    $region43: #{forward.1} parent=1 // pred_check_branch
      %39 = sbr.rel (0) target = $region45
    $region44: #{forward.1} parent=1 // pred_region
      _
    $region45: #{forward.1} parent=1 // pred_fallthru
      _
    // Predicated region
    $region46: #{forward.1} parent=1 // pred_check
      _
    $region47: #{forward.1} parent=1 // pred_check_branch
      %41 = sbr.rel (0) target = $region49
    $region48: #{forward.1} parent=1 // pred_region
      _
    $region49: #{forward.1} parent=1 // pred_fallthru
      _
    %v43 = vld [vmem:[%s0] sm:$0xff]
    %v44 = vld [vmem:[%s0 + $0x8] sm:$0xff]
    %v45 = vld [vmem:[%s0 + $0x10] sm:$0xff]
    %v46 = vld [vmem:[%s0 + $0x18] sm:$0xff]
    %v47 = vpack.c.bf16 %v44, %v43
    %v48 = vpack.c.bf16 %v46, %v45
    %v49 = vld [vmem:[%s3] sm:$0x3]
    %v50 = vld [vmem:[%s2] sm:$0xff]
    %v51 = vld [vmem:[%s2 + $0x8] sm:$0xff]
    %v52 = vld [vmem:[%s2 + $0x10] sm:$0xff]
    %v53 = vld [vmem:[%s2 + $0x18] sm:$0xff]
    %vm54 = vcmask 31744
    %v56 = vsel %vm54, %v47, 0
    %v59 = vsel %vm54, %v48, 0
    %vm61 = vcmask 1041408
    %v63 = vsel %vm61, %v49, 0
    %65 = vmatpush.bf16.msra.mxu0 0
    %66 = vmatpush.bf16.msra.mxu0 0
    %67 = vmatpush.bf16.msra.mxu0 0
    %68 = vmatpush.bf16.msra.mxu0 0
    %69 = vmatpush.bf16.msra.mxu0 0
    %70 = vmatpush.bf16.msra.mxu0 0
    %71 = vmatpush.bf16.msra.mxu0 0
    %72 = vmatpush.bf16.msra.mxu0 %v63
    %73 = vmatmul.bf16.gmra.mxu0 %v56
    %v74 = vpop.f32.mrf.mxu0
    %v75 = vadd.f32 %v50, %v74
    %v76 = vpop.f32.mrf.mxu0
    %v77 = vadd.f32 %v51, %v76
    %78 = vmatmul.bf16.gmra.mxu0 %v59
    %v79 = vpop.f32.mrf.mxu0
    %v80 = vadd.f32 %v52, %v79
    %v81 = vpop.f32.mrf.mxu0
    %v82 = vadd.f32 %v53, %v81
    %83 = vdwg.mxu0
    %v84 = vlaneseq
    %v85 = vshrl.u32 %v84, 7
    %v86 = vadd.s32 %v85, 8
    %v87 = vadd.s32 %v85, 16
    %v88 = vadd.s32 %v85, 24
    %vm89 = vcmp.lt.s32.totalorder %v85, 0
    %v90 = vsub.s32 0, %v85
    %v91 = vsel %vm89, %v90, %v85
    %v92 = vshrl.u32 %v91, 1
    %v93 = vand.u32 %v91, 1
    %v94 = vsub.s32 0, %v93
    %v95 = vsel %vm89, %v94, %v93
    %vm96 = vcmp.lt.s32.totalorder %v86, 0
    %v97 = vsub.s32 0, %v86
    %v98 = vsel %vm96, %v97, %v86
    %v99 = vshrl.u32 %v98, 1
    %v100 = vand.u32 %v98, 1
    %v101 = vsub.s32 0, %v100
    %v102 = vsel %vm96, %v101, %v100
    %vm103 = vcmp.lt.s32.totalorder %v87, 0
    %v104 = vsub.s32 0, %v87
    %v105 = vsel %vm103, %v104, %v87
    %v106 = vshrl.u32 %v105, 1
    %v107 = vand.u32 %v105, 1
    %v108 = vsub.s32 0, %v107
    %v109 = vsel %vm103, %v108, %v107
    %vm110 = vcmp.lt.s32.totalorder %v88, 0
    %v111 = vsub.s32 0, %v88
    %v112 = vsel %vm110, %v111, %v88
    %v113 = vshrl.u32 %v112, 1
    %v114 = vand.u32 %v112, 1
    %v115 = vsub.s32 0, %v114
    %v116 = vsel %vm110, %v115, %v114
    %vm117 = vcmp.ne.s32.totalorder %v95, 0
    %vm118 = vcmp.ne.s32.totalorder %v102, 0
    %vm119 = vcmp.ne.s32.totalorder %v109, 0
    %vm120 = vcmp.ne.s32.totalorder %v116, 0
    %vm121 = vcmp.lt.s32.totalorder %v95, 0
    %vm122 = vcmp.lt.s32.totalorder %v102, 0
    %vm123 = vcmp.lt.s32.totalorder %v109, 0
    %vm124 = vcmp.lt.s32.totalorder %v116, 0
    %vm125 = vmand %vm121, %vm117
    %vm126 = vmand %vm122, %vm118
    %vm127 = vmand %vm123, %vm119
    %vm128 = vmand %vm124, %vm120
    %v129 = vadd.s32 %v95, 2
    %v130 = vadd.s32 %v102, 2
    %v131 = vadd.s32 %v109, 2
    %v132 = vadd.s32 %v116, 2
    %v133 = vsel %vm125, %v129, %v95
    %v134 = vsel %vm126, %v130, %v102
    %v135 = vsel %vm127, %v131, %v109
    %v136 = vsel %vm128, %v132, %v116
    %v137 = vlaneseq
    %v138 = vand.u32 %v137, 127
    %vm139 = vcmp.lt.s32.totalorder %v138, 0
    %v140 = vsub.s32 0, %v138
    %v141 = vsel %vm139, %v140, %v138
    %v142 = vshrl.u32 %v141, 1
    %v143 = vand.u32 %v141, 1
    %v144 = vsub.s32 0, %v143
    %v145 = vsel %vm139, %v144, %v143
    %vm146 = vcmp.ne.s32.totalorder %v145, 0
    %vm147 = vcmp.lt.s32.totalorder %v145, 0
    %vm148 = vmand %vm147, %vm146
    %v149 = vadd.s32 %v145, 2
    %v150 = vsel %vm148, %v149, %v145
    %vm151 = vcmp.eq.s32.totalorder %v133, %v150
    %vm152 = vcmp.eq.s32.totalorder %v134, %v150
    %vm153 = vcmp.eq.s32.totalorder %v135, %v150
    %vm154 = vcmp.eq.s32.totalorder %v136, %v150
    %v155 = vsel %vm151, 0.0, -1e+30
    %v156 = vsel %vm152, 0.0, -1e+30
    %v157 = vsel %vm153, 0.0, -1e+30
    %v158 = vsel %vm154, 0.0, -1e+30
    %v159 = vpack.c.bf16 %v77, %v75
    %v160 = vpack.c.bf16 %v82, %v80
    %v161 = vld [vmem:[%s4] sm:$0xf]
    %v162 = vld [vmem:[%s4 + $0x4] sm:$0xf]
    %v163 = vld [vmem:[%s4 + $0x8] sm:$0xf]
    %v164 = vld [vmem:[%s4 + $0xc] sm:$0xf]
    %v165 = vld [vmem:[%s11 + $0x1] sm:$0x1]
    %v166 = vperm.slane %v165, 0
    %v171 = vunpack.c.l.b16 %v161
    %v172 = vunpack.c.l.b16 %v162
    %v173 = vunpack.c.l.b16 %v163
    %v174 = vunpack.c.l.b16 %v164
    %v175 = vpack.c.b16 %v172, %v171
    %v176 = vpack.c.b16 %v174, %v173
    %vm179 = vcmask 261120
    %v181 = vsel %vm179, %v159, 0
    %v184 = vsel %vm179, %v160, 0
    %186 = vmatpush.bf16.msra.mxu0 0
    %187 = vmatpush.bf16.msra.mxu0 0
    %188 = vmatpush.bf16.msra.mxu0 0
    %189 = vmatpush.bf16.msra.mxu0 0
    %190 = vmatpush.bf16.msra.mxu0 0
    %191 = vmatpush.bf16.msra.mxu0 0
    %192 = vmatpush.bf16.msra.mxu0 %v176
    %193 = vmatpush.bf16.msra.mxu0 %v175
    %194 = vmatmul.bf16.gmra.mxu0 %v181
    %v195 = vpop.f32.mrf.mxu0
    %v196 = vadd.f32 %v166, %v195
    %v197 = vpop.f32.mrf.mxu0
    %v198 = vadd.f32 %v166, %v197
    %199 = vmatmul.bf16.gmra.mxu0 %v184
    %v200 = vpop.f32.mrf.mxu0
    %v201 = vadd.f32 %v166, %v200
    %v202 = vpop.f32.mrf.mxu0
    %v203 = vadd.f32 %v166, %v202
    %204 = vdwg.mxu0
    %v205 = vpack.c.bf16 %v198, %v196
    %v206 = vpack.c.bf16 %v203, %v201
    %209 = vrot.lane.b32.xlu0 %v205, 96
    %v210 = vpop.permute.xlu0 %209
    %211 = vrot.lane.b32.xlu0 %v206, 96
    %v212 = vpop.permute.xlu0 %211
    %vm213 = vcmask 64512
    %v215 = vsel %vm213, %v205, 0
    %v218 = vsel %vm213, %v206, 0
    %v221 = vsel %vm213, %v210, 0
    %v224 = vsel %vm213, %v212, 0
    %226 = vmatpush.bf16.xpose.msra.mxu0 0
    %227 = vmatpush.bf16.xpose.msra.mxu0 0
    %228 = vmatpush.bf16.xpose.msra.mxu0 0
    %229 = vmatpush.bf16.xpose.msra.mxu0 0
    %230 = vmatpush.bf16.xpose.msra.mxu0 0
    %231 = vmatpush.bf16.xpose.msra.mxu0 0
    %232 = vmatpush.bf16.xpose.msra.mxu0 %v224
    %233 = vmatpush.bf16.xpose.msra.mxu0 %v221
    %234 = vmatmul.bf16.gmra.mxu0 %v215
    %v235 = vpop.f32.mrf.mxu0
    %v236 = vadd.f32 %v155, %v235
    %v237 = vpop.f32.mrf.mxu0
    %v238 = vadd.f32 %v156, %v237
    %239 = vmatmul.bf16.gmra.mxu0 %v218
    %v240 = vpop.f32.mrf.mxu0
    %v241 = vadd.f32 %v157, %v240
    %v242 = vpop.f32.mrf.mxu0
    %v243 = vadd.f32 %v158, %v242
    %244 = vdwg.mxu0
    %v245 = vsel %vm179, %v236, -inf
    %246 = vmax.xlane.f32.xlu0 %v245
    %v247 = vpop.xlane.xlu0 %246
    %v248 = vsel %vm179, %v238, -inf
    %249 = vmax.xlane.f32.xlu0 %v248
    %v250 = vpop.xlane.xlu0 %249
    %v251 = vsel %vm179, %v241, -inf
    %252 = vmax.xlane.f32.xlu0 %v251
    %v253 = vpop.xlane.xlu0 %252
    %v254 = vsel %vm179, %v243, -inf
    %255 = vmax.xlane.f32.xlu0 %v254
    %v256 = vpop.xlane.xlu0 %255
    %v257 = vsub.f32 %v236, %v247
    %v258 = vsub.f32 %v238, %v250
    %v259 = vsub.f32 %v241, %v253
    %v260 = vsub.f32 %v243, %v256
    %v261 = vmul.f32 %v257, 1.442695
    %v262 = vpow.pop %v261
    %v263 = vmul.f32 %v258, 1.442695
    %v264 = vpow.pop %v263
    %v265 = vmul.f32 %v259, 1.442695
    %v266 = vpow.pop %v265
    %v267 = vmul.f32 %v260, 1.442695
    %v268 = vpow.pop %v267
    %v269 = vsel %vm179, %v262, 0.0
    %270 = vadd.xlane.f32.xlu0 %v269
    %v271 = vpop.xlane.xlu0 %270
    %v272 = vsel %vm179, %v264, 0.0
    %273 = vadd.xlane.f32.xlu0 %v272
    %v274 = vpop.xlane.xlu0 %273
    %v275 = vsel %vm179, %v266, 0.0
    %276 = vadd.xlane.f32.xlu0 %v275
    %v277 = vpop.xlane.xlu0 %276
    %v278 = vsel %vm179, %v268, 0.0
    %279 = vadd.xlane.f32.xlu0 %v278
    %v280 = vpop.xlane.xlu0 %279
    %v281 = vrcp.pop %v271
    %v282 = vmul.f32 %v271, %v281
    %v283 = vsub.f32 1.0, %v282
    %v284 = vmul.f32 %v281, %v283
    %v285 = vadd.f32 %v281, %v284
    %vm286 = vweird.f32 %v271
    %vm287 = vweird.f32 %v281
    %vm288 = vmor %vm286, %vm287
    %v289 = vsel %vm288, %v281, %v285
    %v290 = vand.u32 2147483647, %v271
    %vm291 = vcmp.eq.f32.partialorder %v290, 8.507059e+37
    %v292 = vand.u32 %v271, 2147483648
    %v293 = vor.u32 1.1754944e-38, %v292
    %v294 = vsel %vm291, %v293, %v289
    %v295 = vmul.f32 %v262, %v294
    %v296 = vrcp.pop %v274
    %v297 = vmul.f32 %v274, %v296
    %v298 = vsub.f32 1.0, %v297
    %v299 = vmul.f32 %v296, %v298
    %v300 = vadd.f32 %v296, %v299
    %vm301 = vweird.f32 %v274
    %vm302 = vweird.f32 %v296
    %vm303 = vmor %vm301, %vm302
    %v304 = vsel %vm303, %v296, %v300
    %v305 = vand.u32 2147483647, %v274
    %vm306 = vcmp.eq.f32.partialorder %v305, 8.507059e+37
    %v307 = vand.u32 %v274, 2147483648
    %v308 = vor.u32 1.1754944e-38, %v307
    %v309 = vsel %vm306, %v308, %v304
    %v310 = vmul.f32 %v264, %v309
    %v311 = vrcp.pop %v277
    %v312 = vmul.f32 %v277, %v311
    %v313 = vsub.f32 1.0, %v312
    %v314 = vmul.f32 %v311, %v313
    %v315 = vadd.f32 %v311, %v314
    %vm316 = vweird.f32 %v277
    %vm317 = vweird.f32 %v311
    %vm318 = vmor %vm316, %vm317
    %v319 = vsel %vm318, %v311, %v315
    %v320 = vand.u32 2147483647, %v277
    %vm321 = vcmp.eq.f32.partialorder %v320, 8.507059e+37
    %v322 = vand.u32 %v277, 2147483648
    %v323 = vor.u32 1.1754944e-38, %v322
    %v324 = vsel %vm321, %v323, %v319
    %v325 = vmul.f32 %v266, %v324
    %v326 = vrcp.pop %v280
    %v327 = vmul.f32 %v280, %v326
    %v328 = vsub.f32 1.0, %v327
    %v329 = vmul.f32 %v326, %v328
    %v330 = vadd.f32 %v326, %v329
    %vm331 = vweird.f32 %v280
    %vm332 = vweird.f32 %v326
    %vm333 = vmor %vm331, %vm332
    %v334 = vsel %vm333, %v326, %v330
    %v335 = vand.u32 2147483647, %v280
    %vm336 = vcmp.eq.f32.partialorder %v335, 8.507059e+37
    %v337 = vand.u32 %v280, 2147483648
    %v338 = vor.u32 1.1754944e-38, %v337
    %v339 = vsel %vm336, %v338, %v334
    %v340 = vmul.f32 %v268, %v339
    %v341 = vpack.c.bf16 %v310, %v295
    %v342 = vpack.c.bf16 %v340, %v325
    %343 = vrot.lane.b32.xlu0 %v205, 64
    %v344 = vpop.permute.xlu0 %343
    %345 = vrot.lane.b32.xlu0 %v206, 64
    %v346 = vpop.permute.xlu0 %345
    %v350 = vsel %vm179, %v341, 0
    %v353 = vsel %vm179, %v342, 0
    %355 = vmatpush.bf16.msra.mxu0 0
    %356 = vmatpush.bf16.msra.mxu0 0
    %357 = vmatpush.bf16.msra.mxu0 0
    %358 = vmatpush.bf16.msra.mxu0 0
    %359 = vmatpush.bf16.msra.mxu0 0
    %360 = vmatpush.bf16.msra.mxu0 0
    %361 = vmatpush.bf16.msra.mxu0 %v346
    %362 = vmatpush.bf16.msra.mxu0 %v344
    %363 = vmatmul.bf16.gmra.mxu0 %v350
    %v364 = vpop.f32.mrf.mxu0
    %v365 = vadd.f32 0.0, %v364
    %v366 = vpop.f32.mrf.mxu0
    %v367 = vadd.f32 0.0, %v366
    %368 = vmatmul.bf16.gmra.mxu0 %v353
    %v369 = vpop.f32.mrf.mxu0
    %v370 = vadd.f32 0.0, %v369
    %v371 = vpop.f32.mrf.mxu0
    %v372 = vadd.f32 0.0, %v371
    %373 = vdwg.mxu0
    %374 = vrot.lane.b32.xlu0 %v205, 120
    %v375 = vpop.permute.xlu0 %374
    %376 = vrot.lane.b32.xlu0 %v206, 120
    %v377 = vpop.permute.xlu0 %376
    %378 = vrot.lane.b32.xlu0 %v205, 88
    %v379 = vpop.permute.xlu0 %378
    %380 = vrot.lane.b32.xlu0 %v206, 88
    %v381 = vpop.permute.xlu0 %380
    %v383 = vsel %vm213, %v375, 0
    %v386 = vsel %vm213, %v377, 0
    %v389 = vsel %vm213, %v379, 0
    %v392 = vsel %vm213, %v381, 0
    %394 = vmatpush.bf16.xpose.msra.mxu0 0
    %395 = vmatpush.bf16.xpose.msra.mxu0 0
    %396 = vmatpush.bf16.xpose.msra.mxu0 0
    %397 = vmatpush.bf16.xpose.msra.mxu0 0
    %398 = vmatpush.bf16.xpose.msra.mxu0 0
    %399 = vmatpush.bf16.xpose.msra.mxu0 0
    %400 = vmatpush.bf16.xpose.msra.mxu0 %v392
    %401 = vmatpush.bf16.xpose.msra.mxu0 %v389
    %402 = vmatmul.bf16.gmra.mxu0 %v383
    %v403 = vpop.f32.mrf.mxu0
    %v404 = vadd.f32 %v155, %v403
    %v405 = vpop.f32.mrf.mxu0
    %v406 = vadd.f32 %v156, %v405
    %407 = vmatmul.bf16.gmra.mxu0 %v386
    %v408 = vpop.f32.mrf.mxu0
    %v409 = vadd.f32 %v157, %v408
    %v410 = vpop.f32.mrf.mxu0
    %v411 = vadd.f32 %v158, %v410
    %412 = vdwg.mxu0
    %v413 = vsel %vm179, %v404, -inf
    %414 = vmax.xlane.f32.xlu0 %v413
    %v415 = vpop.xlane.xlu0 %414
    %v416 = vsel %vm179, %v406, -inf
    %417 = vmax.xlane.f32.xlu0 %v416
    %v418 = vpop.xlane.xlu0 %417
    %v419 = vsel %vm179, %v409, -inf
    %420 = vmax.xlane.f32.xlu0 %v419
    %v421 = vpop.xlane.xlu0 %420
    %v422 = vsel %vm179, %v411, -inf
    %423 = vmax.xlane.f32.xlu0 %v422
    %v424 = vpop.xlane.xlu0 %423
    %v425 = vsub.f32 %v404, %v415
    %v426 = vsub.f32 %v406, %v418
    %v427 = vsub.f32 %v409, %v421
    %v428 = vsub.f32 %v411, %v424
    %v429 = vmul.f32 %v425, 1.442695
    %v430 = vpow.pop %v429
    %v431 = vmul.f32 %v426, 1.442695
    %v432 = vpow.pop %v431
    %v433 = vmul.f32 %v427, 1.442695
    %v434 = vpow.pop %v433
    %v435 = vmul.f32 %v428, 1.442695
    %v436 = vpow.pop %v435
    %v437 = vsel %vm179, %v430, 0.0
    %438 = vadd.xlane.f32.xlu0 %v437
    %v439 = vpop.xlane.xlu0 %438
    %v440 = vsel %vm179, %v432, 0.0
    %441 = vadd.xlane.f32.xlu0 %v440
    %v442 = vpop.xlane.xlu0 %441
    %v443 = vsel %vm179, %v434, 0.0
    %444 = vadd.xlane.f32.xlu0 %v443
    %v445 = vpop.xlane.xlu0 %444
    %v446 = vsel %vm179, %v436, 0.0
    %447 = vadd.xlane.f32.xlu0 %v446
    %v448 = vpop.xlane.xlu0 %447
    %v449 = vrcp.pop %v439
    %v450 = vmul.f32 %v439, %v449
    %v451 = vsub.f32 1.0, %v450
    %v452 = vmul.f32 %v449, %v451
    %v453 = vadd.f32 %v449, %v452
    %vm454 = vweird.f32 %v439
    %vm455 = vweird.f32 %v449
    %vm456 = vmor %vm454, %vm455
    %v457 = vsel %vm456, %v449, %v453
    %v458 = vand.u32 2147483647, %v439
    %vm459 = vcmp.eq.f32.partialorder %v458, 8.507059e+37
    %v460 = vand.u32 %v439, 2147483648
    %v461 = vor.u32 1.1754944e-38, %v460
    %v462 = vsel %vm459, %v461, %v457
    %v463 = vmul.f32 %v430, %v462
    %v464 = vrcp.pop %v442
    %v465 = vmul.f32 %v442, %v464
    %v466 = vsub.f32 1.0, %v465
    %v467 = vmul.f32 %v464, %v466
    %v468 = vadd.f32 %v464, %v467
    %vm469 = vweird.f32 %v442
    %vm470 = vweird.f32 %v464
    %vm471 = vmor %vm469, %vm470
    %v472 = vsel %vm471, %v464, %v468
    %v473 = vand.u32 2147483647, %v442
    %vm474 = vcmp.eq.f32.partialorder %v473, 8.507059e+37
    %v475 = vand.u32 %v442, 2147483648
    %v476 = vor.u32 1.1754944e-38, %v475
    %v477 = vsel %vm474, %v476, %v472
    %v478 = vmul.f32 %v432, %v477
    %v479 = vrcp.pop %v445
    %v480 = vmul.f32 %v445, %v479
    %v481 = vsub.f32 1.0, %v480
    %v482 = vmul.f32 %v479, %v481
    %v483 = vadd.f32 %v479, %v482
    %vm484 = vweird.f32 %v445
    %vm485 = vweird.f32 %v479
    %vm486 = vmor %vm484, %vm485
    %v487 = vsel %vm486, %v479, %v483
    %v488 = vand.u32 2147483647, %v445
    %vm489 = vcmp.eq.f32.partialorder %v488, 8.507059e+37
    %v490 = vand.u32 %v445, 2147483648
    %v491 = vor.u32 1.1754944e-38, %v490
    %v492 = vsel %vm489, %v491, %v487
    %v493 = vmul.f32 %v434, %v492
    %v494 = vrcp.pop %v448
    %v495 = vmul.f32 %v448, %v494
    %v496 = vsub.f32 1.0, %v495
    %v497 = vmul.f32 %v494, %v496
    %v498 = vadd.f32 %v494, %v497
    %vm499 = vweird.f32 %v448
    %vm500 = vweird.f32 %v494
    %vm501 = vmor %vm499, %vm500
    %v502 = vsel %vm501, %v494, %v498
    %v503 = vand.u32 2147483647, %v448
    %vm504 = vcmp.eq.f32.partialorder %v503, 8.507059e+37
    %v505 = vand.u32 %v448, 2147483648
    %v506 = vor.u32 1.1754944e-38, %v505
    %v507 = vsel %vm504, %v506, %v502
    %v508 = vmul.f32 %v436, %v507
    %v509 = vpack.c.bf16 %v478, %v463
    %v510 = vpack.c.bf16 %v508, %v493
    %511 = vrot.lane.b32.xlu0 %v205, 56
    %v512 = vpop.permute.xlu0 %511
    %513 = vrot.lane.b32.xlu0 %v206, 56
    %v514 = vpop.permute.xlu0 %513
    %v518 = vsel %vm179, %v509, 0
    %v521 = vsel %vm179, %v510, 0
    %523 = vmatpush.bf16.msra.mxu0 0
    %524 = vmatpush.bf16.msra.mxu0 0
    %525 = vmatpush.bf16.msra.mxu0 0
    %526 = vmatpush.bf16.msra.mxu0 0
    %527 = vmatpush.bf16.msra.mxu0 0
    %528 = vmatpush.bf16.msra.mxu0 0
    %529 = vmatpush.bf16.msra.mxu0 %v514
    %530 = vmatpush.bf16.msra.mxu0 %v512
    %531 = vmatmul.bf16.gmra.mxu0 %v518
    %v532 = vpop.f32.mrf.mxu0
    %v533 = vadd.f32 0.0, %v532
    %v534 = vpop.f32.mrf.mxu0
    %v535 = vadd.f32 0.0, %v534
    %536 = vmatmul.bf16.gmra.mxu0 %v521
    %v537 = vpop.f32.mrf.mxu0
    %v538 = vadd.f32 0.0, %v537
    %v539 = vpop.f32.mrf.mxu0
    %v540 = vadd.f32 0.0, %v539
    %541 = vdwg.mxu0
    %542 = vrot.lane.b32.xlu0 %v205, 112
    %v543 = vpop.permute.xlu0 %542
    %544 = vrot.lane.b32.xlu0 %v206, 112
    %v545 = vpop.permute.xlu0 %544
    %546 = vrot.lane.b32.xlu0 %v205, 80
    %v547 = vpop.permute.xlu0 %546
    %548 = vrot.lane.b32.xlu0 %v206, 80
    %v549 = vpop.permute.xlu0 %548
    %v551 = vsel %vm213, %v543, 0
    %v554 = vsel %vm213, %v545, 0
    %v557 = vsel %vm213, %v547, 0
    %v560 = vsel %vm213, %v549, 0
    %562 = vmatpush.bf16.xpose.msra.mxu0 0
    %563 = vmatpush.bf16.xpose.msra.mxu0 0
    %564 = vmatpush.bf16.xpose.msra.mxu0 0
    %565 = vmatpush.bf16.xpose.msra.mxu0 0
    %566 = vmatpush.bf16.xpose.msra.mxu0 0
    %567 = vmatpush.bf16.xpose.msra.mxu0 0
    %568 = vmatpush.bf16.xpose.msra.mxu0 %v560
    %569 = vmatpush.bf16.xpose.msra.mxu0 %v557
    %570 = vmatmul.bf16.gmra.mxu0 %v551
    %v571 = vpop.f32.mrf.mxu0
    %v572 = vadd.f32 %v155, %v571
    %v573 = vpop.f32.mrf.mxu0
    %v574 = vadd.f32 %v156, %v573
    %575 = vmatmul.bf16.gmra.mxu0 %v554
    %v576 = vpop.f32.mrf.mxu0
    %v577 = vadd.f32 %v157, %v576
    %v578 = vpop.f32.mrf.mxu0
    %v579 = vadd.f32 %v158, %v578
    %580 = vdwg.mxu0
    %v581 = vsel %vm179, %v572, -inf
    %582 = vmax.xlane.f32.xlu0 %v581
    %v583 = vpop.xlane.xlu0 %582
    %v584 = vsel %vm179, %v574, -inf
    %585 = vmax.xlane.f32.xlu0 %v584
    %v586 = vpop.xlane.xlu0 %585
    %v587 = vsel %vm179, %v577, -inf
    %588 = vmax.xlane.f32.xlu0 %v587
    %v589 = vpop.xlane.xlu0 %588
    %v590 = vsel %vm179, %v579, -inf
    %591 = vmax.xlane.f32.xlu0 %v590
    %v592 = vpop.xlane.xlu0 %591
    %v593 = vsub.f32 %v572, %v583
    %v594 = vsub.f32 %v574, %v586
    %v595 = vsub.f32 %v577, %v589
    %v596 = vsub.f32 %v579, %v592
    %v597 = vmul.f32 %v593, 1.442695
    %v598 = vpow.pop %v597
    %v599 = vmul.f32 %v594, 1.442695
    %v600 = vpow.pop %v599
    %v601 = vmul.f32 %v595, 1.442695
    %v602 = vpow.pop %v601
    %v603 = vmul.f32 %v596, 1.442695
    %v604 = vpow.pop %v603
    %v605 = vsel %vm179, %v598, 0.0
    %606 = vadd.xlane.f32.xlu0 %v605
    %v607 = vpop.xlane.xlu0 %606
    %v608 = vsel %vm179, %v600, 0.0
    %609 = vadd.xlane.f32.xlu0 %v608
    %v610 = vpop.xlane.xlu0 %609
    %v611 = vsel %vm179, %v602, 0.0
    %612 = vadd.xlane.f32.xlu0 %v611
    %v613 = vpop.xlane.xlu0 %612
    %v614 = vsel %vm179, %v604, 0.0
    %615 = vadd.xlane.f32.xlu0 %v614
    %v616 = vpop.xlane.xlu0 %615
    %v617 = vrcp.pop %v607
    %v618 = vmul.f32 %v607, %v617
    %v619 = vsub.f32 1.0, %v618
    %v620 = vmul.f32 %v617, %v619
    %v621 = vadd.f32 %v617, %v620
    %vm622 = vweird.f32 %v607
    %vm623 = vweird.f32 %v617
    %vm624 = vmor %vm622, %vm623
    %v625 = vsel %vm624, %v617, %v621
    %v626 = vand.u32 2147483647, %v607
    %vm627 = vcmp.eq.f32.partialorder %v626, 8.507059e+37
    %v628 = vand.u32 %v607, 2147483648
    %v629 = vor.u32 1.1754944e-38, %v628
    %v630 = vsel %vm627, %v629, %v625
    %v631 = vmul.f32 %v598, %v630
    %v632 = vrcp.pop %v610
    %v633 = vmul.f32 %v610, %v632
    %v634 = vsub.f32 1.0, %v633
    %v635 = vmul.f32 %v632, %v634
    %v636 = vadd.f32 %v632, %v635
    %vm637 = vweird.f32 %v610
    %vm638 = vweird.f32 %v632
    %vm639 = vmor %vm637, %vm638
    %v640 = vsel %vm639, %v632, %v636
    %v641 = vand.u32 2147483647, %v610
    %vm642 = vcmp.eq.f32.partialorder %v641, 8.507059e+37
    %v643 = vand.u32 %v610, 2147483648
    %v644 = vor.u32 1.1754944e-38, %v643
    %v645 = vsel %vm642, %v644, %v640
    %v646 = vmul.f32 %v600, %v645
    %v647 = vrcp.pop %v613
    %v648 = vmul.f32 %v613, %v647
    %v649 = vsub.f32 1.0, %v648
    %v650 = vmul.f32 %v647, %v649
    %v651 = vadd.f32 %v647, %v650
    %vm652 = vweird.f32 %v613
    %vm653 = vweird.f32 %v647
    %vm654 = vmor %vm652, %vm653
    %v655 = vsel %vm654, %v647, %v651
    %v656 = vand.u32 2147483647, %v613
    %vm657 = vcmp.eq.f32.partialorder %v656, 8.507059e+37
    %v658 = vand.u32 %v613, 2147483648
    %v659 = vor.u32 1.1754944e-38, %v658
    %v660 = vsel %vm657, %v659, %v655
    %v661 = vmul.f32 %v602, %v660
    %v662 = vrcp.pop %v616
    %v663 = vmul.f32 %v616, %v662
    %v664 = vsub.f32 1.0, %v663
    %v665 = vmul.f32 %v662, %v664
    %v666 = vadd.f32 %v662, %v665
    %vm667 = vweird.f32 %v616
    %vm668 = vweird.f32 %v662
    %vm669 = vmor %vm667, %vm668
    %v670 = vsel %vm669, %v662, %v666
    %v671 = vand.u32 2147483647, %v616
    %vm672 = vcmp.eq.f32.partialorder %v671, 8.507059e+37
    %v673 = vand.u32 %v616, 2147483648
    %v674 = vor.u32 1.1754944e-38, %v673
    %v675 = vsel %vm672, %v674, %v670
    %v676 = vmul.f32 %v604, %v675
    %v677 = vpack.c.bf16 %v646, %v631
    %v678 = vpack.c.bf16 %v676, %v661
    %679 = vrot.lane.b32.xlu0 %v205, 48
    %v680 = vpop.permute.xlu0 %679
    %681 = vrot.lane.b32.xlu0 %v206, 48
    %v682 = vpop.permute.xlu0 %681
    %v686 = vsel %vm179, %v677, 0
    %v689 = vsel %vm179, %v678, 0
    %691 = vmatpush.bf16.msra.mxu0 0
    %692 = vmatpush.bf16.msra.mxu0 0
    %693 = vmatpush.bf16.msra.mxu0 0
    %694 = vmatpush.bf16.msra.mxu0 0
    %695 = vmatpush.bf16.msra.mxu0 0
    %696 = vmatpush.bf16.msra.mxu0 0
    %697 = vmatpush.bf16.msra.mxu0 %v682
    %698 = vmatpush.bf16.msra.mxu0 %v680
    %699 = vmatmul.bf16.gmra.mxu0 %v686
    %v700 = vpop.f32.mrf.mxu0
    %v701 = vadd.f32 0.0, %v700
    %v702 = vpop.f32.mrf.mxu0
    %v703 = vadd.f32 0.0, %v702
    %704 = vmatmul.bf16.gmra.mxu0 %v689
    %v705 = vpop.f32.mrf.mxu0
    %v706 = vadd.f32 0.0, %v705
    %v707 = vpop.f32.mrf.mxu0
    %v708 = vadd.f32 0.0, %v707
    %709 = vdwg.mxu0
    %710 = vrot.lane.b32.xlu0 %v205, 104
    %v711 = vpop.permute.xlu0 %710
    %712 = vrot.lane.b32.xlu0 %v206, 104
    %v713 = vpop.permute.xlu0 %712
    %714 = vrot.lane.b32.xlu0 %v205, 72
    %v715 = vpop.permute.xlu0 %714
    %716 = vrot.lane.b32.xlu0 %v206, 72
    %v717 = vpop.permute.xlu0 %716
    %v719 = vsel %vm213, %v711, 0
    %v722 = vsel %vm213, %v713, 0
    %v725 = vsel %vm213, %v715, 0
    %v728 = vsel %vm213, %v717, 0
    %730 = vmatpush.bf16.xpose.msra.mxu0 0
    %731 = vmatpush.bf16.xpose.msra.mxu0 0
    %732 = vmatpush.bf16.xpose.msra.mxu0 0
    %733 = vmatpush.bf16.xpose.msra.mxu0 0
    %734 = vmatpush.bf16.xpose.msra.mxu0 0
    %735 = vmatpush.bf16.xpose.msra.mxu0 0
    %736 = vmatpush.bf16.xpose.msra.mxu0 %v728
    %737 = vmatpush.bf16.xpose.msra.mxu0 %v725
    %738 = vmatmul.bf16.gmra.mxu0 %v719
    %v739 = vpop.f32.mrf.mxu0
    %v740 = vadd.f32 %v155, %v739
    %v741 = vpop.f32.mrf.mxu0
    %v742 = vadd.f32 %v156, %v741
    %743 = vmatmul.bf16.gmra.mxu0 %v722
    %v744 = vpop.f32.mrf.mxu0
    %v745 = vadd.f32 %v157, %v744
    %v746 = vpop.f32.mrf.mxu0
    %v747 = vadd.f32 %v158, %v746
    %748 = vdwg.mxu0
    %v749 = vsel %vm179, %v740, -inf
    %750 = vmax.xlane.f32.xlu0 %v749
    %v751 = vpop.xlane.xlu0 %750
    %v752 = vsel %vm179, %v742, -inf
    %753 = vmax.xlane.f32.xlu0 %v752
    %v754 = vpop.xlane.xlu0 %753
    %v755 = vsel %vm179, %v745, -inf
    %756 = vmax.xlane.f32.xlu0 %v755
    %v757 = vpop.xlane.xlu0 %756
    %v758 = vsel %vm179, %v747, -inf
    %759 = vmax.xlane.f32.xlu0 %v758
    %v760 = vpop.xlane.xlu0 %759
    %v761 = vsub.f32 %v740, %v751
    %v762 = vsub.f32 %v742, %v754
    %v763 = vsub.f32 %v745, %v757
    %v764 = vsub.f32 %v747, %v760
    %v765 = vmul.f32 %v761, 1.442695
    %v766 = vpow.pop %v765
    %v767 = vmul.f32 %v762, 1.442695
    %v768 = vpow.pop %v767
    %v769 = vmul.f32 %v763, 1.442695
    %v770 = vpow.pop %v769
    %v771 = vmul.f32 %v764, 1.442695
    %v772 = vpow.pop %v771
    %v773 = vsel %vm179, %v766, 0.0
    %774 = vadd.xlane.f32.xlu0 %v773
    %v775 = vpop.xlane.xlu0 %774
    %v776 = vsel %vm179, %v768, 0.0
    %777 = vadd.xlane.f32.xlu0 %v776
    %v778 = vpop.xlane.xlu0 %777
    %v779 = vsel %vm179, %v770, 0.0
    %780 = vadd.xlane.f32.xlu0 %v779
    %v781 = vpop.xlane.xlu0 %780
    %v782 = vsel %vm179, %v772, 0.0
    %783 = vadd.xlane.f32.xlu0 %v782
    %v784 = vpop.xlane.xlu0 %783
    %v785 = vrcp.pop %v775
    %v786 = vmul.f32 %v775, %v785
    %v787 = vsub.f32 1.0, %v786
    %v788 = vmul.f32 %v785, %v787
    %v789 = vadd.f32 %v785, %v788
    %vm790 = vweird.f32 %v775
    %vm791 = vweird.f32 %v785
    %vm792 = vmor %vm790, %vm791
    %v793 = vsel %vm792, %v785, %v789
    %v794 = vand.u32 2147483647, %v775
    %vm795 = vcmp.eq.f32.partialorder %v794, 8.507059e+37
    %v796 = vand.u32 %v775, 2147483648
    %v797 = vor.u32 1.1754944e-38, %v796
    %v798 = vsel %vm795, %v797, %v793
    %v799 = vmul.f32 %v766, %v798
    %v800 = vrcp.pop %v778
    %v801 = vmul.f32 %v778, %v800
    %v802 = vsub.f32 1.0, %v801
    %v803 = vmul.f32 %v800, %v802
    %v804 = vadd.f32 %v800, %v803
    %vm805 = vweird.f32 %v778
    %vm806 = vweird.f32 %v800
    %vm807 = vmor %vm805, %vm806
    %v808 = vsel %vm807, %v800, %v804
    %v809 = vand.u32 2147483647, %v778
    %vm810 = vcmp.eq.f32.partialorder %v809, 8.507059e+37
    %v811 = vand.u32 %v778, 2147483648
    %v812 = vor.u32 1.1754944e-38, %v811
    %v813 = vsel %vm810, %v812, %v808
    %v814 = vmul.f32 %v768, %v813
    %v815 = vrcp.pop %v781
    %v816 = vmul.f32 %v781, %v815
    %v817 = vsub.f32 1.0, %v816
    %v818 = vmul.f32 %v815, %v817
    %v819 = vadd.f32 %v815, %v818
    %vm820 = vweird.f32 %v781
    %vm821 = vweird.f32 %v815
    %vm822 = vmor %vm820, %vm821
    %v823 = vsel %vm822, %v815, %v819
    %v824 = vand.u32 2147483647, %v781
    %vm825 = vcmp.eq.f32.partialorder %v824, 8.507059e+37
    %v826 = vand.u32 %v781, 2147483648
    %v827 = vor.u32 1.1754944e-38, %v826
    %v828 = vsel %vm825, %v827, %v823
    %v829 = vmul.f32 %v770, %v828
    %v830 = vrcp.pop %v784
    %v831 = vmul.f32 %v784, %v830
    %v832 = vsub.f32 1.0, %v831
    %v833 = vmul.f32 %v830, %v832
    %v834 = vadd.f32 %v830, %v833
    %vm835 = vweird.f32 %v784
    %vm836 = vweird.f32 %v830
    %vm837 = vmor %vm835, %vm836
    %v838 = vsel %vm837, %v830, %v834
    %v839 = vand.u32 2147483647, %v784
    %vm840 = vcmp.eq.f32.partialorder %v839, 8.507059e+37
    %v841 = vand.u32 %v784, 2147483648
    %v842 = vor.u32 1.1754944e-38, %v841
    %v843 = vsel %vm840, %v842, %v838
    %v844 = vmul.f32 %v772, %v843
    %v845 = vpack.c.bf16 %v814, %v799
    %v846 = vpack.c.bf16 %v844, %v829
    %847 = vrot.lane.b32.xlu0 %v205, 40
    %v848 = vpop.permute.xlu0 %847
    %849 = vrot.lane.b32.xlu0 %v206, 40
    %v850 = vpop.permute.xlu0 %849
    %v854 = vsel %vm179, %v845, 0
    %v857 = vsel %vm179, %v846, 0
    %859 = vmatpush.bf16.msra.mxu0 0
    %860 = vmatpush.bf16.msra.mxu0 0
    %861 = vmatpush.bf16.msra.mxu0 0
    %862 = vmatpush.bf16.msra.mxu0 0
    %863 = vmatpush.bf16.msra.mxu0 0
    %864 = vmatpush.bf16.msra.mxu0 0
    %865 = vmatpush.bf16.msra.mxu0 %v850
    %866 = vmatpush.bf16.msra.mxu0 %v848
    %867 = vmatmul.bf16.gmra.mxu0 %v854
    %v868 = vpop.f32.mrf.mxu0
    %v869 = vadd.f32 0.0, %v868
    %v870 = vpop.f32.mrf.mxu0
    %v871 = vadd.f32 0.0, %v870
    %872 = vmatmul.bf16.gmra.mxu0 %v857
    %v873 = vpop.f32.mrf.mxu0
    %v874 = vadd.f32 0.0, %v873
    %v875 = vpop.f32.mrf.mxu0
    %v876 = vadd.f32 0.0, %v875
    %877 = vdwg.mxu0
    %882 = vrot.lane.b32.xlu0 %v533, 8
    %v883 = vpop.permute.xlu0 %882
    %884 = vrot.lane.b32.xlu0 %v535, 8
    %v885 = vpop.permute.xlu0 %884
    %886 = vrot.lane.b32.xlu0 %v538, 8
    %v887 = vpop.permute.xlu0 %886
    %888 = vrot.lane.b32.xlu0 %v540, 8
    %v889 = vpop.permute.xlu0 %888
    %898 = vrot.lane.b32.xlu0 %v701, 16
    %v899 = vpop.permute.xlu0 %898
    %900 = vrot.lane.b32.xlu0 %v703, 16
    %v901 = vpop.permute.xlu0 %900
    %902 = vrot.lane.b32.xlu0 %v706, 16
    %v903 = vpop.permute.xlu0 %902
    %904 = vrot.lane.b32.xlu0 %v708, 16
    %v905 = vpop.permute.xlu0 %904
    %914 = vrot.lane.b32.xlu0 %v869, 24
    %v915 = vpop.permute.xlu0 %914
    %916 = vrot.lane.b32.xlu0 %v871, 24
    %v917 = vpop.permute.xlu0 %916
    %918 = vrot.lane.b32.xlu0 %v874, 24
    %v919 = vpop.permute.xlu0 %918
    %920 = vrot.lane.b32.xlu0 %v876, 24
    %v921 = vpop.permute.xlu0 %920
    %v926 = vsel %vm213, %v365, %v883
    %v927 = vsel %vm213, %v367, %v885
    %v928 = vsel %vm213, %v370, %v887
    %v929 = vsel %vm213, %v372, %v889
    %vm930 = vcmask 130048
    %v931 = vsel %vm930, %v926, %v899
    %v932 = vsel %vm930, %v927, %v901
    %v933 = vsel %vm930, %v928, %v903
    %v934 = vsel %vm930, %v929, %v905
    %vm935 = vcmask 195584
    %v936 = vsel %vm935, %v931, %v915
    %v937 = vsel %vm935, %v932, %v917
    %v938 = vsel %vm935, %v933, %v919
    %v939 = vsel %vm935, %v934, %v921
    %v940 = vpack.c.bf16 %v937, %v936
    %v941 = vpack.c.bf16 %v939, %v938
    %v942 = vld [vmem:[%s5] sm:$0xf]
    %v943 = vld [vmem:[%s5 + $0x4] sm:$0xf]
    %v944 = vld [vmem:[%s5 + $0x8] sm:$0xf]
    %v945 = vld [vmem:[%s5 + $0xc] sm:$0xf]
    %v946 = vld [vmem:[%s11 + $0x5] sm:$0x1]
    %v947 = vperm.slane %v946, 0
    %v952 = vunpack.c.l.b16 %v942
    %v953 = vunpack.c.l.b16 %v943
    %v954 = vunpack.c.l.b16 %v944
    %v955 = vunpack.c.l.b16 %v945
    %v956 = vpack.c.b16 %v953, %v952
    %v957 = vpack.c.b16 %v955, %v954
    %v961 = vsel %vm179, %v940, 0
    %v964 = vsel %vm179, %v941, 0
    %966 = vmatpush.bf16.msra.mxu0 0
    %967 = vmatpush.bf16.msra.mxu0 0
    %968 = vmatpush.bf16.msra.mxu0 0
    %969 = vmatpush.bf16.msra.mxu0 0
    %970 = vmatpush.bf16.msra.mxu0 0
    %971 = vmatpush.bf16.msra.mxu0 0
    %972 = vmatpush.bf16.msra.mxu0 %v957
    %973 = vmatpush.bf16.msra.mxu0 %v956
    %974 = vmatmul.bf16.gmra.mxu0 %v961
    %v975 = vpop.f32.mrf.mxu0
    %v976 = vadd.f32 %v947, %v975
    %v977 = vpop.f32.mrf.mxu0
    %v978 = vadd.f32 %v947, %v977
    %979 = vmatmul.bf16.gmra.mxu0 %v964
    %v980 = vpop.f32.mrf.mxu0
    %v981 = vadd.f32 %v947, %v980
    %v982 = vpop.f32.mrf.mxu0
    %v983 = vadd.f32 %v947, %v982
    %984 = vdwg.mxu0
    %v985 = vadd.f32 %v75, %v976
    %v986 = vadd.f32 %v77, %v978
    %v987 = vadd.f32 %v80, %v981
    %v988 = vadd.f32 %v82, %v983
    %v989 = vsel %vm179, %v985, 0.0
    %990 = vadd.xlane.f32.xlu0 %v989
    %v991 = vpop.xlane.xlu0 %990
    %v992 = vsel %vm179, %v986, 0.0
    %993 = vadd.xlane.f32.xlu0 %v992
    %v994 = vpop.xlane.xlu0 %993
    %v995 = vsel %vm179, %v987, 0.0
    %996 = vadd.xlane.f32.xlu0 %v995
    %v997 = vpop.xlane.xlu0 %996
    %v998 = vsel %vm179, %v988, 0.0
    %999 = vadd.xlane.f32.xlu0 %v998
    %v1000 = vpop.xlane.xlu0 %999
    %v1001 = vrcp.pop 32.0
    %v1002 = vmul.f32 32.0, %v1001
    %v1003 = vsub.f32 1.0, %v1002
    %v1004 = vmul.f32 %v1001, %v1003
    %v1005 = vadd.f32 %v1001, %v1004
    %vm1006 = vweird.f32 %v1001
    %v1007 = vsel %vm1006, %v1001, %v1005
    %v1008 = vmul.f32 %v991, %v1007
    %v1009 = vmul.f32 %v994, %v1007
    %v1010 = vmul.f32 %v997, %v1007
    %v1011 = vmul.f32 %v1000, %v1007
    %v1012 = vsub.f32 %v985, %v1008
    %v1013 = vsub.f32 %v986, %v1009
    %v1014 = vsub.f32 %v987, %v1010
    %v1015 = vsub.f32 %v988, %v1011
    %v1016 = vmul.f32 %v1012, %v1012
    %v1017 = vmul.f32 %v1013, %v1013
    %v1018 = vmul.f32 %v1014, %v1014
    %v1019 = vmul.f32 %v1015, %v1015
    %v1020 = vsel %vm179, %v1016, 0.0
    %1021 = vadd.xlane.f32.xlu0 %v1020
    %v1022 = vpop.xlane.xlu0 %1021
    %v1023 = vsel %vm179, %v1017, 0.0
    %1024 = vadd.xlane.f32.xlu0 %v1023
    %v1025 = vpop.xlane.xlu0 %1024
    %v1026 = vsel %vm179, %v1018, 0.0
    %1027 = vadd.xlane.f32.xlu0 %v1026
    %v1028 = vpop.xlane.xlu0 %1027
    %v1029 = vsel %vm179, %v1019, 0.0
    %1030 = vadd.xlane.f32.xlu0 %v1029
    %v1031 = vpop.xlane.xlu0 %1030
    %v1032 = vmul.f32 %v1022, %v1007
    %v1033 = vmul.f32 %v1025, %v1007
    %v1034 = vmul.f32 %v1028, %v1007
    %v1035 = vmul.f32 %v1031, %v1007
    %v1036 = vadd.f32 %v1032, 1e-05
    %v1037 = vadd.f32 %v1033, 1e-05
    %v1038 = vadd.f32 %v1034, 1e-05
    %v1039 = vadd.f32 %v1035, 1e-05
    %v1040 = vrsqrt.pop %v1036
    %v1041 = vmul.f32 %v1040, %v1036
    %v1042 = vmul.f32 %v1041, %v1040
    %v1043 = vmul.f32 0.5, %v1042
    %v1044 = vsub.f32 1.5, %v1043
    %v1045 = vmul.f32 %v1040, %v1044
    %vm1046 = vweird.f32 %v1036
    %vm1047 = vweird.f32 %v1040
    %vm1048 = vmor %vm1046, %vm1047
    %v1049 = vsel %vm1048, %v1040, %v1045
    %v1050 = vrsqrt.pop %v1037
    %v1051 = vmul.f32 %v1050, %v1037
    %v1052 = vmul.f32 %v1051, %v1050
    %v1053 = vmul.f32 0.5, %v1052
    %v1054 = vsub.f32 1.5, %v1053
    %v1055 = vmul.f32 %v1050, %v1054
    %vm1056 = vweird.f32 %v1037
    %vm1057 = vweird.f32 %v1050
    %vm1058 = vmor %vm1056, %vm1057
    %v1059 = vsel %vm1058, %v1050, %v1055
    %v1060 = vrsqrt.pop %v1038
    %v1061 = vmul.f32 %v1060, %v1038
    %v1062 = vmul.f32 %v1061, %v1060
    %v1063 = vmul.f32 0.5, %v1062
    %v1064 = vsub.f32 1.5, %v1063
    %v1065 = vmul.f32 %v1060, %v1064
    %vm1066 = vweird.f32 %v1038
    %vm1067 = vweird.f32 %v1060
    %vm1068 = vmor %vm1066, %vm1067
    %v1069 = vsel %vm1068, %v1060, %v1065
    %v1070 = vrsqrt.pop %v1039
    %v1071 = vmul.f32 %v1070, %v1039
    %v1072 = vmul.f32 %v1071, %v1070
    %v1073 = vmul.f32 0.5, %v1072
    %v1074 = vsub.f32 1.5, %v1073
    %v1075 = vmul.f32 %v1070, %v1074
    %vm1076 = vweird.f32 %v1039
    %vm1077 = vweird.f32 %v1070
    %vm1078 = vmor %vm1076, %vm1077
    %v1079 = vsel %vm1078, %v1070, %v1075
    %v1080 = vmul.f32 %v1012, %v1049
    %v1081 = vmul.f32 %v1013, %v1059
    %v1082 = vmul.f32 %v1014, %v1069
    %v1083 = vmul.f32 %v1015, %v1079
    %v1084 = vld [vmem:[%s11 + $0x9] sm:$0x1]
    %v1085 = vperm.slane %v1084, 0
    %v1086 = vmul.f32 %v1080, %v1085
    %v1087 = vmul.f32 %v1081, %v1085
    %v1088 = vmul.f32 %v1082, %v1085
    %v1089 = vmul.f32 %v1083, %v1085
    %v1090 = vld [vmem:[%s11 + $0xa] sm:$0x1]
    %v1091 = vperm.slane %v1090, 0
    %v1092 = vadd.f32 %v1086, %v1091
    %v1093 = vadd.f32 %v1087, %v1091
    %v1094 = vadd.f32 %v1088, %v1091
    %v1095 = vadd.f32 %v1089, %v1091
    %v1096 = vpack.c.bf16 %v1093, %v1092
    %v1097 = vpack.c.bf16 %v1095, %v1094
    %v1098 = vld [vmem:[%s6] sm:$0xf]
    %v1099 = vld [vmem:[%s6 + $0x4] sm:$0xf]
    %v1100 = vld [vmem:[%s6 + $0x8] sm:$0xf]
    %v1101 = vld [vmem:[%s6 + $0xc] sm:$0xf]
    %v1102 = vld [vmem:[%s11 + $0x19] sm:$0x1]
    %v1103 = vperm.slane %v1102, 0
    %v1108 = vunpack.c.l.b16 %v1098
    %v1109 = vunpack.c.l.b16 %v1099
    %v1110 = vunpack.c.l.b16 %v1100
    %v1111 = vunpack.c.l.b16 %v1101
    %v1112 = vpack.c.b16 %v1109, %v1108
    %v1113 = vpack.c.b16 %v1111, %v1110
    %v1117 = vsel %vm179, %v1096, 0
    %v1120 = vsel %vm179, %v1097, 0
    %1122 = vmatpush.bf16.msra.mxu0 0
    %1123 = vmatpush.bf16.msra.mxu0 0
    %1124 = vmatpush.bf16.msra.mxu0 0
    %1125 = vmatpush.bf16.msra.mxu0 0
    %1126 = vmatpush.bf16.msra.mxu0 0
    %1127 = vmatpush.bf16.msra.mxu0 0
    %1128 = vmatpush.bf16.msra.mxu0 %v1113
    %1129 = vmatpush.bf16.msra.mxu0 %v1112
    %1130 = vmatmul.bf16.gmra.mxu0 %v1117
    %v1131 = vpop.f32.mrf.mxu0
    %v1132 = vadd.f32 %v1103, %v1131
    %v1133 = vpop.f32.mrf.mxu0
    %v1134 = vadd.f32 %v1103, %v1133
    %1135 = vmatmul.bf16.gmra.mxu0 %v1120
    %v1136 = vpop.f32.mrf.mxu0
    %v1137 = vadd.f32 %v1103, %v1136
    %v1138 = vpop.f32.mrf.mxu0
    %v1139 = vadd.f32 %v1103, %v1138
    %1140 = vdwg.mxu0
    %v1141 = vmax.f32 %v1132, 0.0
    %v1142 = vmax.f32 %v1134, 0.0
    %v1143 = vmax.f32 %v1137, 0.0
    %v1144 = vmax.f32 %v1139, 0.0
    %v1145 = vpack.c.bf16 %v1142, %v1141
    %v1146 = vpack.c.bf16 %v1144, %v1143
    %v1147 = vld [vmem:[%s7] sm:$0xf]
    %v1148 = vld [vmem:[%s7 + $0x4] sm:$0xf]
    %v1149 = vld [vmem:[%s7 + $0x8] sm:$0xf]
    %v1150 = vld [vmem:[%s7 + $0xc] sm:$0xf]
    %v1151 = vld [vmem:[%s7 + $0x10] sm:$0xf]
    %v1152 = vld [vmem:[%s7 + $0x14] sm:$0xf]
    %v1153 = vld [vmem:[%s7 + $0x18] sm:$0xf]
    %v1154 = vld [vmem:[%s7 + $0x1c] sm:$0xf]
    %v1155 = vld [vmem:[%s11 + $0x1d] sm:$0x1]
    %v1156 = vperm.slane %v1155, 0
    %v1165 = vunpack.c.l.b16 %v1147
    %v1166 = vunpack.c.l.b16 %v1148
    %v1167 = vunpack.c.l.b16 %v1149
    %v1168 = vunpack.c.l.b16 %v1150
    %v1169 = vunpack.c.l.b16 %v1151
    %v1170 = vunpack.c.l.b16 %v1152
    %v1171 = vunpack.c.l.b16 %v1153
    %v1172 = vunpack.c.l.b16 %v1154
    %v1173 = vpack.c.b16 %v1166, %v1165
    %v1174 = vpack.c.b16 %v1168, %v1167
    %v1175 = vpack.c.b16 %v1170, %v1169
    %v1176 = vpack.c.b16 %v1172, %v1171
    %vm1181 = vcmask 523264
    %v1183 = vsel %vm1181, %v1145, 0
    %v1186 = vsel %vm1181, %v1146, 0
    %1188 = vmatpush.bf16.msra.mxu0 0
    %1189 = vmatpush.bf16.msra.mxu0 0
    %1190 = vmatpush.bf16.msra.mxu0 0
    %1191 = vmatpush.bf16.msra.mxu0 0
    %1192 = vmatpush.bf16.msra.mxu0 %v1176
    %1193 = vmatpush.bf16.msra.mxu0 %v1175
    %1194 = vmatpush.bf16.msra.mxu0 %v1174
    %1195 = vmatpush.bf16.msra.mxu0 %v1173
    %1196 = vmatmul.bf16.gmra.mxu0 %v1183
    %v1197 = vpop.f32.mrf.mxu0
    %v1198 = vadd.f32 %v1156, %v1197
    %v1199 = vpop.f32.mrf.mxu0
    %v1200 = vadd.f32 %v1156, %v1199
    %1201 = vmatmul.bf16.gmra.mxu0 %v1186
    %v1202 = vpop.f32.mrf.mxu0
    %v1203 = vadd.f32 %v1156, %v1202
    %v1204 = vpop.f32.mrf.mxu0
    %v1205 = vadd.f32 %v1156, %v1204
    %1206 = vdwg.mxu0
    %v1207 = vadd.f32 %v1092, %v1198
    %v1208 = vadd.f32 %v1093, %v1200
    %v1209 = vadd.f32 %v1094, %v1203
    %v1210 = vadd.f32 %v1095, %v1205
    %v1211 = vsel %vm179, %v1207, 0.0
    %1212 = vadd.xlane.f32.xlu0 %v1211
    %v1213 = vpop.xlane.xlu0 %1212
    %v1214 = vsel %vm179, %v1208, 0.0
    %1215 = vadd.xlane.f32.xlu0 %v1214
    %v1216 = vpop.xlane.xlu0 %1215
    %v1217 = vsel %vm179, %v1209, 0.0
    %1218 = vadd.xlane.f32.xlu0 %v1217
    %v1219 = vpop.xlane.xlu0 %1218
    %v1220 = vsel %vm179, %v1210, 0.0
    %1221 = vadd.xlane.f32.xlu0 %v1220
    %v1222 = vpop.xlane.xlu0 %1221
    %v1223 = vmul.f32 %v1213, %v1007
    %v1224 = vmul.f32 %v1216, %v1007
    %v1225 = vmul.f32 %v1219, %v1007
    %v1226 = vmul.f32 %v1222, %v1007
    %v1227 = vsub.f32 %v1207, %v1223
    %v1228 = vsub.f32 %v1208, %v1224
    %v1229 = vsub.f32 %v1209, %v1225
    %v1230 = vsub.f32 %v1210, %v1226
    %v1231 = vmul.f32 %v1227, %v1227
    %v1232 = vmul.f32 %v1228, %v1228
    %v1233 = vmul.f32 %v1229, %v1229
    %v1234 = vmul.f32 %v1230, %v1230
    %v1235 = vsel %vm179, %v1231, 0.0
    %1236 = vadd.xlane.f32.xlu0 %v1235
    %v1237 = vpop.xlane.xlu0 %1236
    %v1238 = vsel %vm179, %v1232, 0.0
    %1239 = vadd.xlane.f32.xlu0 %v1238
    %v1240 = vpop.xlane.xlu0 %1239
    %v1241 = vsel %vm179, %v1233, 0.0
    %1242 = vadd.xlane.f32.xlu0 %v1241
    %v1243 = vpop.xlane.xlu0 %1242
    %v1244 = vsel %vm179, %v1234, 0.0
    %1245 = vadd.xlane.f32.xlu0 %v1244
    %v1246 = vpop.xlane.xlu0 %1245
    %v1247 = vmul.f32 %v1237, %v1007
    %v1248 = vmul.f32 %v1240, %v1007
    %v1249 = vmul.f32 %v1243, %v1007
    %v1250 = vmul.f32 %v1246, %v1007
    %v1251 = vadd.f32 %v1247, 1e-05
    %v1252 = vadd.f32 %v1248, 1e-05
    %v1253 = vadd.f32 %v1249, 1e-05
    %v1254 = vadd.f32 %v1250, 1e-05
    %v1255 = vrsqrt.pop %v1251
    %v1256 = vmul.f32 %v1255, %v1251
    %v1257 = vmul.f32 %v1256, %v1255
    %v1258 = vmul.f32 0.5, %v1257
    %v1259 = vsub.f32 1.5, %v1258
    %v1260 = vmul.f32 %v1255, %v1259
    %vm1261 = vweird.f32 %v1251
    %vm1262 = vweird.f32 %v1255
    %vm1263 = vmor %vm1261, %vm1262
    %v1264 = vsel %vm1263, %v1255, %v1260
    %v1265 = vrsqrt.pop %v1252
    %v1266 = vmul.f32 %v1265, %v1252
    %v1267 = vmul.f32 %v1266, %v1265
    %v1268 = vmul.f32 0.5, %v1267
    %v1269 = vsub.f32 1.5, %v1268
    %v1270 = vmul.f32 %v1265, %v1269
    %vm1271 = vweird.f32 %v1252
    %vm1272 = vweird.f32 %v1265
    %vm1273 = vmor %vm1271, %vm1272
    %v1274 = vsel %vm1273, %v1265, %v1270
    %v1275 = vrsqrt.pop %v1253
    %v1276 = vmul.f32 %v1275, %v1253
    %v1277 = vmul.f32 %v1276, %v1275
    %v1278 = vmul.f32 0.5, %v1277
    %v1279 = vsub.f32 1.5, %v1278
    %v1280 = vmul.f32 %v1275, %v1279
    %vm1281 = vweird.f32 %v1253
    %vm1282 = vweird.f32 %v1275
    %vm1283 = vmor %vm1281, %vm1282
    %v1284 = vsel %vm1283, %v1275, %v1280
    %v1285 = vrsqrt.pop %v1254
    %v1286 = vmul.f32 %v1285, %v1254
    %v1287 = vmul.f32 %v1286, %v1285
    %v1288 = vmul.f32 0.5, %v1287
    %v1289 = vsub.f32 1.5, %v1288
    %v1290 = vmul.f32 %v1285, %v1289
    %vm1291 = vweird.f32 %v1254
    %vm1292 = vweird.f32 %v1285
    %vm1293 = vmor %vm1291, %vm1292
    %v1294 = vsel %vm1293, %v1285, %v1290
    %v1295 = vmul.f32 %v1227, %v1264
    %v1296 = vmul.f32 %v1228, %v1274
    %v1297 = vmul.f32 %v1229, %v1284
    %v1298 = vmul.f32 %v1230, %v1294
    %v1299 = vld [vmem:[%s11 + $0xb] sm:$0x1]
    %v1300 = vperm.slane %v1299, 0
    %v1301 = vmul.f32 %v1295, %v1300
    %v1302 = vmul.f32 %v1296, %v1300
    %v1303 = vmul.f32 %v1297, %v1300
    %v1304 = vmul.f32 %v1298, %v1300
    %v1305 = vld [vmem:[%s11 + $0xc] sm:$0x1]
    %v1306 = vperm.slane %v1305, 0
    %v1307 = vadd.f32 %v1301, %v1306
    %v1308 = vadd.f32 %v1302, %v1306
    %v1309 = vadd.f32 %v1303, %v1306
    %v1310 = vadd.f32 %v1304, %v1306
    %v1311 = vpack.c.bf16 %v1308, %v1307
    %v1312 = vpack.c.bf16 %v1310, %v1309
    %s1313 = scalar_lea.vmem %s4, 16
    %v1314 = vld [vmem:[%s1313] sm:$0xf]
    %v1315 = vld [vmem:[%s1313 + $0x4] sm:$0xf]
    %v1316 = vld [vmem:[%s1313 + $0x8] sm:$0xf]
    %v1317 = vld [vmem:[%s1313 + $0xc] sm:$0xf]
    %v1318 = vld [vmem:[%s11 + $0x2] sm:$0x1]
    %v1319 = vperm.slane %v1318, 0
    %v1324 = vunpack.c.l.b16 %v1314
    %v1325 = vunpack.c.l.b16 %v1315
    %v1326 = vunpack.c.l.b16 %v1316
    %v1327 = vunpack.c.l.b16 %v1317
    %v1328 = vpack.c.b16 %v1325, %v1324
    %v1329 = vpack.c.b16 %v1327, %v1326
    %v1333 = vsel %vm179, %v1311, 0
    %v1336 = vsel %vm179, %v1312, 0
    %1338 = vmatpush.bf16.msra.mxu0 0
    %1339 = vmatpush.bf16.msra.mxu0 0
    %1340 = vmatpush.bf16.msra.mxu0 0
    %1341 = vmatpush.bf16.msra.mxu0 0
    %1342 = vmatpush.bf16.msra.mxu0 0
    %1343 = vmatpush.bf16.msra.mxu0 0
    %1344 = vmatpush.bf16.msra.mxu0 %v1329
    %1345 = vmatpush.bf16.msra.mxu0 %v1328
    %1346 = vmatmul.bf16.gmra.mxu0 %v1333
    %v1347 = vpop.f32.mrf.mxu0
    %v1348 = vadd.f32 %v1319, %v1347
    %v1349 = vpop.f32.mrf.mxu0
    %v1350 = vadd.f32 %v1319, %v1349
    %1351 = vmatmul.bf16.gmra.mxu0 %v1336
    %v1352 = vpop.f32.mrf.mxu0
    %v1353 = vadd.f32 %v1319, %v1352
    %v1354 = vpop.f32.mrf.mxu0
    %v1355 = vadd.f32 %v1319, %v1354
    %1356 = vdwg.mxu0
    %v1357 = vpack.c.bf16 %v1350, %v1348
    %v1358 = vpack.c.bf16 %v1355, %v1353
    %1361 = vrot.lane.b32.xlu0 %v1357, 96
    %v1362 = vpop.permute.xlu0 %1361
    %1363 = vrot.lane.b32.xlu0 %v1358, 96
    %v1364 = vpop.permute.xlu0 %1363
    %v1366 = vsel %vm213, %v1357, 0
    %v1369 = vsel %vm213, %v1358, 0
    %v1372 = vsel %vm213, %v1362, 0
    %v1375 = vsel %vm213, %v1364, 0
    %1377 = vmatpush.bf16.xpose.msra.mxu0 0
    %1378 = vmatpush.bf16.xpose.msra.mxu0 0
    %1379 = vmatpush.bf16.xpose.msra.mxu0 0
    %1380 = vmatpush.bf16.xpose.msra.mxu0 0
    %1381 = vmatpush.bf16.xpose.msra.mxu0 0
    %1382 = vmatpush.bf16.xpose.msra.mxu0 0
    %1383 = vmatpush.bf16.xpose.msra.mxu0 %v1375
    %1384 = vmatpush.bf16.xpose.msra.mxu0 %v1372
    %1385 = vmatmul.bf16.gmra.mxu0 %v1366
    %v1386 = vpop.f32.mrf.mxu0
    %v1387 = vadd.f32 %v155, %v1386
    %v1388 = vpop.f32.mrf.mxu0
    %v1389 = vadd.f32 %v156, %v1388
    %1390 = vmatmul.bf16.gmra.mxu0 %v1369
    %v1391 = vpop.f32.mrf.mxu0
    %v1392 = vadd.f32 %v157, %v1391
    %v1393 = vpop.f32.mrf.mxu0
    %v1394 = vadd.f32 %v158, %v1393
    %1395 = vdwg.mxu0
    %v1396 = vsel %vm179, %v1387, -inf
    %1397 = vmax.xlane.f32.xlu0 %v1396
    %v1398 = vpop.xlane.xlu0 %1397
    %v1399 = vsel %vm179, %v1389, -inf
    %1400 = vmax.xlane.f32.xlu0 %v1399
    %v1401 = vpop.xlane.xlu0 %1400
    %v1402 = vsel %vm179, %v1392, -inf
    %1403 = vmax.xlane.f32.xlu0 %v1402
    %v1404 = vpop.xlane.xlu0 %1403
    %v1405 = vsel %vm179, %v1394, -inf
    %1406 = vmax.xlane.f32.xlu0 %v1405
    %v1407 = vpop.xlane.xlu0 %1406
    %v1408 = vsub.f32 %v1387, %v1398
    %v1409 = vsub.f32 %v1389, %v1401
    %v1410 = vsub.f32 %v1392, %v1404
    %v1411 = vsub.f32 %v1394, %v1407
    %v1412 = vmul.f32 %v1408, 1.442695
    %v1413 = vpow.pop %v1412
    %v1414 = vmul.f32 %v1409, 1.442695
    %v1415 = vpow.pop %v1414
    %v1416 = vmul.f32 %v1410, 1.442695
    %v1417 = vpow.pop %v1416
    %v1418 = vmul.f32 %v1411, 1.442695
    %v1419 = vpow.pop %v1418
    %v1420 = vsel %vm179, %v1413, 0.0
    %1421 = vadd.xlane.f32.xlu0 %v1420
    %v1422 = vpop.xlane.xlu0 %1421
    %v1423 = vsel %vm179, %v1415, 0.0
    %1424 = vadd.xlane.f32.xlu0 %v1423
    %v1425 = vpop.xlane.xlu0 %1424
    %v1426 = vsel %vm179, %v1417, 0.0
    %1427 = vadd.xlane.f32.xlu0 %v1426
    %v1428 = vpop.xlane.xlu0 %1427
    %v1429 = vsel %vm179, %v1419, 0.0
    %1430 = vadd.xlane.f32.xlu0 %v1429
    %v1431 = vpop.xlane.xlu0 %1430
    %v1432 = vrcp.pop %v1422
    %v1433 = vmul.f32 %v1422, %v1432
    %v1434 = vsub.f32 1.0, %v1433
    %v1435 = vmul.f32 %v1432, %v1434
    %v1436 = vadd.f32 %v1432, %v1435
    %vm1437 = vweird.f32 %v1422
    %vm1438 = vweird.f32 %v1432
    %vm1439 = vmor %vm1437, %vm1438
    %v1440 = vsel %vm1439, %v1432, %v1436
    %v1441 = vand.u32 2147483647, %v1422
    %vm1442 = vcmp.eq.f32.partialorder %v1441, 8.507059e+37
    %v1443 = vand.u32 %v1422, 2147483648
    %v1444 = vor.u32 1.1754944e-38, %v1443
    %v1445 = vsel %vm1442, %v1444, %v1440
    %v1446 = vmul.f32 %v1413, %v1445
    %v1447 = vrcp.pop %v1425
    %v1448 = vmul.f32 %v1425, %v1447
    %v1449 = vsub.f32 1.0, %v1448
    %v1450 = vmul.f32 %v1447, %v1449
    %v1451 = vadd.f32 %v1447, %v1450
    %vm1452 = vweird.f32 %v1425
    %vm1453 = vweird.f32 %v1447
    %vm1454 = vmor %vm1452, %vm1453
    %v1455 = vsel %vm1454, %v1447, %v1451
    %v1456 = vand.u32 2147483647, %v1425
    %vm1457 = vcmp.eq.f32.partialorder %v1456, 8.507059e+37
    %v1458 = vand.u32 %v1425, 2147483648
    %v1459 = vor.u32 1.1754944e-38, %v1458
    %v1460 = vsel %vm1457, %v1459, %v1455
    %v1461 = vmul.f32 %v1415, %v1460
    %v1462 = vrcp.pop %v1428
    %v1463 = vmul.f32 %v1428, %v1462
    %v1464 = vsub.f32 1.0, %v1463
    %v1465 = vmul.f32 %v1462, %v1464
    %v1466 = vadd.f32 %v1462, %v1465
    %vm1467 = vweird.f32 %v1428
    %vm1468 = vweird.f32 %v1462
    %vm1469 = vmor %vm1467, %vm1468
    %v1470 = vsel %vm1469, %v1462, %v1466
    %v1471 = vand.u32 2147483647, %v1428
    %vm1472 = vcmp.eq.f32.partialorder %v1471, 8.507059e+37
    %v1473 = vand.u32 %v1428, 2147483648
    %v1474 = vor.u32 1.1754944e-38, %v1473
    %v1475 = vsel %vm1472, %v1474, %v1470
    %v1476 = vmul.f32 %v1417, %v1475
    %v1477 = vrcp.pop %v1431
    %v1478 = vmul.f32 %v1431, %v1477
    %v1479 = vsub.f32 1.0, %v1478
    %v1480 = vmul.f32 %v1477, %v1479
    %v1481 = vadd.f32 %v1477, %v1480
    %vm1482 = vweird.f32 %v1431
    %vm1483 = vweird.f32 %v1477
    %vm1484 = vmor %vm1482, %vm1483
    %v1485 = vsel %vm1484, %v1477, %v1481
    %v1486 = vand.u32 2147483647, %v1431
    %vm1487 = vcmp.eq.f32.partialorder %v1486, 8.507059e+37
    %v1488 = vand.u32 %v1431, 2147483648
    %v1489 = vor.u32 1.1754944e-38, %v1488
    %v1490 = vsel %vm1487, %v1489, %v1485
    %v1491 = vmul.f32 %v1419, %v1490
    %v1492 = vpack.c.bf16 %v1461, %v1446
    %v1493 = vpack.c.bf16 %v1491, %v1476
    %1494 = vrot.lane.b32.xlu0 %v1357, 64
    %v1495 = vpop.permute.xlu0 %1494
    %1496 = vrot.lane.b32.xlu0 %v1358, 64
    %v1497 = vpop.permute.xlu0 %1496
    %v1501 = vsel %vm179, %v1492, 0
    %v1504 = vsel %vm179, %v1493, 0
    %1506 = vmatpush.bf16.msra.mxu0 0
    %1507 = vmatpush.bf16.msra.mxu0 0
    %1508 = vmatpush.bf16.msra.mxu0 0
    %1509 = vmatpush.bf16.msra.mxu0 0
    %1510 = vmatpush.bf16.msra.mxu0 0
    %1511 = vmatpush.bf16.msra.mxu0 0
    %1512 = vmatpush.bf16.msra.mxu0 %v1497
    %1513 = vmatpush.bf16.msra.mxu0 %v1495
    %1514 = vmatmul.bf16.gmra.mxu0 %v1501
    %v1515 = vpop.f32.mrf.mxu0
    %v1516 = vadd.f32 0.0, %v1515
    %v1517 = vpop.f32.mrf.mxu0
    %v1518 = vadd.f32 0.0, %v1517
    %1519 = vmatmul.bf16.gmra.mxu0 %v1504
    %v1520 = vpop.f32.mrf.mxu0
    %v1521 = vadd.f32 0.0, %v1520
    %v1522 = vpop.f32.mrf.mxu0
    %v1523 = vadd.f32 0.0, %v1522
    %1524 = vdwg.mxu0
    %1525 = vrot.lane.b32.xlu0 %v1357, 120
    %v1526 = vpop.permute.xlu0 %1525
    %1527 = vrot.lane.b32.xlu0 %v1358, 120
    %v1528 = vpop.permute.xlu0 %1527
    %1529 = vrot.lane.b32.xlu0 %v1357, 88
    %v1530 = vpop.permute.xlu0 %1529
    %1531 = vrot.lane.b32.xlu0 %v1358, 88
    %v1532 = vpop.permute.xlu0 %1531
    %v1534 = vsel %vm213, %v1526, 0
    %v1537 = vsel %vm213, %v1528, 0
    %v1540 = vsel %vm213, %v1530, 0
    %v1543 = vsel %vm213, %v1532, 0
    %1545 = vmatpush.bf16.xpose.msra.mxu0 0
    %1546 = vmatpush.bf16.xpose.msra.mxu0 0
    %1547 = vmatpush.bf16.xpose.msra.mxu0 0
    %1548 = vmatpush.bf16.xpose.msra.mxu0 0
    %1549 = vmatpush.bf16.xpose.msra.mxu0 0
    %1550 = vmatpush.bf16.xpose.msra.mxu0 0
    %1551 = vmatpush.bf16.xpose.msra.mxu0 %v1543
    %1552 = vmatpush.bf16.xpose.msra.mxu0 %v1540
    %1553 = vmatmul.bf16.gmra.mxu0 %v1534
    %v1554 = vpop.f32.mrf.mxu0
    %v1555 = vadd.f32 %v155, %v1554
    %v1556 = vpop.f32.mrf.mxu0
    %v1557 = vadd.f32 %v156, %v1556
    %1558 = vmatmul.bf16.gmra.mxu0 %v1537
    %v1559 = vpop.f32.mrf.mxu0
    %v1560 = vadd.f32 %v157, %v1559
    %v1561 = vpop.f32.mrf.mxu0
    %v1562 = vadd.f32 %v158, %v1561
    %1563 = vdwg.mxu0
    %v1564 = vsel %vm179, %v1555, -inf
    %1565 = vmax.xlane.f32.xlu0 %v1564
    %v1566 = vpop.xlane.xlu0 %1565
    %v1567 = vsel %vm179, %v1557, -inf
    %1568 = vmax.xlane.f32.xlu0 %v1567
    %v1569 = vpop.xlane.xlu0 %1568
    %v1570 = vsel %vm179, %v1560, -inf
    %1571 = vmax.xlane.f32.xlu0 %v1570
    %v1572 = vpop.xlane.xlu0 %1571
    %v1573 = vsel %vm179, %v1562, -inf
    %1574 = vmax.xlane.f32.xlu0 %v1573
    %v1575 = vpop.xlane.xlu0 %1574
    %v1576 = vsub.f32 %v1555, %v1566
    %v1577 = vsub.f32 %v1557, %v1569
    %v1578 = vsub.f32 %v1560, %v1572
    %v1579 = vsub.f32 %v1562, %v1575
    %v1580 = vmul.f32 %v1576, 1.442695
    %v1581 = vpow.pop %v1580
    %v1582 = vmul.f32 %v1577, 1.442695
    %v1583 = vpow.pop %v1582
    %v1584 = vmul.f32 %v1578, 1.442695
    %v1585 = vpow.pop %v1584
    %v1586 = vmul.f32 %v1579, 1.442695
    %v1587 = vpow.pop %v1586
    %v1588 = vsel %vm179, %v1581, 0.0
    %1589 = vadd.xlane.f32.xlu0 %v1588
    %v1590 = vpop.xlane.xlu0 %1589
    %v1591 = vsel %vm179, %v1583, 0.0
    %1592 = vadd.xlane.f32.xlu0 %v1591
    %v1593 = vpop.xlane.xlu0 %1592
    %v1594 = vsel %vm179, %v1585, 0.0
    %1595 = vadd.xlane.f32.xlu0 %v1594
    %v1596 = vpop.xlane.xlu0 %1595
    %v1597 = vsel %vm179, %v1587, 0.0
    %1598 = vadd.xlane.f32.xlu0 %v1597
    %v1599 = vpop.xlane.xlu0 %1598
    %v1600 = vrcp.pop %v1590
    %v1601 = vmul.f32 %v1590, %v1600
    %v1602 = vsub.f32 1.0, %v1601
    %v1603 = vmul.f32 %v1600, %v1602
    %v1604 = vadd.f32 %v1600, %v1603
    %vm1605 = vweird.f32 %v1590
    %vm1606 = vweird.f32 %v1600
    %vm1607 = vmor %vm1605, %vm1606
    %v1608 = vsel %vm1607, %v1600, %v1604
    %v1609 = vand.u32 2147483647, %v1590
    %vm1610 = vcmp.eq.f32.partialorder %v1609, 8.507059e+37
    %v1611 = vand.u32 %v1590, 2147483648
    %v1612 = vor.u32 1.1754944e-38, %v1611
    %v1613 = vsel %vm1610, %v1612, %v1608
    %v1614 = vmul.f32 %v1581, %v1613
    %v1615 = vrcp.pop %v1593
    %v1616 = vmul.f32 %v1593, %v1615
    %v1617 = vsub.f32 1.0, %v1616
    %v1618 = vmul.f32 %v1615, %v1617
    %v1619 = vadd.f32 %v1615, %v1618
    %vm1620 = vweird.f32 %v1593
    %vm1621 = vweird.f32 %v1615
    %vm1622 = vmor %vm1620, %vm1621
    %v1623 = vsel %vm1622, %v1615, %v1619
    %v1624 = vand.u32 2147483647, %v1593
    %vm1625 = vcmp.eq.f32.partialorder %v1624, 8.507059e+37
    %v1626 = vand.u32 %v1593, 2147483648
    %v1627 = vor.u32 1.1754944e-38, %v1626
    %v1628 = vsel %vm1625, %v1627, %v1623
    %v1629 = vmul.f32 %v1583, %v1628
    %v1630 = vrcp.pop %v1596
    %v1631 = vmul.f32 %v1596, %v1630
    %v1632 = vsub.f32 1.0, %v1631
    %v1633 = vmul.f32 %v1630, %v1632
    %v1634 = vadd.f32 %v1630, %v1633
    %vm1635 = vweird.f32 %v1596
    %vm1636 = vweird.f32 %v1630
    %vm1637 = vmor %vm1635, %vm1636
    %v1638 = vsel %vm1637, %v1630, %v1634
    %v1639 = vand.u32 2147483647, %v1596
    %vm1640 = vcmp.eq.f32.partialorder %v1639, 8.507059e+37
    %v1641 = vand.u32 %v1596, 2147483648
    %v1642 = vor.u32 1.1754944e-38, %v1641
    %v1643 = vsel %vm1640, %v1642, %v1638
    %v1644 = vmul.f32 %v1585, %v1643
    %v1645 = vrcp.pop %v1599
    %v1646 = vmul.f32 %v1599, %v1645
    %v1647 = vsub.f32 1.0, %v1646
    %v1648 = vmul.f32 %v1645, %v1647
    %v1649 = vadd.f32 %v1645, %v1648
    %vm1650 = vweird.f32 %v1599
    %vm1651 = vweird.f32 %v1645
    %vm1652 = vmor %vm1650, %vm1651
    %v1653 = vsel %vm1652, %v1645, %v1649
    %v1654 = vand.u32 2147483647, %v1599
    %vm1655 = vcmp.eq.f32.partialorder %v1654, 8.507059e+37
    %v1656 = vand.u32 %v1599, 2147483648
    %v1657 = vor.u32 1.1754944e-38, %v1656
    %v1658 = vsel %vm1655, %v1657, %v1653
    %v1659 = vmul.f32 %v1587, %v1658
    %v1660 = vpack.c.bf16 %v1629, %v1614
    %v1661 = vpack.c.bf16 %v1659, %v1644
    %1662 = vrot.lane.b32.xlu0 %v1357, 56
    %v1663 = vpop.permute.xlu0 %1662
    %1664 = vrot.lane.b32.xlu0 %v1358, 56
    %v1665 = vpop.permute.xlu0 %1664
    %v1669 = vsel %vm179, %v1660, 0
    %v1672 = vsel %vm179, %v1661, 0
    %1674 = vmatpush.bf16.msra.mxu0 0
    %1675 = vmatpush.bf16.msra.mxu0 0
    %1676 = vmatpush.bf16.msra.mxu0 0
    %1677 = vmatpush.bf16.msra.mxu0 0
    %1678 = vmatpush.bf16.msra.mxu0 0
    %1679 = vmatpush.bf16.msra.mxu0 0
    %1680 = vmatpush.bf16.msra.mxu0 %v1665
    %1681 = vmatpush.bf16.msra.mxu0 %v1663
    %1682 = vmatmul.bf16.gmra.mxu0 %v1669
    %v1683 = vpop.f32.mrf.mxu0
    %v1684 = vadd.f32 0.0, %v1683
    %v1685 = vpop.f32.mrf.mxu0
    %v1686 = vadd.f32 0.0, %v1685
    %1687 = vmatmul.bf16.gmra.mxu0 %v1672
    %v1688 = vpop.f32.mrf.mxu0
    %v1689 = vadd.f32 0.0, %v1688
    %v1690 = vpop.f32.mrf.mxu0
    %v1691 = vadd.f32 0.0, %v1690
    %1692 = vdwg.mxu0
    %1693 = vrot.lane.b32.xlu0 %v1357, 112
    %v1694 = vpop.permute.xlu0 %1693
    %1695 = vrot.lane.b32.xlu0 %v1358, 112
    %v1696 = vpop.permute.xlu0 %1695
    %1697 = vrot.lane.b32.xlu0 %v1357, 80
    %v1698 = vpop.permute.xlu0 %1697
    %1699 = vrot.lane.b32.xlu0 %v1358, 80
    %v1700 = vpop.permute.xlu0 %1699
    %v1702 = vsel %vm213, %v1694, 0
    %v1705 = vsel %vm213, %v1696, 0
    %v1708 = vsel %vm213, %v1698, 0
    %v1711 = vsel %vm213, %v1700, 0
    %1713 = vmatpush.bf16.xpose.msra.mxu0 0
    %1714 = vmatpush.bf16.xpose.msra.mxu0 0
    %1715 = vmatpush.bf16.xpose.msra.mxu0 0
    %1716 = vmatpush.bf16.xpose.msra.mxu0 0
    %1717 = vmatpush.bf16.xpose.msra.mxu0 0
    %1718 = vmatpush.bf16.xpose.msra.mxu0 0
    %1719 = vmatpush.bf16.xpose.msra.mxu0 %v1711
    %1720 = vmatpush.bf16.xpose.msra.mxu0 %v1708
    %1721 = vmatmul.bf16.gmra.mxu0 %v1702
    %v1722 = vpop.f32.mrf.mxu0
    %v1723 = vadd.f32 %v155, %v1722
    %v1724 = vpop.f32.mrf.mxu0
    %v1725 = vadd.f32 %v156, %v1724
    %1726 = vmatmul.bf16.gmra.mxu0 %v1705
    %v1727 = vpop.f32.mrf.mxu0
    %v1728 = vadd.f32 %v157, %v1727
    %v1729 = vpop.f32.mrf.mxu0
    %v1730 = vadd.f32 %v158, %v1729
    %1731 = vdwg.mxu0
    %v1732 = vsel %vm179, %v1723, -inf
    %1733 = vmax.xlane.f32.xlu0 %v1732
    %v1734 = vpop.xlane.xlu0 %1733
    %v1735 = vsel %vm179, %v1725, -inf
    %1736 = vmax.xlane.f32.xlu0 %v1735
    %v1737 = vpop.xlane.xlu0 %1736
    %v1738 = vsel %vm179, %v1728, -inf
    %1739 = vmax.xlane.f32.xlu0 %v1738
    %v1740 = vpop.xlane.xlu0 %1739
    %v1741 = vsel %vm179, %v1730, -inf
    %1742 = vmax.xlane.f32.xlu0 %v1741
    %v1743 = vpop.xlane.xlu0 %1742
    %v1744 = vsub.f32 %v1723, %v1734
    %v1745 = vsub.f32 %v1725, %v1737
    %v1746 = vsub.f32 %v1728, %v1740
    %v1747 = vsub.f32 %v1730, %v1743
    %v1748 = vmul.f32 %v1744, 1.442695
    %v1749 = vpow.pop %v1748
    %v1750 = vmul.f32 %v1745, 1.442695
    %v1751 = vpow.pop %v1750
    %v1752 = vmul.f32 %v1746, 1.442695
    %v1753 = vpow.pop %v1752
    %v1754 = vmul.f32 %v1747, 1.442695
    %v1755 = vpow.pop %v1754
    %v1756 = vsel %vm179, %v1749, 0.0
    %1757 = vadd.xlane.f32.xlu0 %v1756
    %v1758 = vpop.xlane.xlu0 %1757
    %v1759 = vsel %vm179, %v1751, 0.0
    %1760 = vadd.xlane.f32.xlu0 %v1759
    %v1761 = vpop.xlane.xlu0 %1760
    %v1762 = vsel %vm179, %v1753, 0.0
    %1763 = vadd.xlane.f32.xlu0 %v1762
    %v1764 = vpop.xlane.xlu0 %1763
    %v1765 = vsel %vm179, %v1755, 0.0
    %1766 = vadd.xlane.f32.xlu0 %v1765
    %v1767 = vpop.xlane.xlu0 %1766
    %v1768 = vrcp.pop %v1758
    %v1769 = vmul.f32 %v1758, %v1768
    %v1770 = vsub.f32 1.0, %v1769
    %v1771 = vmul.f32 %v1768, %v1770
    %v1772 = vadd.f32 %v1768, %v1771
    %vm1773 = vweird.f32 %v1758
    %vm1774 = vweird.f32 %v1768
    %vm1775 = vmor %vm1773, %vm1774
    %v1776 = vsel %vm1775, %v1768, %v1772
    %v1777 = vand.u32 2147483647, %v1758
    %vm1778 = vcmp.eq.f32.partialorder %v1777, 8.507059e+37
    %v1779 = vand.u32 %v1758, 2147483648
    %v1780 = vor.u32 1.1754944e-38, %v1779
    %v1781 = vsel %vm1778, %v1780, %v1776
    %v1782 = vmul.f32 %v1749, %v1781
    %v1783 = vrcp.pop %v1761
    %v1784 = vmul.f32 %v1761, %v1783
    %v1785 = vsub.f32 1.0, %v1784
    %v1786 = vmul.f32 %v1783, %v1785
    %v1787 = vadd.f32 %v1783, %v1786
    %vm1788 = vweird.f32 %v1761
    %vm1789 = vweird.f32 %v1783
    %vm1790 = vmor %vm1788, %vm1789
    %v1791 = vsel %vm1790, %v1783, %v1787
    %v1792 = vand.u32 2147483647, %v1761
    %vm1793 = vcmp.eq.f32.partialorder %v1792, 8.507059e+37
    %v1794 = vand.u32 %v1761, 2147483648
    %v1795 = vor.u32 1.1754944e-38, %v1794
    %v1796 = vsel %vm1793, %v1795, %v1791
    %v1797 = vmul.f32 %v1751, %v1796
    %v1798 = vrcp.pop %v1764
    %v1799 = vmul.f32 %v1764, %v1798
    %v1800 = vsub.f32 1.0, %v1799
    %v1801 = vmul.f32 %v1798, %v1800
    %v1802 = vadd.f32 %v1798, %v1801
    %vm1803 = vweird.f32 %v1764
    %vm1804 = vweird.f32 %v1798
    %vm1805 = vmor %vm1803, %vm1804
    %v1806 = vsel %vm1805, %v1798, %v1802
    %v1807 = vand.u32 2147483647, %v1764
    %vm1808 = vcmp.eq.f32.partialorder %v1807, 8.507059e+37
    %v1809 = vand.u32 %v1764, 2147483648
    %v1810 = vor.u32 1.1754944e-38, %v1809
    %v1811 = vsel %vm1808, %v1810, %v1806
    %v1812 = vmul.f32 %v1753, %v1811
    %v1813 = vrcp.pop %v1767
    %v1814 = vmul.f32 %v1767, %v1813
    %v1815 = vsub.f32 1.0, %v1814
    %v1816 = vmul.f32 %v1813, %v1815
    %v1817 = vadd.f32 %v1813, %v1816
    %vm1818 = vweird.f32 %v1767
    %vm1819 = vweird.f32 %v1813
    %vm1820 = vmor %vm1818, %vm1819
    %v1821 = vsel %vm1820, %v1813, %v1817
    %v1822 = vand.u32 2147483647, %v1767
    %vm1823 = vcmp.eq.f32.partialorder %v1822, 8.507059e+37
    %v1824 = vand.u32 %v1767, 2147483648
    %v1825 = vor.u32 1.1754944e-38, %v1824
    %v1826 = vsel %vm1823, %v1825, %v1821
    %v1827 = vmul.f32 %v1755, %v1826
    %v1828 = vpack.c.bf16 %v1797, %v1782
    %v1829 = vpack.c.bf16 %v1827, %v1812
    %1830 = vrot.lane.b32.xlu0 %v1357, 48
    %v1831 = vpop.permute.xlu0 %1830
    %1832 = vrot.lane.b32.xlu0 %v1358, 48
    %v1833 = vpop.permute.xlu0 %1832
    %v1837 = vsel %vm179, %v1828, 0
    %v1840 = vsel %vm179, %v1829, 0
    %1842 = vmatpush.bf16.msra.mxu0 0
    %1843 = vmatpush.bf16.msra.mxu0 0
    %1844 = vmatpush.bf16.msra.mxu0 0
    %1845 = vmatpush.bf16.msra.mxu0 0
    %1846 = vmatpush.bf16.msra.mxu0 0
    %1847 = vmatpush.bf16.msra.mxu0 0
    %1848 = vmatpush.bf16.msra.mxu0 %v1833
    %1849 = vmatpush.bf16.msra.mxu0 %v1831
    %1850 = vmatmul.bf16.gmra.mxu0 %v1837
    %v1851 = vpop.f32.mrf.mxu0
    %v1852 = vadd.f32 0.0, %v1851
    %v1853 = vpop.f32.mrf.mxu0
    %v1854 = vadd.f32 0.0, %v1853
    %1855 = vmatmul.bf16.gmra.mxu0 %v1840
    %v1856 = vpop.f32.mrf.mxu0
    %v1857 = vadd.f32 0.0, %v1856
    %v1858 = vpop.f32.mrf.mxu0
    %v1859 = vadd.f32 0.0, %v1858
    %1860 = vdwg.mxu0
    %1861 = vrot.lane.b32.xlu0 %v1357, 104
    %v1862 = vpop.permute.xlu0 %1861
    %1863 = vrot.lane.b32.xlu0 %v1358, 104
    %v1864 = vpop.permute.xlu0 %1863
    %1865 = vrot.lane.b32.xlu0 %v1357, 72
    %v1866 = vpop.permute.xlu0 %1865
    %1867 = vrot.lane.b32.xlu0 %v1358, 72
    %v1868 = vpop.permute.xlu0 %1867
    %v1870 = vsel %vm213, %v1862, 0
    %v1873 = vsel %vm213, %v1864, 0
    %v1876 = vsel %vm213, %v1866, 0
    %v1879 = vsel %vm213, %v1868, 0
    %1881 = vmatpush.bf16.xpose.msra.mxu0 0
    %1882 = vmatpush.bf16.xpose.msra.mxu0 0
    %1883 = vmatpush.bf16.xpose.msra.mxu0 0
    %1884 = vmatpush.bf16.xpose.msra.mxu0 0
    %1885 = vmatpush.bf16.xpose.msra.mxu0 0
    %1886 = vmatpush.bf16.xpose.msra.mxu0 0
    %1887 = vmatpush.bf16.xpose.msra.mxu0 %v1879
    %1888 = vmatpush.bf16.xpose.msra.mxu0 %v1876
    %1889 = vmatmul.bf16.gmra.mxu0 %v1870
    %v1890 = vpop.f32.mrf.mxu0
    %v1891 = vadd.f32 %v155, %v1890
    %v1892 = vpop.f32.mrf.mxu0
    %v1893 = vadd.f32 %v156, %v1892
    %1894 = vmatmul.bf16.gmra.mxu0 %v1873
    %v1895 = vpop.f32.mrf.mxu0
    %v1896 = vadd.f32 %v157, %v1895
    %v1897 = vpop.f32.mrf.mxu0
    %v1898 = vadd.f32 %v158, %v1897
    %1899 = vdwg.mxu0
    %v1900 = vsel %vm179, %v1891, -inf
    %1901 = vmax.xlane.f32.xlu0 %v1900
    %v1902 = vpop.xlane.xlu0 %1901
    %v1903 = vsel %vm179, %v1893, -inf
    %1904 = vmax.xlane.f32.xlu0 %v1903
    %v1905 = vpop.xlane.xlu0 %1904
    %v1906 = vsel %vm179, %v1896, -inf
    %1907 = vmax.xlane.f32.xlu0 %v1906
    %v1908 = vpop.xlane.xlu0 %1907
    %v1909 = vsel %vm179, %v1898, -inf
    %1910 = vmax.xlane.f32.xlu0 %v1909
    %v1911 = vpop.xlane.xlu0 %1910
    %v1912 = vsub.f32 %v1891, %v1902
    %v1913 = vsub.f32 %v1893, %v1905
    %v1914 = vsub.f32 %v1896, %v1908
    %v1915 = vsub.f32 %v1898, %v1911
    %v1916 = vmul.f32 %v1912, 1.442695
    %v1917 = vpow.pop %v1916
    %v1918 = vmul.f32 %v1913, 1.442695
    %v1919 = vpow.pop %v1918
    %v1920 = vmul.f32 %v1914, 1.442695
    %v1921 = vpow.pop %v1920
    %v1922 = vmul.f32 %v1915, 1.442695
    %v1923 = vpow.pop %v1922
    %v1924 = vsel %vm179, %v1917, 0.0
    %1925 = vadd.xlane.f32.xlu0 %v1924
    %v1926 = vpop.xlane.xlu0 %1925
    %v1927 = vsel %vm179, %v1919, 0.0
    %1928 = vadd.xlane.f32.xlu0 %v1927
    %v1929 = vpop.xlane.xlu0 %1928
    %v1930 = vsel %vm179, %v1921, 0.0
    %1931 = vadd.xlane.f32.xlu0 %v1930
    %v1932 = vpop.xlane.xlu0 %1931
    %v1933 = vsel %vm179, %v1923, 0.0
    %1934 = vadd.xlane.f32.xlu0 %v1933
    %v1935 = vpop.xlane.xlu0 %1934
    %v1936 = vrcp.pop %v1926
    %v1937 = vmul.f32 %v1926, %v1936
    %v1938 = vsub.f32 1.0, %v1937
    %v1939 = vmul.f32 %v1936, %v1938
    %v1940 = vadd.f32 %v1936, %v1939
    %vm1941 = vweird.f32 %v1926
    %vm1942 = vweird.f32 %v1936
    %vm1943 = vmor %vm1941, %vm1942
    %v1944 = vsel %vm1943, %v1936, %v1940
    %v1945 = vand.u32 2147483647, %v1926
    %vm1946 = vcmp.eq.f32.partialorder %v1945, 8.507059e+37
    %v1947 = vand.u32 %v1926, 2147483648
    %v1948 = vor.u32 1.1754944e-38, %v1947
    %v1949 = vsel %vm1946, %v1948, %v1944
    %v1950 = vmul.f32 %v1917, %v1949
    %v1951 = vrcp.pop %v1929
    %v1952 = vmul.f32 %v1929, %v1951
    %v1953 = vsub.f32 1.0, %v1952
    %v1954 = vmul.f32 %v1951, %v1953
    %v1955 = vadd.f32 %v1951, %v1954
    %vm1956 = vweird.f32 %v1929
    %vm1957 = vweird.f32 %v1951
    %vm1958 = vmor %vm1956, %vm1957
    %v1959 = vsel %vm1958, %v1951, %v1955
    %v1960 = vand.u32 2147483647, %v1929
    %vm1961 = vcmp.eq.f32.partialorder %v1960, 8.507059e+37
    %v1962 = vand.u32 %v1929, 2147483648
    %v1963 = vor.u32 1.1754944e-38, %v1962
    %v1964 = vsel %vm1961, %v1963, %v1959
    %v1965 = vmul.f32 %v1919, %v1964
    %v1966 = vrcp.pop %v1932
    %v1967 = vmul.f32 %v1932, %v1966
    %v1968 = vsub.f32 1.0, %v1967
    %v1969 = vmul.f32 %v1966, %v1968
    %v1970 = vadd.f32 %v1966, %v1969
    %vm1971 = vweird.f32 %v1932
    %vm1972 = vweird.f32 %v1966
    %vm1973 = vmor %vm1971, %vm1972
    %v1974 = vsel %vm1973, %v1966, %v1970
    %v1975 = vand.u32 2147483647, %v1932
    %vm1976 = vcmp.eq.f32.partialorder %v1975, 8.507059e+37
    %v1977 = vand.u32 %v1932, 2147483648
    %v1978 = vor.u32 1.1754944e-38, %v1977
    %v1979 = vsel %vm1976, %v1978, %v1974
    %v1980 = vmul.f32 %v1921, %v1979
    %v1981 = vrcp.pop %v1935
    %v1982 = vmul.f32 %v1935, %v1981
    %v1983 = vsub.f32 1.0, %v1982
    %v1984 = vmul.f32 %v1981, %v1983
    %v1985 = vadd.f32 %v1981, %v1984
    %vm1986 = vweird.f32 %v1935
    %vm1987 = vweird.f32 %v1981
    %vm1988 = vmor %vm1986, %vm1987
    %v1989 = vsel %vm1988, %v1981, %v1985
    %v1990 = vand.u32 2147483647, %v1935
    %vm1991 = vcmp.eq.f32.partialorder %v1990, 8.507059e+37
    %v1992 = vand.u32 %v1935, 2147483648
    %v1993 = vor.u32 1.1754944e-38, %v1992
    %v1994 = vsel %vm1991, %v1993, %v1989
    %v1995 = vmul.f32 %v1923, %v1994
    %v1996 = vpack.c.bf16 %v1965, %v1950
    %v1997 = vpack.c.bf16 %v1995, %v1980
    %1998 = vrot.lane.b32.xlu0 %v1357, 40
    %v1999 = vpop.permute.xlu0 %1998
    %2000 = vrot.lane.b32.xlu0 %v1358, 40
    %v2001 = vpop.permute.xlu0 %2000
    %v2005 = vsel %vm179, %v1996, 0
    %v2008 = vsel %vm179, %v1997, 0
    %2010 = vmatpush.bf16.msra.mxu0 0
    %2011 = vmatpush.bf16.msra.mxu0 0
    %2012 = vmatpush.bf16.msra.mxu0 0
    %2013 = vmatpush.bf16.msra.mxu0 0
    %2014 = vmatpush.bf16.msra.mxu0 0
    %2015 = vmatpush.bf16.msra.mxu0 0
    %2016 = vmatpush.bf16.msra.mxu0 %v2001
    %2017 = vmatpush.bf16.msra.mxu0 %v1999
    %2018 = vmatmul.bf16.gmra.mxu0 %v2005
    %v2019 = vpop.f32.mrf.mxu0
    %v2020 = vadd.f32 0.0, %v2019
    %v2021 = vpop.f32.mrf.mxu0
    %v2022 = vadd.f32 0.0, %v2021
    %2023 = vmatmul.bf16.gmra.mxu0 %v2008
    %v2024 = vpop.f32.mrf.mxu0
    %v2025 = vadd.f32 0.0, %v2024
    %v2026 = vpop.f32.mrf.mxu0
    %v2027 = vadd.f32 0.0, %v2026
    %2028 = vdwg.mxu0
    %2033 = vrot.lane.b32.xlu0 %v1684, 8
    %v2034 = vpop.permute.xlu0 %2033
    %2035 = vrot.lane.b32.xlu0 %v1686, 8
    %v2036 = vpop.permute.xlu0 %2035
    %2037 = vrot.lane.b32.xlu0 %v1689, 8
    %v2038 = vpop.permute.xlu0 %2037
    %2039 = vrot.lane.b32.xlu0 %v1691, 8
    %v2040 = vpop.permute.xlu0 %2039
    %2049 = vrot.lane.b32.xlu0 %v1852, 16
    %v2050 = vpop.permute.xlu0 %2049
    %2051 = vrot.lane.b32.xlu0 %v1854, 16
    %v2052 = vpop.permute.xlu0 %2051
    %2053 = vrot.lane.b32.xlu0 %v1857, 16
    %v2054 = vpop.permute.xlu0 %2053
    %2055 = vrot.lane.b32.xlu0 %v1859, 16
    %v2056 = vpop.permute.xlu0 %2055
    %2065 = vrot.lane.b32.xlu0 %v2020, 24
    %v2066 = vpop.permute.xlu0 %2065
    %2067 = vrot.lane.b32.xlu0 %v2022, 24
    %v2068 = vpop.permute.xlu0 %2067
    %2069 = vrot.lane.b32.xlu0 %v2025, 24
    %v2070 = vpop.permute.xlu0 %2069
    %2071 = vrot.lane.b32.xlu0 %v2027, 24
    %v2072 = vpop.permute.xlu0 %2071
    %v2077 = vsel %vm213, %v1516, %v2034
    %v2078 = vsel %vm213, %v1518, %v2036
    %v2079 = vsel %vm213, %v1521, %v2038
    %v2080 = vsel %vm213, %v1523, %v2040
    %v2081 = vsel %vm930, %v2077, %v2050
    %v2082 = vsel %vm930, %v2078, %v2052
    %v2083 = vsel %vm930, %v2079, %v2054
    %v2084 = vsel %vm930, %v2080, %v2056
    %v2085 = vsel %vm935, %v2081, %v2066
    %v2086 = vsel %vm935, %v2082, %v2068
    %v2087 = vsel %vm935, %v2083, %v2070
    %v2088 = vsel %vm935, %v2084, %v2072
    %v2089 = vpack.c.bf16 %v2086, %v2085
    %v2090 = vpack.c.bf16 %v2088, %v2087
    %s2091 = scalar_lea.vmem %s5, 16
    %v2092 = vld [vmem:[%s2091] sm:$0xf]
    %v2093 = vld [vmem:[%s2091 + $0x4] sm:$0xf]
    %v2094 = vld [vmem:[%s2091 + $0x8] sm:$0xf]
    %v2095 = vld [vmem:[%s2091 + $0xc] sm:$0xf]
    %v2096 = vld [vmem:[%s11 + $0x6] sm:$0x1]
    %v2097 = vperm.slane %v2096, 0
    %v2102 = vunpack.c.l.b16 %v2092
    %v2103 = vunpack.c.l.b16 %v2093
    %v2104 = vunpack.c.l.b16 %v2094
    %v2105 = vunpack.c.l.b16 %v2095
    %v2106 = vpack.c.b16 %v2103, %v2102
    %v2107 = vpack.c.b16 %v2105, %v2104
    %v2111 = vsel %vm179, %v2089, 0
    %v2114 = vsel %vm179, %v2090, 0
    %2116 = vmatpush.bf16.msra.mxu0 0
    %2117 = vmatpush.bf16.msra.mxu0 0
    %2118 = vmatpush.bf16.msra.mxu0 0
    %2119 = vmatpush.bf16.msra.mxu0 0
    %2120 = vmatpush.bf16.msra.mxu0 0
    %2121 = vmatpush.bf16.msra.mxu0 0
    %2122 = vmatpush.bf16.msra.mxu0 %v2107
    %2123 = vmatpush.bf16.msra.mxu0 %v2106
    %2124 = vmatmul.bf16.gmra.mxu0 %v2111
    %v2125 = vpop.f32.mrf.mxu0
    %v2126 = vadd.f32 %v2097, %v2125
    %v2127 = vpop.f32.mrf.mxu0
    %v2128 = vadd.f32 %v2097, %v2127
    %2129 = vmatmul.bf16.gmra.mxu0 %v2114
    %v2130 = vpop.f32.mrf.mxu0
    %v2131 = vadd.f32 %v2097, %v2130
    %v2132 = vpop.f32.mrf.mxu0
    %v2133 = vadd.f32 %v2097, %v2132
    %2134 = vdwg.mxu0
    %v2135 = vadd.f32 %v1307, %v2126
    %v2136 = vadd.f32 %v1308, %v2128
    %v2137 = vadd.f32 %v1309, %v2131
    %v2138 = vadd.f32 %v1310, %v2133
    %v2139 = vsel %vm179, %v2135, 0.0
    %2140 = vadd.xlane.f32.xlu0 %v2139
    %v2141 = vpop.xlane.xlu0 %2140
    %v2142 = vsel %vm179, %v2136, 0.0
    %2143 = vadd.xlane.f32.xlu0 %v2142
    %v2144 = vpop.xlane.xlu0 %2143
    %v2145 = vsel %vm179, %v2137, 0.0
    %2146 = vadd.xlane.f32.xlu0 %v2145
    %v2147 = vpop.xlane.xlu0 %2146
    %v2148 = vsel %vm179, %v2138, 0.0
    %2149 = vadd.xlane.f32.xlu0 %v2148
    %v2150 = vpop.xlane.xlu0 %2149
    %v2151 = vmul.f32 %v2141, %v1007
    %v2152 = vmul.f32 %v2144, %v1007
    %v2153 = vmul.f32 %v2147, %v1007
    %v2154 = vmul.f32 %v2150, %v1007
    %v2155 = vsub.f32 %v2135, %v2151
    %v2156 = vsub.f32 %v2136, %v2152
    %v2157 = vsub.f32 %v2137, %v2153
    %v2158 = vsub.f32 %v2138, %v2154
    %v2159 = vmul.f32 %v2155, %v2155
    %v2160 = vmul.f32 %v2156, %v2156
    %v2161 = vmul.f32 %v2157, %v2157
    %v2162 = vmul.f32 %v2158, %v2158
    %v2163 = vsel %vm179, %v2159, 0.0
    %2164 = vadd.xlane.f32.xlu0 %v2163
    %v2165 = vpop.xlane.xlu0 %2164
    %v2166 = vsel %vm179, %v2160, 0.0
    %2167 = vadd.xlane.f32.xlu0 %v2166
    %v2168 = vpop.xlane.xlu0 %2167
    %v2169 = vsel %vm179, %v2161, 0.0
    %2170 = vadd.xlane.f32.xlu0 %v2169
    %v2171 = vpop.xlane.xlu0 %2170
    %v2172 = vsel %vm179, %v2162, 0.0
    %2173 = vadd.xlane.f32.xlu0 %v2172
    %v2174 = vpop.xlane.xlu0 %2173
    %v2175 = vmul.f32 %v2165, %v1007
    %v2176 = vmul.f32 %v2168, %v1007
    %v2177 = vmul.f32 %v2171, %v1007
    %v2178 = vmul.f32 %v2174, %v1007
    %v2179 = vadd.f32 %v2175, 1e-05
    %v2180 = vadd.f32 %v2176, 1e-05
    %v2181 = vadd.f32 %v2177, 1e-05
    %v2182 = vadd.f32 %v2178, 1e-05
    %v2183 = vrsqrt.pop %v2179
    %v2184 = vmul.f32 %v2183, %v2179
    %v2185 = vmul.f32 %v2184, %v2183
    %v2186 = vmul.f32 0.5, %v2185
    %v2187 = vsub.f32 1.5, %v2186
    %v2188 = vmul.f32 %v2183, %v2187
    %vm2189 = vweird.f32 %v2179
    %vm2190 = vweird.f32 %v2183
    %vm2191 = vmor %vm2189, %vm2190
    %v2192 = vsel %vm2191, %v2183, %v2188
    %v2193 = vrsqrt.pop %v2180
    %v2194 = vmul.f32 %v2193, %v2180
    %v2195 = vmul.f32 %v2194, %v2193
    %v2196 = vmul.f32 0.5, %v2195
    %v2197 = vsub.f32 1.5, %v2196
    %v2198 = vmul.f32 %v2193, %v2197
    %vm2199 = vweird.f32 %v2180
    %vm2200 = vweird.f32 %v2193
    %vm2201 = vmor %vm2199, %vm2200
    %v2202 = vsel %vm2201, %v2193, %v2198
    %v2203 = vrsqrt.pop %v2181
    %v2204 = vmul.f32 %v2203, %v2181
    %v2205 = vmul.f32 %v2204, %v2203
    %v2206 = vmul.f32 0.5, %v2205
    %v2207 = vsub.f32 1.5, %v2206
    %v2208 = vmul.f32 %v2203, %v2207
    %vm2209 = vweird.f32 %v2181
    %vm2210 = vweird.f32 %v2203
    %vm2211 = vmor %vm2209, %vm2210
    %v2212 = vsel %vm2211, %v2203, %v2208
    %v2213 = vrsqrt.pop %v2182
    %v2214 = vmul.f32 %v2213, %v2182
    %v2215 = vmul.f32 %v2214, %v2213
    %v2216 = vmul.f32 0.5, %v2215
    %v2217 = vsub.f32 1.5, %v2216
    %v2218 = vmul.f32 %v2213, %v2217
    %vm2219 = vweird.f32 %v2182
    %vm2220 = vweird.f32 %v2213
    %vm2221 = vmor %vm2219, %vm2220
    %v2222 = vsel %vm2221, %v2213, %v2218
    %v2223 = vmul.f32 %v2155, %v2192
    %v2224 = vmul.f32 %v2156, %v2202
    %v2225 = vmul.f32 %v2157, %v2212
    %v2226 = vmul.f32 %v2158, %v2222
    %v2227 = vld [vmem:[%s11 + $0xd] sm:$0x1]
    %v2228 = vperm.slane %v2227, 0
    %v2229 = vmul.f32 %v2223, %v2228
    %v2230 = vmul.f32 %v2224, %v2228
    %v2231 = vmul.f32 %v2225, %v2228
    %v2232 = vmul.f32 %v2226, %v2228
    %v2233 = vld [vmem:[%s11 + $0xe] sm:$0x1]
    %v2234 = vperm.slane %v2233, 0
    %v2235 = vadd.f32 %v2229, %v2234
    %v2236 = vadd.f32 %v2230, %v2234
    %v2237 = vadd.f32 %v2231, %v2234
    %v2238 = vadd.f32 %v2232, %v2234
    %v2239 = vpack.c.bf16 %v2236, %v2235
    %v2240 = vpack.c.bf16 %v2238, %v2237
    %s2241 = scalar_lea.vmem %s6, 16
    %v2242 = vld [vmem:[%s2241] sm:$0xf]
    %v2243 = vld [vmem:[%s2241 + $0x4] sm:$0xf]
    %v2244 = vld [vmem:[%s2241 + $0x8] sm:$0xf]
    %v2245 = vld [vmem:[%s2241 + $0xc] sm:$0xf]
    %v2246 = vld [vmem:[%s11 + $0x1a] sm:$0x1]
    %v2247 = vperm.slane %v2246, 0
    %v2252 = vunpack.c.l.b16 %v2242
    %v2253 = vunpack.c.l.b16 %v2243
    %v2254 = vunpack.c.l.b16 %v2244
    %v2255 = vunpack.c.l.b16 %v2245
    %v2256 = vpack.c.b16 %v2253, %v2252
    %v2257 = vpack.c.b16 %v2255, %v2254
    %v2261 = vsel %vm179, %v2239, 0
    %v2264 = vsel %vm179, %v2240, 0
    %2266 = vmatpush.bf16.msra.mxu0 0
    %2267 = vmatpush.bf16.msra.mxu0 0
    %2268 = vmatpush.bf16.msra.mxu0 0
    %2269 = vmatpush.bf16.msra.mxu0 0
    %2270 = vmatpush.bf16.msra.mxu0 0
    %2271 = vmatpush.bf16.msra.mxu0 0
    %2272 = vmatpush.bf16.msra.mxu0 %v2257
    %2273 = vmatpush.bf16.msra.mxu0 %v2256
    %2274 = vmatmul.bf16.gmra.mxu0 %v2261
    %v2275 = vpop.f32.mrf.mxu0
    %v2276 = vadd.f32 %v2247, %v2275
    %v2277 = vpop.f32.mrf.mxu0
    %v2278 = vadd.f32 %v2247, %v2277
    %2279 = vmatmul.bf16.gmra.mxu0 %v2264
    %v2280 = vpop.f32.mrf.mxu0
    %v2281 = vadd.f32 %v2247, %v2280
    %v2282 = vpop.f32.mrf.mxu0
    %v2283 = vadd.f32 %v2247, %v2282
    %2284 = vdwg.mxu0
    %v2285 = vmax.f32 %v2276, 0.0
    %v2286 = vmax.f32 %v2278, 0.0
    %v2287 = vmax.f32 %v2281, 0.0
    %v2288 = vmax.f32 %v2283, 0.0
    %v2289 = vpack.c.bf16 %v2286, %v2285
    %v2290 = vpack.c.bf16 %v2288, %v2287
    %s2291 = scalar_lea.vmem %s7, 32
    %v2292 = vld [vmem:[%s2291] sm:$0xf]
    %v2293 = vld [vmem:[%s2291 + $0x4] sm:$0xf]
    %v2294 = vld [vmem:[%s2291 + $0x8] sm:$0xf]
    %v2295 = vld [vmem:[%s2291 + $0xc] sm:$0xf]
    %v2296 = vld [vmem:[%s2291 + $0x10] sm:$0xf]
    %v2297 = vld [vmem:[%s2291 + $0x14] sm:$0xf]
    %v2298 = vld [vmem:[%s2291 + $0x18] sm:$0xf]
    %v2299 = vld [vmem:[%s2291 + $0x1c] sm:$0xf]
    %v2300 = vld [vmem:[%s11 + $0x1e] sm:$0x1]
    %v2301 = vperm.slane %v2300, 0
    %v2310 = vunpack.c.l.b16 %v2292
    %v2311 = vunpack.c.l.b16 %v2293
    %v2312 = vunpack.c.l.b16 %v2294
    %v2313 = vunpack.c.l.b16 %v2295
    %v2314 = vunpack.c.l.b16 %v2296
    %v2315 = vunpack.c.l.b16 %v2297
    %v2316 = vunpack.c.l.b16 %v2298
    %v2317 = vunpack.c.l.b16 %v2299
    %v2318 = vpack.c.b16 %v2311, %v2310
    %v2319 = vpack.c.b16 %v2313, %v2312
    %v2320 = vpack.c.b16 %v2315, %v2314
    %v2321 = vpack.c.b16 %v2317, %v2316
    %v2327 = vsel %vm1181, %v2289, 0
    %v2330 = vsel %vm1181, %v2290, 0
    %2332 = vmatpush.bf16.msra.mxu0 0
    %2333 = vmatpush.bf16.msra.mxu0 0
    %2334 = vmatpush.bf16.msra.mxu0 0
    %2335 = vmatpush.bf16.msra.mxu0 0
    %2336 = vmatpush.bf16.msra.mxu0 %v2321
    %2337 = vmatpush.bf16.msra.mxu0 %v2320
    %2338 = vmatpush.bf16.msra.mxu0 %v2319
    %2339 = vmatpush.bf16.msra.mxu0 %v2318
    %2340 = vmatmul.bf16.gmra.mxu0 %v2327
    %v2341 = vpop.f32.mrf.mxu0
    %v2342 = vadd.f32 %v2301, %v2341
    %v2343 = vpop.f32.mrf.mxu0
    %v2344 = vadd.f32 %v2301, %v2343
    %2345 = vmatmul.bf16.gmra.mxu0 %v2330
    %v2346 = vpop.f32.mrf.mxu0
    %v2347 = vadd.f32 %v2301, %v2346
    %v2348 = vpop.f32.mrf.mxu0
    %v2349 = vadd.f32 %v2301, %v2348
    %2350 = vdwg.mxu0
    %v2351 = vadd.f32 %v2235, %v2342
    %v2352 = vadd.f32 %v2236, %v2344
    %v2353 = vadd.f32 %v2237, %v2347
    %v2354 = vadd.f32 %v2238, %v2349
    %v2355 = vsel %vm179, %v2351, 0.0
    %2356 = vadd.xlane.f32.xlu0 %v2355
    %v2357 = vpop.xlane.xlu0 %2356
    %v2358 = vsel %vm179, %v2352, 0.0
    %2359 = vadd.xlane.f32.xlu0 %v2358
    %v2360 = vpop.xlane.xlu0 %2359
    %v2361 = vsel %vm179, %v2353, 0.0
    %2362 = vadd.xlane.f32.xlu0 %v2361
    %v2363 = vpop.xlane.xlu0 %2362
    %v2364 = vsel %vm179, %v2354, 0.0
    %2365 = vadd.xlane.f32.xlu0 %v2364
    %v2366 = vpop.xlane.xlu0 %2365
    %v2367 = vmul.f32 %v2357, %v1007
    %v2368 = vmul.f32 %v2360, %v1007
    %v2369 = vmul.f32 %v2363, %v1007
    %v2370 = vmul.f32 %v2366, %v1007
    %v2371 = vsub.f32 %v2351, %v2367
    %v2372 = vsub.f32 %v2352, %v2368
    %v2373 = vsub.f32 %v2353, %v2369
    %v2374 = vsub.f32 %v2354, %v2370
    %v2375 = vmul.f32 %v2371, %v2371
    %v2376 = vmul.f32 %v2372, %v2372
    %v2377 = vmul.f32 %v2373, %v2373
    %v2378 = vmul.f32 %v2374, %v2374
    %v2379 = vsel %vm179, %v2375, 0.0
    %2380 = vadd.xlane.f32.xlu0 %v2379
    %v2381 = vpop.xlane.xlu0 %2380
    %v2382 = vsel %vm179, %v2376, 0.0
    %2383 = vadd.xlane.f32.xlu0 %v2382
    %v2384 = vpop.xlane.xlu0 %2383
    %v2385 = vsel %vm179, %v2377, 0.0
    %2386 = vadd.xlane.f32.xlu0 %v2385
    %v2387 = vpop.xlane.xlu0 %2386
    %v2388 = vsel %vm179, %v2378, 0.0
    %2389 = vadd.xlane.f32.xlu0 %v2388
    %v2390 = vpop.xlane.xlu0 %2389
    %v2391 = vmul.f32 %v2381, %v1007
    %v2392 = vmul.f32 %v2384, %v1007
    %v2393 = vmul.f32 %v2387, %v1007
    %v2394 = vmul.f32 %v2390, %v1007
    %v2395 = vadd.f32 %v2391, 1e-05
    %v2396 = vadd.f32 %v2392, 1e-05
    %v2397 = vadd.f32 %v2393, 1e-05
    %v2398 = vadd.f32 %v2394, 1e-05
    %v2399 = vrsqrt.pop %v2395
    %v2400 = vmul.f32 %v2399, %v2395
    %v2401 = vmul.f32 %v2400, %v2399
    %v2402 = vmul.f32 0.5, %v2401
    %v2403 = vsub.f32 1.5, %v2402
    %v2404 = vmul.f32 %v2399, %v2403
    %vm2405 = vweird.f32 %v2395
    %vm2406 = vweird.f32 %v2399
    %vm2407 = vmor %vm2405, %vm2406
    %v2408 = vsel %vm2407, %v2399, %v2404
    %v2409 = vrsqrt.pop %v2396
    %v2410 = vmul.f32 %v2409, %v2396
    %v2411 = vmul.f32 %v2410, %v2409
    %v2412 = vmul.f32 0.5, %v2411
    %v2413 = vsub.f32 1.5, %v2412
    %v2414 = vmul.f32 %v2409, %v2413
    %vm2415 = vweird.f32 %v2396
    %vm2416 = vweird.f32 %v2409
    %vm2417 = vmor %vm2415, %vm2416
    %v2418 = vsel %vm2417, %v2409, %v2414
    %v2419 = vrsqrt.pop %v2397
    %v2420 = vmul.f32 %v2419, %v2397
    %v2421 = vmul.f32 %v2420, %v2419
    %v2422 = vmul.f32 0.5, %v2421
    %v2423 = vsub.f32 1.5, %v2422
    %v2424 = vmul.f32 %v2419, %v2423
    %vm2425 = vweird.f32 %v2397
    %vm2426 = vweird.f32 %v2419
    %vm2427 = vmor %vm2425, %vm2426
    %v2428 = vsel %vm2427, %v2419, %v2424
    %v2429 = vrsqrt.pop %v2398
    %v2430 = vmul.f32 %v2429, %v2398
    %v2431 = vmul.f32 %v2430, %v2429
    %v2432 = vmul.f32 0.5, %v2431
    %v2433 = vsub.f32 1.5, %v2432
    %v2434 = vmul.f32 %v2429, %v2433
    %vm2435 = vweird.f32 %v2398
    %vm2436 = vweird.f32 %v2429
    %vm2437 = vmor %vm2435, %vm2436
    %v2438 = vsel %vm2437, %v2429, %v2434
    %v2439 = vmul.f32 %v2371, %v2408
    %v2440 = vmul.f32 %v2372, %v2418
    %v2441 = vmul.f32 %v2373, %v2428
    %v2442 = vmul.f32 %v2374, %v2438
    %v2443 = vld [vmem:[%s11 + $0xf] sm:$0x1]
    %v2444 = vperm.slane %v2443, 0
    %v2445 = vmul.f32 %v2439, %v2444
    %v2446 = vmul.f32 %v2440, %v2444
    %v2447 = vmul.f32 %v2441, %v2444
    %v2448 = vmul.f32 %v2442, %v2444
    %v2449 = vld [vmem:[%s11 + $0x10] sm:$0x1]
    %v2450 = vperm.slane %v2449, 0
    %v2451 = vadd.f32 %v2445, %v2450
    %v2452 = vadd.f32 %v2446, %v2450
    %v2453 = vadd.f32 %v2447, %v2450
    %v2454 = vadd.f32 %v2448, %v2450
    %v2455 = vld [vmem:[%s1] sm:$0xff]
    %v2456 = vpack.c.bf16 %v2455, %v2455
    %v2457 = vld [vmem:[%s3] sm:$0xc]
    %v2458 = vld [vmem:[%s3 + $0x4] sm:$0xf]
    %v2459 = vld [vmem:[%s3 + $0x8] sm:$0x3]
    %v2460 = vld [vmem:[%s11] sm:$0x1]
    %v2461 = vperm.slane %v2460, 0
    %v2465 = vunpack.c.l.b16 %v2457
    %v2466 = vunpack.c.l.b16 %v2458
    %v2467 = vunpack.c.l.b16 %v2459
    %v2468 = vpack.c.b16 %v2466, %v2465
    %v2469 = vpack.c.b16 %v2467, %v2467
    %vm2470 = vcmask 1045504
    %v2471 = vrot.slane %v2468, 2
    %v2472 = vrot.slane %v2469, 2
    %v2473 = vsel %vm2470, %v2471, %v2472
    %v2476 = vsel %vm930, %v2456, 0
    %2478 = vmatpush.bf16.msra.mxu0 0
    %2479 = vmatpush.bf16.msra.mxu0 0
    %2480 = vmatpush.bf16.msra.mxu0 0
    %2481 = vmatpush.bf16.msra.mxu0 0
    %2482 = vmatpush.bf16.msra.mxu0 0
    %2483 = vmatpush.bf16.msra.mxu0 0
    %2484 = vmatpush.bf16.msra.mxu0 0
    %2485 = vmatpush.bf16.msra.mxu0 %v2473
    %2486 = vmatmul.bf16.gmra.mxu0 %v2476
    %v2487 = vpop.f32.mrf.mxu0
    %v2488 = vadd.f32 %v2461, %v2487
    %v2489 = vpop.f32.mrf.mxu0
    %2490 = vdwg.mxu0
    %v2491 = vpack.c.bf16 %v2488, %v2488
    %s2492 = scalar_lea.vmem %s4, 32
    %v2493 = vld [vmem:[%s2492] sm:$0xf]
    %v2494 = vld [vmem:[%s2492 + $0x4] sm:$0xf]
    %v2495 = vld [vmem:[%s2492 + $0x8] sm:$0xf]
    %v2496 = vld [vmem:[%s2492 + $0xc] sm:$0xf]
    %v2497 = vld [vmem:[%s11 + $0x3] sm:$0x1]
    %v2498 = vperm.slane %v2497, 0
    %v2503 = vunpack.c.l.b16 %v2493
    %v2504 = vunpack.c.l.b16 %v2494
    %v2505 = vunpack.c.l.b16 %v2495
    %v2506 = vunpack.c.l.b16 %v2496
    %v2507 = vpack.c.b16 %v2504, %v2503
    %v2508 = vpack.c.b16 %v2506, %v2505
    %v2512 = vsel %vm179, %v2491, 0
    %2514 = vmatpush.bf16.msra.mxu0 0
    %2515 = vmatpush.bf16.msra.mxu0 0
    %2516 = vmatpush.bf16.msra.mxu0 0
    %2517 = vmatpush.bf16.msra.mxu0 0
    %2518 = vmatpush.bf16.msra.mxu0 0
    %2519 = vmatpush.bf16.msra.mxu0 0
    %2520 = vmatpush.bf16.msra.mxu0 %v2508
    %2521 = vmatpush.bf16.msra.mxu0 %v2507
    %2522 = vmatmul.bf16.gmra.mxu0 %v2512
    %v2523 = vpop.f32.mrf.mxu0
    %v2524 = vadd.f32 %v2498, %v2523
    %v2525 = vpop.f32.mrf.mxu0
    %2526 = vdwg.mxu0
    %v2527 = vpack.c.bf16 %v2524, %v2524
    %2529 = vrot.lane.b32.xlu0 %v2527, 96
    %v2530 = vpop.permute.xlu0 %2529
    %v2532 = vsel %vm213, %v2527, 0
    %v2535 = vsel %vm213, %v2530, 0
    %2537 = vmatpush.bf16.xpose.msra.mxu0 0
    %2538 = vmatpush.bf16.xpose.msra.mxu0 0
    %2539 = vmatpush.bf16.xpose.msra.mxu0 0
    %2540 = vmatpush.bf16.xpose.msra.mxu0 0
    %2541 = vmatpush.bf16.xpose.msra.mxu0 0
    %2542 = vmatpush.bf16.xpose.msra.mxu0 0
    %2543 = vmatpush.bf16.xpose.msra.mxu0 0
    %2544 = vmatpush.bf16.xpose.msra.mxu0 %v2535
    %2545 = vmatmul.bf16.gmra.mxu0 %v2532
    %v2546 = vpop.f32.mrf.mxu0
    %v2547 = vadd.f32 %v155, %v2546
    %v2548 = vpop.f32.mrf.mxu0
    %2549 = vdwg.mxu0
    %v2550 = vsel %vm213, %v2547, -inf
    %2551 = vmax.xlane.f32.xlu0 %v2550
    %v2552 = vpop.xlane.xlu0 %2551
    %v2553 = vsub.f32 %v2547, %v2552
    %v2554 = vmul.f32 %v2553, 1.442695
    %v2555 = vpow.pop %v2554
    %v2556 = vsel %vm213, %v2555, 0.0
    %2557 = vadd.xlane.f32.xlu0 %v2556
    %v2558 = vpop.xlane.xlu0 %2557
    %v2559 = vrcp.pop %v2558
    %v2560 = vmul.f32 %v2558, %v2559
    %v2561 = vsub.f32 1.0, %v2560
    %v2562 = vmul.f32 %v2559, %v2561
    %v2563 = vadd.f32 %v2559, %v2562
    %vm2564 = vweird.f32 %v2558
    %vm2565 = vweird.f32 %v2559
    %vm2566 = vmor %vm2564, %vm2565
    %v2567 = vsel %vm2566, %v2559, %v2563
    %v2568 = vand.u32 2147483647, %v2558
    %vm2569 = vcmp.eq.f32.partialorder %v2568, 8.507059e+37
    %v2570 = vand.u32 %v2558, 2147483648
    %v2571 = vor.u32 1.1754944e-38, %v2570
    %v2572 = vsel %vm2569, %v2571, %v2567
    %v2573 = vmul.f32 %v2555, %v2572
    %v2574 = vpack.c.bf16 %v2573, %v2573
    %2575 = vrot.lane.b32.xlu0 %v2527, 64
    %v2576 = vpop.permute.xlu0 %2575
    %v2578 = vsel %vm213, %v2574, 0
    %vm2580 = vcmask 1043456
    %v2582 = vsel %vm2580, %v2576, 0
    %2584 = vmatpush.bf16.msra.mxu0 0
    %2585 = vmatpush.bf16.msra.mxu0 0
    %2586 = vmatpush.bf16.msra.mxu0 0
    %2587 = vmatpush.bf16.msra.mxu0 0
    %2588 = vmatpush.bf16.msra.mxu0 0
    %2589 = vmatpush.bf16.msra.mxu0 0
    %2590 = vmatpush.bf16.msra.mxu0 0
    %2591 = vmatpush.bf16.msra.mxu0 %v2582
    %2592 = vmatmul.bf16.gmra.mxu0 %v2578
    %v2593 = vpop.f32.mrf.mxu0
    %v2594 = vadd.f32 0.0, %v2593
    %v2595 = vpop.f32.mrf.mxu0
    %2596 = vdwg.mxu0
    %2597 = vrot.lane.b32.xlu0 %v2527, 120
    %v2598 = vpop.permute.xlu0 %2597
    %2599 = vrot.lane.b32.xlu0 %v2527, 88
    %v2600 = vpop.permute.xlu0 %2599
    %v2602 = vsel %vm213, %v2598, 0
    %v2605 = vsel %vm213, %v2600, 0
    %2607 = vmatpush.bf16.xpose.msra.mxu0 0
    %2608 = vmatpush.bf16.xpose.msra.mxu0 0
    %2609 = vmatpush.bf16.xpose.msra.mxu0 0
    %2610 = vmatpush.bf16.xpose.msra.mxu0 0
    %2611 = vmatpush.bf16.xpose.msra.mxu0 0
    %2612 = vmatpush.bf16.xpose.msra.mxu0 0
    %2613 = vmatpush.bf16.xpose.msra.mxu0 0
    %2614 = vmatpush.bf16.xpose.msra.mxu0 %v2605
    %2615 = vmatmul.bf16.gmra.mxu0 %v2602
    %v2616 = vpop.f32.mrf.mxu0
    %v2617 = vadd.f32 %v155, %v2616
    %v2618 = vpop.f32.mrf.mxu0
    %2619 = vdwg.mxu0
    %v2620 = vsel %vm213, %v2617, -inf
    %2621 = vmax.xlane.f32.xlu0 %v2620
    %v2622 = vpop.xlane.xlu0 %2621
    %v2623 = vsub.f32 %v2617, %v2622
    %v2624 = vmul.f32 %v2623, 1.442695
    %v2625 = vpow.pop %v2624
    %v2626 = vsel %vm213, %v2625, 0.0
    %2627 = vadd.xlane.f32.xlu0 %v2626
    %v2628 = vpop.xlane.xlu0 %2627
    %v2629 = vrcp.pop %v2628
    %v2630 = vmul.f32 %v2628, %v2629
    %v2631 = vsub.f32 1.0, %v2630
    %v2632 = vmul.f32 %v2629, %v2631
    %v2633 = vadd.f32 %v2629, %v2632
    %vm2634 = vweird.f32 %v2628
    %vm2635 = vweird.f32 %v2629
    %vm2636 = vmor %vm2634, %vm2635
    %v2637 = vsel %vm2636, %v2629, %v2633
    %v2638 = vand.u32 2147483647, %v2628
    %vm2639 = vcmp.eq.f32.partialorder %v2638, 8.507059e+37
    %v2640 = vand.u32 %v2628, 2147483648
    %v2641 = vor.u32 1.1754944e-38, %v2640
    %v2642 = vsel %vm2639, %v2641, %v2637
    %v2643 = vmul.f32 %v2625, %v2642
    %v2644 = vpack.c.bf16 %v2643, %v2643
    %2645 = vrot.lane.b32.xlu0 %v2527, 56
    %v2646 = vpop.permute.xlu0 %2645
    %v2648 = vsel %vm213, %v2644, 0
    %v2651 = vsel %vm2580, %v2646, 0
    %2653 = vmatpush.bf16.msra.mxu0 0
    %2654 = vmatpush.bf16.msra.mxu0 0
    %2655 = vmatpush.bf16.msra.mxu0 0
    %2656 = vmatpush.bf16.msra.mxu0 0
    %2657 = vmatpush.bf16.msra.mxu0 0
    %2658 = vmatpush.bf16.msra.mxu0 0
    %2659 = vmatpush.bf16.msra.mxu0 0
    %2660 = vmatpush.bf16.msra.mxu0 %v2651
    %2661 = vmatmul.bf16.gmra.mxu0 %v2648
    %v2662 = vpop.f32.mrf.mxu0
    %v2663 = vadd.f32 0.0, %v2662
    %v2664 = vpop.f32.mrf.mxu0
    %2665 = vdwg.mxu0
    %2666 = vrot.lane.b32.xlu0 %v2527, 112
    %v2667 = vpop.permute.xlu0 %2666
    %2668 = vrot.lane.b32.xlu0 %v2527, 80
    %v2669 = vpop.permute.xlu0 %2668
    %v2671 = vsel %vm213, %v2667, 0
    %v2674 = vsel %vm213, %v2669, 0
    %2676 = vmatpush.bf16.xpose.msra.mxu0 0
    %2677 = vmatpush.bf16.xpose.msra.mxu0 0
    %2678 = vmatpush.bf16.xpose.msra.mxu0 0
    %2679 = vmatpush.bf16.xpose.msra.mxu0 0
    %2680 = vmatpush.bf16.xpose.msra.mxu0 0
    %2681 = vmatpush.bf16.xpose.msra.mxu0 0
    %2682 = vmatpush.bf16.xpose.msra.mxu0 0
    %2683 = vmatpush.bf16.xpose.msra.mxu0 %v2674
    %2684 = vmatmul.bf16.gmra.mxu0 %v2671
    %v2685 = vpop.f32.mrf.mxu0
    %v2686 = vadd.f32 %v155, %v2685
    %v2687 = vpop.f32.mrf.mxu0
    %2688 = vdwg.mxu0
    %v2689 = vsel %vm213, %v2686, -inf
    %2690 = vmax.xlane.f32.xlu0 %v2689
    %v2691 = vpop.xlane.xlu0 %2690
    %v2692 = vsub.f32 %v2686, %v2691
    %v2693 = vmul.f32 %v2692, 1.442695
    %v2694 = vpow.pop %v2693
    %v2695 = vsel %vm213, %v2694, 0.0
    %2696 = vadd.xlane.f32.xlu0 %v2695
    %v2697 = vpop.xlane.xlu0 %2696
    %v2698 = vrcp.pop %v2697
    %v2699 = vmul.f32 %v2697, %v2698
    %v2700 = vsub.f32 1.0, %v2699
    %v2701 = vmul.f32 %v2698, %v2700
    %v2702 = vadd.f32 %v2698, %v2701
    %vm2703 = vweird.f32 %v2697
    %vm2704 = vweird.f32 %v2698
    %vm2705 = vmor %vm2703, %vm2704
    %v2706 = vsel %vm2705, %v2698, %v2702
    %v2707 = vand.u32 2147483647, %v2697
    %vm2708 = vcmp.eq.f32.partialorder %v2707, 8.507059e+37
    %v2709 = vand.u32 %v2697, 2147483648
    %v2710 = vor.u32 1.1754944e-38, %v2709
    %v2711 = vsel %vm2708, %v2710, %v2706
    %v2712 = vmul.f32 %v2694, %v2711
    %v2713 = vpack.c.bf16 %v2712, %v2712
    %2714 = vrot.lane.b32.xlu0 %v2527, 48
    %v2715 = vpop.permute.xlu0 %2714
    %v2717 = vsel %vm213, %v2713, 0
    %v2720 = vsel %vm2580, %v2715, 0
    %2722 = vmatpush.bf16.msra.mxu0 0
    %2723 = vmatpush.bf16.msra.mxu0 0
    %2724 = vmatpush.bf16.msra.mxu0 0
    %2725 = vmatpush.bf16.msra.mxu0 0
    %2726 = vmatpush.bf16.msra.mxu0 0
    %2727 = vmatpush.bf16.msra.mxu0 0
    %2728 = vmatpush.bf16.msra.mxu0 0
    %2729 = vmatpush.bf16.msra.mxu0 %v2720
    %2730 = vmatmul.bf16.gmra.mxu0 %v2717
    %v2731 = vpop.f32.mrf.mxu0
    %v2732 = vadd.f32 0.0, %v2731
    %v2733 = vpop.f32.mrf.mxu0
    %2734 = vdwg.mxu0
    %2735 = vrot.lane.b32.xlu0 %v2527, 104
    %v2736 = vpop.permute.xlu0 %2735
    %2737 = vrot.lane.b32.xlu0 %v2527, 72
    %v2738 = vpop.permute.xlu0 %2737
    %v2740 = vsel %vm213, %v2736, 0
    %v2743 = vsel %vm213, %v2738, 0
    %2745 = vmatpush.bf16.xpose.msra.mxu0 0
    %2746 = vmatpush.bf16.xpose.msra.mxu0 0
    %2747 = vmatpush.bf16.xpose.msra.mxu0 0
    %2748 = vmatpush.bf16.xpose.msra.mxu0 0
    %2749 = vmatpush.bf16.xpose.msra.mxu0 0
    %2750 = vmatpush.bf16.xpose.msra.mxu0 0
    %2751 = vmatpush.bf16.xpose.msra.mxu0 0
    %2752 = vmatpush.bf16.xpose.msra.mxu0 %v2743
    %2753 = vmatmul.bf16.gmra.mxu0 %v2740
    %v2754 = vpop.f32.mrf.mxu0
    %v2755 = vadd.f32 %v155, %v2754
    %v2756 = vpop.f32.mrf.mxu0
    %2757 = vdwg.mxu0
    %v2758 = vsel %vm213, %v2755, -inf
    %2759 = vmax.xlane.f32.xlu0 %v2758
    %v2760 = vpop.xlane.xlu0 %2759
    %v2761 = vsub.f32 %v2755, %v2760
    %v2762 = vmul.f32 %v2761, 1.442695
    %v2763 = vpow.pop %v2762
    %v2764 = vsel %vm213, %v2763, 0.0
    %2765 = vadd.xlane.f32.xlu0 %v2764
    %v2766 = vpop.xlane.xlu0 %2765
    %v2767 = vrcp.pop %v2766
    %v2768 = vmul.f32 %v2766, %v2767
    %v2769 = vsub.f32 1.0, %v2768
    %v2770 = vmul.f32 %v2767, %v2769
    %v2771 = vadd.f32 %v2767, %v2770
    %vm2772 = vweird.f32 %v2766
    %vm2773 = vweird.f32 %v2767
    %vm2774 = vmor %vm2772, %vm2773
    %v2775 = vsel %vm2774, %v2767, %v2771
    %v2776 = vand.u32 2147483647, %v2766
    %vm2777 = vcmp.eq.f32.partialorder %v2776, 8.507059e+37
    %v2778 = vand.u32 %v2766, 2147483648
    %v2779 = vor.u32 1.1754944e-38, %v2778
    %v2780 = vsel %vm2777, %v2779, %v2775
    %v2781 = vmul.f32 %v2763, %v2780
    %v2782 = vpack.c.bf16 %v2781, %v2781
    %2783 = vrot.lane.b32.xlu0 %v2527, 40
    %v2784 = vpop.permute.xlu0 %2783
    %v2786 = vsel %vm213, %v2782, 0
    %v2789 = vsel %vm2580, %v2784, 0
    %2791 = vmatpush.bf16.msra.mxu0 0
    %2792 = vmatpush.bf16.msra.mxu0 0
    %2793 = vmatpush.bf16.msra.mxu0 0
    %2794 = vmatpush.bf16.msra.mxu0 0
    %2795 = vmatpush.bf16.msra.mxu0 0
    %2796 = vmatpush.bf16.msra.mxu0 0
    %2797 = vmatpush.bf16.msra.mxu0 0
    %2798 = vmatpush.bf16.msra.mxu0 %v2789
    %2799 = vmatmul.bf16.gmra.mxu0 %v2786
    %v2800 = vpop.f32.mrf.mxu0
    %v2801 = vadd.f32 0.0, %v2800
    %v2802 = vpop.f32.mrf.mxu0
    %2803 = vdwg.mxu0
    %2805 = vrot.lane.b32.xlu0 %v2663, 8
    %v2806 = vpop.permute.xlu0 %2805
    %2809 = vrot.lane.b32.xlu0 %v2732, 16
    %v2810 = vpop.permute.xlu0 %2809
    %2813 = vrot.lane.b32.xlu0 %v2801, 24
    %v2814 = vpop.permute.xlu0 %2813
    %v2816 = vsel %vm213, %v2594, %v2806
    %v2817 = vsel %vm930, %v2816, %v2810
    %v2818 = vsel %vm935, %v2817, %v2814
    %v2819 = vpack.c.bf16 %v2818, %v2818
    %s2820 = scalar_lea.vmem %s5, 32
    %v2821 = vld [vmem:[%s2820] sm:$0xf]
    %v2822 = vld [vmem:[%s2820 + $0x4] sm:$0xf]
    %v2823 = vld [vmem:[%s2820 + $0x8] sm:$0xf]
    %v2824 = vld [vmem:[%s2820 + $0xc] sm:$0xf]
    %v2825 = vld [vmem:[%s11 + $0x7] sm:$0x1]
    %v2826 = vperm.slane %v2825, 0
    %v2831 = vunpack.c.l.b16 %v2821
    %v2832 = vunpack.c.l.b16 %v2822
    %v2833 = vunpack.c.l.b16 %v2823
    %v2834 = vunpack.c.l.b16 %v2824
    %v2835 = vpack.c.b16 %v2832, %v2831
    %v2836 = vpack.c.b16 %v2834, %v2833
    %v2840 = vsel %vm179, %v2819, 0
    %2842 = vmatpush.bf16.msra.mxu0 0
    %2843 = vmatpush.bf16.msra.mxu0 0
    %2844 = vmatpush.bf16.msra.mxu0 0
    %2845 = vmatpush.bf16.msra.mxu0 0
    %2846 = vmatpush.bf16.msra.mxu0 0
    %2847 = vmatpush.bf16.msra.mxu0 0
    %2848 = vmatpush.bf16.msra.mxu0 %v2836
    %2849 = vmatpush.bf16.msra.mxu0 %v2835
    %2850 = vmatmul.bf16.gmra.mxu0 %v2840
    %v2851 = vpop.f32.mrf.mxu0
    %v2852 = vadd.f32 %v2826, %v2851
    %v2853 = vpop.f32.mrf.mxu0
    %2854 = vdwg.mxu0
    %v2855 = vadd.f32 %v2488, %v2852
    %v2856 = vsel %vm179, %v2855, 0.0
    %2857 = vadd.xlane.f32.xlu0 %v2856
    %v2858 = vpop.xlane.xlu0 %2857
    %v2859 = vmul.f32 %v2858, %v1007
    %v2860 = vsub.f32 %v2855, %v2859
    %v2861 = vmul.f32 %v2860, %v2860
    %v2862 = vsel %vm179, %v2861, 0.0
    %2863 = vadd.xlane.f32.xlu0 %v2862
    %v2864 = vpop.xlane.xlu0 %2863
    %v2865 = vmul.f32 %v2864, %v1007
    %v2866 = vadd.f32 %v2865, 1e-05
    %v2867 = vrsqrt.pop %v2866
    %v2868 = vmul.f32 %v2867, %v2866
    %v2869 = vmul.f32 %v2868, %v2867
    %v2870 = vmul.f32 0.5, %v2869
    %v2871 = vsub.f32 1.5, %v2870
    %v2872 = vmul.f32 %v2867, %v2871
    %vm2873 = vweird.f32 %v2866
    %vm2874 = vweird.f32 %v2867
    %vm2875 = vmor %vm2873, %vm2874
    %v2876 = vsel %vm2875, %v2867, %v2872
    %v2877 = vmul.f32 %v2860, %v2876
    %v2878 = vld [vmem:[%s11 + $0x11] sm:$0x1]
    %v2879 = vperm.slane %v2878, 0
    %v2880 = vmul.f32 %v2877, %v2879
    %v2881 = vld [vmem:[%s11 + $0x12] sm:$0x1]
    %v2882 = vperm.slane %v2881, 0
    %v2883 = vadd.f32 %v2880, %v2882
    %v2884 = vpack.c.bf16 %v2883, %v2883
    %s2885 = scalar_lea.vmem %s6, 32
    %v2886 = vld [vmem:[%s2885] sm:$0xf]
    %v2887 = vld [vmem:[%s2885 + $0x4] sm:$0xf]
    %v2888 = vld [vmem:[%s2885 + $0x8] sm:$0xf]
    %v2889 = vld [vmem:[%s2885 + $0xc] sm:$0xf]
    %v2890 = vld [vmem:[%s11 + $0x1b] sm:$0x1]
    %v2891 = vperm.slane %v2890, 0
    %v2896 = vunpack.c.l.b16 %v2886
    %v2897 = vunpack.c.l.b16 %v2887
    %v2898 = vunpack.c.l.b16 %v2888
    %v2899 = vunpack.c.l.b16 %v2889
    %v2900 = vpack.c.b16 %v2897, %v2896
    %v2901 = vpack.c.b16 %v2899, %v2898
    %v2905 = vsel %vm179, %v2884, 0
    %2907 = vmatpush.bf16.msra.mxu0 0
    %2908 = vmatpush.bf16.msra.mxu0 0
    %2909 = vmatpush.bf16.msra.mxu0 0
    %2910 = vmatpush.bf16.msra.mxu0 0
    %2911 = vmatpush.bf16.msra.mxu0 0
    %2912 = vmatpush.bf16.msra.mxu0 0
    %2913 = vmatpush.bf16.msra.mxu0 %v2901
    %2914 = vmatpush.bf16.msra.mxu0 %v2900
    %2915 = vmatmul.bf16.gmra.mxu0 %v2905
    %v2916 = vpop.f32.mrf.mxu0
    %v2917 = vadd.f32 %v2891, %v2916
    %v2918 = vpop.f32.mrf.mxu0
    %2919 = vdwg.mxu0
    %v2920 = vmax.f32 %v2917, 0.0
    %v2921 = vpack.c.bf16 %v2920, %v2920
    %s2922 = scalar_lea.vmem %s7, 64
    %v2923 = vld [vmem:[%s2922] sm:$0xf]
    %v2924 = vld [vmem:[%s2922 + $0x4] sm:$0xf]
    %v2925 = vld [vmem:[%s2922 + $0x8] sm:$0xf]
    %v2926 = vld [vmem:[%s2922 + $0xc] sm:$0xf]
    %v2927 = vld [vmem:[%s2922 + $0x10] sm:$0xf]
    %v2928 = vld [vmem:[%s2922 + $0x14] sm:$0xf]
    %v2929 = vld [vmem:[%s2922 + $0x18] sm:$0xf]
    %v2930 = vld [vmem:[%s2922 + $0x1c] sm:$0xf]
    %v2931 = vld [vmem:[%s11 + $0x1f] sm:$0x1]
    %v2932 = vperm.slane %v2931, 0
    %v2941 = vunpack.c.l.b16 %v2923
    %v2942 = vunpack.c.l.b16 %v2924
    %v2943 = vunpack.c.l.b16 %v2925
    %v2944 = vunpack.c.l.b16 %v2926
    %v2945 = vunpack.c.l.b16 %v2927
    %v2946 = vunpack.c.l.b16 %v2928
    %v2947 = vunpack.c.l.b16 %v2929
    %v2948 = vunpack.c.l.b16 %v2930
    %v2949 = vpack.c.b16 %v2942, %v2941
    %v2950 = vpack.c.b16 %v2944, %v2943
    %v2951 = vpack.c.b16 %v2946, %v2945
    %v2952 = vpack.c.b16 %v2948, %v2947
    %v2958 = vsel %vm1181, %v2921, 0
    %2960 = vmatpush.bf16.msra.mxu0 0
    %2961 = vmatpush.bf16.msra.mxu0 0
    %2962 = vmatpush.bf16.msra.mxu0 0
    %2963 = vmatpush.bf16.msra.mxu0 0
    %2964 = vmatpush.bf16.msra.mxu0 %v2952
    %2965 = vmatpush.bf16.msra.mxu0 %v2951
    %2966 = vmatpush.bf16.msra.mxu0 %v2950
    %2967 = vmatpush.bf16.msra.mxu0 %v2949
    %2968 = vmatmul.bf16.gmra.mxu0 %v2958
    %v2969 = vpop.f32.mrf.mxu0
    %v2970 = vadd.f32 %v2932, %v2969
    %v2971 = vpop.f32.mrf.mxu0
    %2972 = vdwg.mxu0
    %v2973 = vadd.f32 %v2883, %v2970
    %v2974 = vsel %vm179, %v2973, 0.0
    %2975 = vadd.xlane.f32.xlu0 %v2974
    %v2976 = vpop.xlane.xlu0 %2975
    %v2977 = vmul.f32 %v2976, %v1007
    %v2978 = vsub.f32 %v2973, %v2977
    %v2979 = vmul.f32 %v2978, %v2978
    %v2980 = vsel %vm179, %v2979, 0.0
    %2981 = vadd.xlane.f32.xlu0 %v2980
    %v2982 = vpop.xlane.xlu0 %2981
    %v2983 = vmul.f32 %v2982, %v1007
    %v2984 = vadd.f32 %v2983, 1e-05
    %v2985 = vrsqrt.pop %v2984
    %v2986 = vmul.f32 %v2985, %v2984
    %v2987 = vmul.f32 %v2986, %v2985
    %v2988 = vmul.f32 0.5, %v2987
    %v2989 = vsub.f32 1.5, %v2988
    %v2990 = vmul.f32 %v2985, %v2989
    %vm2991 = vweird.f32 %v2984
    %vm2992 = vweird.f32 %v2985
    %vm2993 = vmor %vm2991, %vm2992
    %v2994 = vsel %vm2993, %v2985, %v2990
    %v2995 = vmul.f32 %v2978, %v2994
    %v2996 = vld [vmem:[%s11 + $0x13] sm:$0x1]
    %v2997 = vperm.slane %v2996, 0
    %v2998 = vmul.f32 %v2995, %v2997
    %v2999 = vld [vmem:[%s11 + $0x14] sm:$0x1]
    %v3000 = vperm.slane %v2999, 0
    %v3001 = vadd.f32 %v2998, %v3000
    %v3002 = vpack.c.bf16 %v3001, %v3001
    %s3003 = scalar_lea.vmem %s4, 48
    %v3004 = vld [vmem:[%s3003] sm:$0xf]
    %v3005 = vld [vmem:[%s3003 + $0x4] sm:$0xf]
    %v3006 = vld [vmem:[%s3003 + $0x8] sm:$0xf]
    %v3007 = vld [vmem:[%s3003 + $0xc] sm:$0xf]
    %v3008 = vld [vmem:[%s11 + $0x4] sm:$0x1]
    %v3009 = vperm.slane %v3008, 0
    %v3014 = vunpack.c.l.b16 %v3004
    %v3015 = vunpack.c.l.b16 %v3005
    %v3016 = vunpack.c.l.b16 %v3006
    %v3017 = vunpack.c.l.b16 %v3007
    %v3018 = vpack.c.b16 %v3015, %v3014
    %v3019 = vpack.c.b16 %v3017, %v3016
    %v3023 = vsel %vm179, %v3002, 0
    %3025 = vmatpush.bf16.msra.mxu0 0
    %3026 = vmatpush.bf16.msra.mxu0 0
    %3027 = vmatpush.bf16.msra.mxu0 0
    %3028 = vmatpush.bf16.msra.mxu0 0
    %3029 = vmatpush.bf16.msra.mxu0 0
    %3030 = vmatpush.bf16.msra.mxu0 0
    %3031 = vmatpush.bf16.msra.mxu0 %v3019
    %3032 = vmatpush.bf16.msra.mxu0 %v3018
    %3033 = vmatmul.bf16.gmra.mxu0 %v3023
    %v3034 = vpop.f32.mrf.mxu0
    %v3035 = vadd.f32 %v3009, %v3034
    %v3036 = vpop.f32.mrf.mxu0
    %3037 = vdwg.mxu0
    %v3038 = vpack.c.bf16 %v3035, %v3035
    %3040 = vrot.lane.b32.xlu0 %v3038, 96
    %v3041 = vpop.permute.xlu0 %3040
    %v3043 = vsel %vm213, %v3038, 0
    %v3046 = vsel %vm213, %v3041, 0
    %3048 = vmatpush.bf16.xpose.msra.mxu0 0
    %3049 = vmatpush.bf16.xpose.msra.mxu0 0
    %3050 = vmatpush.bf16.xpose.msra.mxu0 0
    %3051 = vmatpush.bf16.xpose.msra.mxu0 0
    %3052 = vmatpush.bf16.xpose.msra.mxu0 0
    %3053 = vmatpush.bf16.xpose.msra.mxu0 0
    %3054 = vmatpush.bf16.xpose.msra.mxu0 0
    %3055 = vmatpush.bf16.xpose.msra.mxu0 %v3046
    %3056 = vmatmul.bf16.gmra.mxu0 %v3043
    %v3057 = vpop.f32.mrf.mxu0
    %v3058 = vadd.f32 %v155, %v3057
    %v3059 = vpop.f32.mrf.mxu0
    %3060 = vdwg.mxu0
    %v3061 = vsel %vm213, %v3058, -inf
    %3062 = vmax.xlane.f32.xlu0 %v3061
    %v3063 = vpop.xlane.xlu0 %3062
    %v3064 = vsub.f32 %v3058, %v3063
    %v3065 = vmul.f32 %v3064, 1.442695
    %v3066 = vpow.pop %v3065
    %v3067 = vsel %vm213, %v3066, 0.0
    %3068 = vadd.xlane.f32.xlu0 %v3067
    %v3069 = vpop.xlane.xlu0 %3068
    %v3070 = vrcp.pop %v3069
    %v3071 = vmul.f32 %v3069, %v3070
    %v3072 = vsub.f32 1.0, %v3071
    %v3073 = vmul.f32 %v3070, %v3072
    %v3074 = vadd.f32 %v3070, %v3073
    %vm3075 = vweird.f32 %v3069
    %vm3076 = vweird.f32 %v3070
    %vm3077 = vmor %vm3075, %vm3076
    %v3078 = vsel %vm3077, %v3070, %v3074
    %v3079 = vand.u32 2147483647, %v3069
    %vm3080 = vcmp.eq.f32.partialorder %v3079, 8.507059e+37
    %v3081 = vand.u32 %v3069, 2147483648
    %v3082 = vor.u32 1.1754944e-38, %v3081
    %v3083 = vsel %vm3080, %v3082, %v3078
    %v3084 = vmul.f32 %v3066, %v3083
    %v3085 = vpack.c.bf16 %v3084, %v3084
    %3086 = vrot.lane.b32.xlu0 %v3038, 64
    %v3087 = vpop.permute.xlu0 %3086
    %v3089 = vsel %vm213, %v3085, 0
    %v3092 = vsel %vm2580, %v3087, 0
    %3094 = vmatpush.bf16.msra.mxu0 0
    %3095 = vmatpush.bf16.msra.mxu0 0
    %3096 = vmatpush.bf16.msra.mxu0 0
    %3097 = vmatpush.bf16.msra.mxu0 0
    %3098 = vmatpush.bf16.msra.mxu0 0
    %3099 = vmatpush.bf16.msra.mxu0 0
    %3100 = vmatpush.bf16.msra.mxu0 0
    %3101 = vmatpush.bf16.msra.mxu0 %v3092
    %3102 = vmatmul.bf16.gmra.mxu0 %v3089
    %v3103 = vpop.f32.mrf.mxu0
    %v3104 = vadd.f32 0.0, %v3103
    %v3105 = vpop.f32.mrf.mxu0
    %3106 = vdwg.mxu0
    %3107 = vrot.lane.b32.xlu0 %v3038, 120
    %v3108 = vpop.permute.xlu0 %3107
    %3109 = vrot.lane.b32.xlu0 %v3038, 88
    %v3110 = vpop.permute.xlu0 %3109
    %v3112 = vsel %vm213, %v3108, 0
    %v3115 = vsel %vm213, %v3110, 0
    %3117 = vmatpush.bf16.xpose.msra.mxu0 0
    %3118 = vmatpush.bf16.xpose.msra.mxu0 0
    %3119 = vmatpush.bf16.xpose.msra.mxu0 0
    %3120 = vmatpush.bf16.xpose.msra.mxu0 0
    %3121 = vmatpush.bf16.xpose.msra.mxu0 0
    %3122 = vmatpush.bf16.xpose.msra.mxu0 0
    %3123 = vmatpush.bf16.xpose.msra.mxu0 0
    %3124 = vmatpush.bf16.xpose.msra.mxu0 %v3115
    %3125 = vmatmul.bf16.gmra.mxu0 %v3112
    %v3126 = vpop.f32.mrf.mxu0
    %v3127 = vadd.f32 %v155, %v3126
    %v3128 = vpop.f32.mrf.mxu0
    %3129 = vdwg.mxu0
    %v3130 = vsel %vm213, %v3127, -inf
    %3131 = vmax.xlane.f32.xlu0 %v3130
    %v3132 = vpop.xlane.xlu0 %3131
    %v3133 = vsub.f32 %v3127, %v3132
    %v3134 = vmul.f32 %v3133, 1.442695
    %v3135 = vpow.pop %v3134
    %v3136 = vsel %vm213, %v3135, 0.0
    %3137 = vadd.xlane.f32.xlu0 %v3136
    %v3138 = vpop.xlane.xlu0 %3137
    %v3139 = vrcp.pop %v3138
    %v3140 = vmul.f32 %v3138, %v3139
    %v3141 = vsub.f32 1.0, %v3140
    %v3142 = vmul.f32 %v3139, %v3141
    %v3143 = vadd.f32 %v3139, %v3142
    %vm3144 = vweird.f32 %v3138
    %vm3145 = vweird.f32 %v3139
    %vm3146 = vmor %vm3144, %vm3145
    %v3147 = vsel %vm3146, %v3139, %v3143
    %v3148 = vand.u32 2147483647, %v3138
    %vm3149 = vcmp.eq.f32.partialorder %v3148, 8.507059e+37
    %v3150 = vand.u32 %v3138, 2147483648
    %v3151 = vor.u32 1.1754944e-38, %v3150
    %v3152 = vsel %vm3149, %v3151, %v3147
    %v3153 = vmul.f32 %v3135, %v3152
    %v3154 = vpack.c.bf16 %v3153, %v3153
    %3155 = vrot.lane.b32.xlu0 %v3038, 56
    %v3156 = vpop.permute.xlu0 %3155
    %v3158 = vsel %vm213, %v3154, 0
    %v3161 = vsel %vm2580, %v3156, 0
    %3163 = vmatpush.bf16.msra.mxu0 0
    %3164 = vmatpush.bf16.msra.mxu0 0
    %3165 = vmatpush.bf16.msra.mxu0 0
    %3166 = vmatpush.bf16.msra.mxu0 0
    %3167 = vmatpush.bf16.msra.mxu0 0
    %3168 = vmatpush.bf16.msra.mxu0 0
    %3169 = vmatpush.bf16.msra.mxu0 0
    %3170 = vmatpush.bf16.msra.mxu0 %v3161
    %3171 = vmatmul.bf16.gmra.mxu0 %v3158
    %v3172 = vpop.f32.mrf.mxu0
    %v3173 = vadd.f32 0.0, %v3172
    %v3174 = vpop.f32.mrf.mxu0
    %3175 = vdwg.mxu0
    %3176 = vrot.lane.b32.xlu0 %v3038, 112
    %v3177 = vpop.permute.xlu0 %3176
    %3178 = vrot.lane.b32.xlu0 %v3038, 80
    %v3179 = vpop.permute.xlu0 %3178
    %v3181 = vsel %vm213, %v3177, 0
    %v3184 = vsel %vm213, %v3179, 0
    %3186 = vmatpush.bf16.xpose.msra.mxu0 0
    %3187 = vmatpush.bf16.xpose.msra.mxu0 0
    %3188 = vmatpush.bf16.xpose.msra.mxu0 0
    %3189 = vmatpush.bf16.xpose.msra.mxu0 0
    %3190 = vmatpush.bf16.xpose.msra.mxu0 0
    %3191 = vmatpush.bf16.xpose.msra.mxu0 0
    %3192 = vmatpush.bf16.xpose.msra.mxu0 0
    %3193 = vmatpush.bf16.xpose.msra.mxu0 %v3184
    %3194 = vmatmul.bf16.gmra.mxu0 %v3181
    %v3195 = vpop.f32.mrf.mxu0
    %v3196 = vadd.f32 %v155, %v3195
    %v3197 = vpop.f32.mrf.mxu0
    %3198 = vdwg.mxu0
    %v3199 = vsel %vm213, %v3196, -inf
    %3200 = vmax.xlane.f32.xlu0 %v3199
    %v3201 = vpop.xlane.xlu0 %3200
    %v3202 = vsub.f32 %v3196, %v3201
    %v3203 = vmul.f32 %v3202, 1.442695
    %v3204 = vpow.pop %v3203
    %v3205 = vsel %vm213, %v3204, 0.0
    %3206 = vadd.xlane.f32.xlu0 %v3205
    %v3207 = vpop.xlane.xlu0 %3206
    %v3208 = vrcp.pop %v3207
    %v3209 = vmul.f32 %v3207, %v3208
    %v3210 = vsub.f32 1.0, %v3209
    %v3211 = vmul.f32 %v3208, %v3210
    %v3212 = vadd.f32 %v3208, %v3211
    %vm3213 = vweird.f32 %v3207
    %vm3214 = vweird.f32 %v3208
    %vm3215 = vmor %vm3213, %vm3214
    %v3216 = vsel %vm3215, %v3208, %v3212
    %v3217 = vand.u32 2147483647, %v3207
    %vm3218 = vcmp.eq.f32.partialorder %v3217, 8.507059e+37
    %v3219 = vand.u32 %v3207, 2147483648
    %v3220 = vor.u32 1.1754944e-38, %v3219
    %v3221 = vsel %vm3218, %v3220, %v3216
    %v3222 = vmul.f32 %v3204, %v3221
    %v3223 = vpack.c.bf16 %v3222, %v3222
    %3224 = vrot.lane.b32.xlu0 %v3038, 48
    %v3225 = vpop.permute.xlu0 %3224
    %v3227 = vsel %vm213, %v3223, 0
    %v3230 = vsel %vm2580, %v3225, 0
    %3232 = vmatpush.bf16.msra.mxu0 0
    %3233 = vmatpush.bf16.msra.mxu0 0
    %3234 = vmatpush.bf16.msra.mxu0 0
    %3235 = vmatpush.bf16.msra.mxu0 0
    %3236 = vmatpush.bf16.msra.mxu0 0
    %3237 = vmatpush.bf16.msra.mxu0 0
    %3238 = vmatpush.bf16.msra.mxu0 0
    %3239 = vmatpush.bf16.msra.mxu0 %v3230
    %3240 = vmatmul.bf16.gmra.mxu0 %v3227
    %v3241 = vpop.f32.mrf.mxu0
    %v3242 = vadd.f32 0.0, %v3241
    %v3243 = vpop.f32.mrf.mxu0
    %3244 = vdwg.mxu0
    %3245 = vrot.lane.b32.xlu0 %v3038, 104
    %v3246 = vpop.permute.xlu0 %3245
    %3247 = vrot.lane.b32.xlu0 %v3038, 72
    %v3248 = vpop.permute.xlu0 %3247
    %v3250 = vsel %vm213, %v3246, 0
    %v3253 = vsel %vm213, %v3248, 0
    %3255 = vmatpush.bf16.xpose.msra.mxu0 0
    %3256 = vmatpush.bf16.xpose.msra.mxu0 0
    %3257 = vmatpush.bf16.xpose.msra.mxu0 0
    %3258 = vmatpush.bf16.xpose.msra.mxu0 0
    %3259 = vmatpush.bf16.xpose.msra.mxu0 0
    %3260 = vmatpush.bf16.xpose.msra.mxu0 0
    %3261 = vmatpush.bf16.xpose.msra.mxu0 0
    %3262 = vmatpush.bf16.xpose.msra.mxu0 %v3253
    %3263 = vmatmul.bf16.gmra.mxu0 %v3250
    %v3264 = vpop.f32.mrf.mxu0
    %v3265 = vadd.f32 %v155, %v3264
    %v3266 = vpop.f32.mrf.mxu0
    %3267 = vdwg.mxu0
    %v3268 = vsel %vm213, %v3265, -inf
    %3269 = vmax.xlane.f32.xlu0 %v3268
    %v3270 = vpop.xlane.xlu0 %3269
    %v3271 = vsub.f32 %v3265, %v3270
    %v3272 = vmul.f32 %v3271, 1.442695
    %v3273 = vpow.pop %v3272
    %v3274 = vsel %vm213, %v3273, 0.0
    %3275 = vadd.xlane.f32.xlu0 %v3274
    %v3276 = vpop.xlane.xlu0 %3275
    %v3277 = vrcp.pop %v3276
    %v3278 = vmul.f32 %v3276, %v3277
    %v3279 = vsub.f32 1.0, %v3278
    %v3280 = vmul.f32 %v3277, %v3279
    %v3281 = vadd.f32 %v3277, %v3280
    %vm3282 = vweird.f32 %v3276
    %vm3283 = vweird.f32 %v3277
    %vm3284 = vmor %vm3282, %vm3283
    %v3285 = vsel %vm3284, %v3277, %v3281
    %v3286 = vand.u32 2147483647, %v3276
    %vm3287 = vcmp.eq.f32.partialorder %v3286, 8.507059e+37
    %v3288 = vand.u32 %v3276, 2147483648
    %v3289 = vor.u32 1.1754944e-38, %v3288
    %v3290 = vsel %vm3287, %v3289, %v3285
    %v3291 = vmul.f32 %v3273, %v3290
    %v3292 = vpack.c.bf16 %v3291, %v3291
    %3293 = vrot.lane.b32.xlu0 %v3038, 40
    %v3294 = vpop.permute.xlu0 %3293
    %v3296 = vsel %vm213, %v3292, 0
    %v3299 = vsel %vm2580, %v3294, 0
    %3301 = vmatpush.bf16.msra.mxu0 0
    %3302 = vmatpush.bf16.msra.mxu0 0
    %3303 = vmatpush.bf16.msra.mxu0 0
    %3304 = vmatpush.bf16.msra.mxu0 0
    %3305 = vmatpush.bf16.msra.mxu0 0
    %3306 = vmatpush.bf16.msra.mxu0 0
    %3307 = vmatpush.bf16.msra.mxu0 0
    %3308 = vmatpush.bf16.msra.mxu0 %v3299
    %3309 = vmatmul.bf16.gmra.mxu0 %v3296
    %v3310 = vpop.f32.mrf.mxu0
    %v3311 = vadd.f32 0.0, %v3310
    %v3312 = vpop.f32.mrf.mxu0
    %3313 = vdwg.mxu0
    %3315 = vrot.lane.b32.xlu0 %v3173, 8
    %v3316 = vpop.permute.xlu0 %3315
    %3319 = vrot.lane.b32.xlu0 %v3242, 16
    %v3320 = vpop.permute.xlu0 %3319
    %3323 = vrot.lane.b32.xlu0 %v3311, 24
    %v3324 = vpop.permute.xlu0 %3323
    %v3326 = vsel %vm213, %v3104, %v3316
    %v3327 = vsel %vm930, %v3326, %v3320
    %v3328 = vsel %vm935, %v3327, %v3324
    %v3329 = vpack.c.bf16 %v3328, %v3328
    %s3330 = scalar_lea.vmem %s5, 48
    %v3331 = vld [vmem:[%s3330] sm:$0xf]
    %v3332 = vld [vmem:[%s3330 + $0x4] sm:$0xf]
    %v3333 = vld [vmem:[%s3330 + $0x8] sm:$0xf]
    %v3334 = vld [vmem:[%s3330 + $0xc] sm:$0xf]
    %v3335 = vld [vmem:[%s11 + $0x8] sm:$0x1]
    %v3336 = vperm.slane %v3335, 0
    %v3341 = vunpack.c.l.b16 %v3331
    %v3342 = vunpack.c.l.b16 %v3332
    %v3343 = vunpack.c.l.b16 %v3333
    %v3344 = vunpack.c.l.b16 %v3334
    %v3345 = vpack.c.b16 %v3342, %v3341
    %v3346 = vpack.c.b16 %v3344, %v3343
    %v3350 = vsel %vm179, %v3329, 0
    %3352 = vmatpush.bf16.msra.mxu0 0
    %3353 = vmatpush.bf16.msra.mxu0 0
    %3354 = vmatpush.bf16.msra.mxu0 0
    %3355 = vmatpush.bf16.msra.mxu0 0
    %3356 = vmatpush.bf16.msra.mxu0 0
    %3357 = vmatpush.bf16.msra.mxu0 0
    %3358 = vmatpush.bf16.msra.mxu0 %v3346
    %3359 = vmatpush.bf16.msra.mxu0 %v3345
    %3360 = vmatmul.bf16.gmra.mxu0 %v3350
    %v3361 = vpop.f32.mrf.mxu0
    %v3362 = vadd.f32 %v3336, %v3361
    %v3363 = vpop.f32.mrf.mxu0
    %3364 = vdwg.mxu0
    %v3365 = vadd.f32 %v3001, %v3362
    %v3366 = vsel %vm179, %v3365, 0.0
    %3367 = vadd.xlane.f32.xlu0 %v3366
    %v3368 = vpop.xlane.xlu0 %3367
    %v3369 = vmul.f32 %v3368, %v1007
    %v3370 = vsub.f32 %v3365, %v3369
    %v3371 = vmul.f32 %v3370, %v3370
    %v3372 = vsel %vm179, %v3371, 0.0
    %3373 = vadd.xlane.f32.xlu0 %v3372
    %v3374 = vpop.xlane.xlu0 %3373
    %v3375 = vmul.f32 %v3374, %v1007
    %v3376 = vadd.f32 %v3375, 1e-05
    %v3377 = vrsqrt.pop %v3376
    %v3378 = vmul.f32 %v3377, %v3376
    %v3379 = vmul.f32 %v3378, %v3377
    %v3380 = vmul.f32 0.5, %v3379
    %v3381 = vsub.f32 1.5, %v3380
    %v3382 = vmul.f32 %v3377, %v3381
    %vm3383 = vweird.f32 %v3376
    %vm3384 = vweird.f32 %v3377
    %vm3385 = vmor %vm3383, %vm3384
    %v3386 = vsel %vm3385, %v3377, %v3382
    %v3387 = vmul.f32 %v3370, %v3386
    %v3388 = vld [vmem:[%s11 + $0x15] sm:$0x1]
    %v3389 = vperm.slane %v3388, 0
    %v3390 = vmul.f32 %v3387, %v3389
    %v3391 = vld [vmem:[%s11 + $0x16] sm:$0x1]
    %v3392 = vperm.slane %v3391, 0
    %v3393 = vadd.f32 %v3390, %v3392
    %v3394 = vpack.c.bf16 %v3393, %v3393
    %s3395 = scalar_lea.vmem %s6, 48
    %v3396 = vld [vmem:[%s3395] sm:$0xf]
    %v3397 = vld [vmem:[%s3395 + $0x4] sm:$0xf]
    %v3398 = vld [vmem:[%s3395 + $0x8] sm:$0xf]
    %v3399 = vld [vmem:[%s3395 + $0xc] sm:$0xf]
    %v3400 = vld [vmem:[%s11 + $0x1c] sm:$0x1]
    %v3401 = vperm.slane %v3400, 0
    %v3406 = vunpack.c.l.b16 %v3396
    %v3407 = vunpack.c.l.b16 %v3397
    %v3408 = vunpack.c.l.b16 %v3398
    %v3409 = vunpack.c.l.b16 %v3399
    %v3410 = vpack.c.b16 %v3407, %v3406
    %v3411 = vpack.c.b16 %v3409, %v3408
    %v3415 = vsel %vm179, %v3394, 0
    %3417 = vmatpush.bf16.msra.mxu0 0
    %3418 = vmatpush.bf16.msra.mxu0 0
    %3419 = vmatpush.bf16.msra.mxu0 0
    %3420 = vmatpush.bf16.msra.mxu0 0
    %3421 = vmatpush.bf16.msra.mxu0 0
    %3422 = vmatpush.bf16.msra.mxu0 0
    %3423 = vmatpush.bf16.msra.mxu0 %v3411
    %3424 = vmatpush.bf16.msra.mxu0 %v3410
    %3425 = vmatmul.bf16.gmra.mxu0 %v3415
    %v3426 = vpop.f32.mrf.mxu0
    %v3427 = vadd.f32 %v3401, %v3426
    %v3428 = vpop.f32.mrf.mxu0
    %3429 = vdwg.mxu0
    %v3430 = vmax.f32 %v3427, 0.0
    %v3431 = vpack.c.bf16 %v3430, %v3430
    %s3432 = scalar_lea.vmem %s7, 96
    %v3433 = vld [vmem:[%s3432] sm:$0xf]
    %v3434 = vld [vmem:[%s3432 + $0x4] sm:$0xf]
    %v3435 = vld [vmem:[%s3432 + $0x8] sm:$0xf]
    %v3436 = vld [vmem:[%s3432 + $0xc] sm:$0xf]
    %v3437 = vld [vmem:[%s3432 + $0x10] sm:$0xf]
    %v3438 = vld [vmem:[%s3432 + $0x14] sm:$0xf]
    %v3439 = vld [vmem:[%s3432 + $0x18] sm:$0xf]
    %v3440 = vld [vmem:[%s3432 + $0x1c] sm:$0xf]
    %v3441 = vld [vmem:[%s11 + $0x20] sm:$0x1]
    %v3442 = vperm.slane %v3441, 0
    %v3451 = vunpack.c.l.b16 %v3433
    %v3452 = vunpack.c.l.b16 %v3434
    %v3453 = vunpack.c.l.b16 %v3435
    %v3454 = vunpack.c.l.b16 %v3436
    %v3455 = vunpack.c.l.b16 %v3437
    %v3456 = vunpack.c.l.b16 %v3438
    %v3457 = vunpack.c.l.b16 %v3439
    %v3458 = vunpack.c.l.b16 %v3440
    %v3459 = vpack.c.b16 %v3452, %v3451
    %v3460 = vpack.c.b16 %v3454, %v3453
    %v3461 = vpack.c.b16 %v3456, %v3455
    %v3462 = vpack.c.b16 %v3458, %v3457
    %v3468 = vsel %vm1181, %v3431, 0
    %3470 = vmatpush.bf16.msra.mxu0 0
    %3471 = vmatpush.bf16.msra.mxu0 0
    %3472 = vmatpush.bf16.msra.mxu0 0
    %3473 = vmatpush.bf16.msra.mxu0 0
    %3474 = vmatpush.bf16.msra.mxu0 %v3462
    %3475 = vmatpush.bf16.msra.mxu0 %v3461
    %3476 = vmatpush.bf16.msra.mxu0 %v3460
    %3477 = vmatpush.bf16.msra.mxu0 %v3459
    %3478 = vmatmul.bf16.gmra.mxu0 %v3468
    %v3479 = vpop.f32.mrf.mxu0
    %v3480 = vadd.f32 %v3442, %v3479
    %v3481 = vpop.f32.mrf.mxu0
    %3482 = vdwg.mxu0
    %v3483 = vadd.f32 %v3393, %v3480
    %v3484 = vsel %vm179, %v3483, 0.0
    %3485 = vadd.xlane.f32.xlu0 %v3484
    %v3486 = vpop.xlane.xlu0 %3485
    %v3487 = vmul.f32 %v3486, %v1007
    %v3488 = vsub.f32 %v3483, %v3487
    %v3489 = vmul.f32 %v3488, %v3488
    %v3490 = vsel %vm179, %v3489, 0.0
    %3491 = vadd.xlane.f32.xlu0 %v3490
    %v3492 = vpop.xlane.xlu0 %3491
    %v3493 = vmul.f32 %v3492, %v1007
    %v3494 = vadd.f32 %v3493, 1e-05
    %v3495 = vrsqrt.pop %v3494
    %v3496 = vmul.f32 %v3495, %v3494
    %v3497 = vmul.f32 %v3496, %v3495
    %v3498 = vmul.f32 0.5, %v3497
    %v3499 = vsub.f32 1.5, %v3498
    %v3500 = vmul.f32 %v3495, %v3499
    %vm3501 = vweird.f32 %v3494
    %vm3502 = vweird.f32 %v3495
    %vm3503 = vmor %vm3501, %vm3502
    %v3504 = vsel %vm3503, %v3495, %v3500
    %v3505 = vmul.f32 %v3488, %v3504
    %v3506 = vld [vmem:[%s11 + $0x17] sm:$0x1]
    %v3507 = vperm.slane %v3506, 0
    %v3508 = vmul.f32 %v3505, %v3507
    %v3509 = vld [vmem:[%s11 + $0x18] sm:$0x1]
    %v3510 = vperm.slane %v3509, 0
    %v3511 = vadd.f32 %v3508, %v3510
    %v3513 = vrot.slane %v2451, 2
    %3514 = vrot.lane.b32.xlu0 %v3513, 32
    %v3515 = vpop.permute.xlu0 %3514
    %v3517 = vrot.slane %v2451, 4
    %3518 = vrot.lane.b32.xlu0 %v3517, 64
    %v3519 = vpop.permute.xlu0 %3518
    %v3521 = vrot.slane %v2451, 6
    %3522 = vrot.lane.b32.xlu0 %v3521, 96
    %v3523 = vpop.permute.xlu0 %3522
    %v3526 = vrot.slane %v2452, 2
    %3527 = vrot.lane.b32.xlu0 %v3526, 32
    %v3528 = vpop.permute.xlu0 %3527
    %v3530 = vrot.slane %v2452, 4
    %3531 = vrot.lane.b32.xlu0 %v3530, 64
    %v3532 = vpop.permute.xlu0 %3531
    %v3534 = vrot.slane %v2452, 6
    %3535 = vrot.lane.b32.xlu0 %v3534, 96
    %v3536 = vpop.permute.xlu0 %3535
    %v3539 = vrot.slane %v2453, 2
    %3540 = vrot.lane.b32.xlu0 %v3539, 32
    %v3541 = vpop.permute.xlu0 %3540
    %v3543 = vrot.slane %v2453, 4
    %3544 = vrot.lane.b32.xlu0 %v3543, 64
    %v3545 = vpop.permute.xlu0 %3544
    %v3547 = vrot.slane %v2453, 6
    %3548 = vrot.lane.b32.xlu0 %v3547, 96
    %v3549 = vpop.permute.xlu0 %3548
    %v3552 = vrot.slane %v2454, 2
    %3553 = vrot.lane.b32.xlu0 %v3552, 32
    %v3554 = vpop.permute.xlu0 %3553
    %v3556 = vrot.slane %v2454, 4
    %3557 = vrot.lane.b32.xlu0 %v3556, 64
    %v3558 = vpop.permute.xlu0 %3557
    %v3560 = vrot.slane %v2454, 6
    %3561 = vrot.lane.b32.xlu0 %v3560, 96
    %v3562 = vpop.permute.xlu0 %3561
    %v3564 = vsel %vm179, %v2451, %v3515
    %v3565 = vsel %vm1181, %v3564, %v3519
    %vm3566 = vcmask 785408
    %v3567 = vsel %vm3566, %v3565, %v3523
    %v3568 = vsel %vm179, %v2452, %v3528
    %v3569 = vsel %vm1181, %v3568, %v3532
    %v3570 = vsel %vm3566, %v3569, %v3536
    %v3571 = vsel %vm179, %v2453, %v3541
    %v3572 = vsel %vm1181, %v3571, %v3545
    %v3573 = vsel %vm3566, %v3572, %v3549
    %v3574 = vsel %vm179, %v2454, %v3554
    %v3575 = vsel %vm1181, %v3574, %v3558
    %v3576 = vsel %vm3566, %v3575, %v3562
    %v3578 = vrot.slane %v3511, 2
    %3579 = vrot.lane.b32.xlu0 %v3578, 32
    %v3580 = vpop.permute.xlu0 %3579
    %v3582 = vrot.slane %v3511, 4
    %3583 = vrot.lane.b32.xlu0 %v3582, 64
    %v3584 = vpop.permute.xlu0 %3583
    %v3586 = vrot.slane %v3511, 6
    %3587 = vrot.lane.b32.xlu0 %v3586, 96
    %v3588 = vpop.permute.xlu0 %3587
    %v3590 = vsel %vm179, %v3511, %v3580
    %v3591 = vsel %vm1181, %v3590, %v3584
    %v3592 = vsel %vm3566, %v3591, %v3588
    %v3593 = vpack.c.bf16 %v3567, %v3567
    %v3594 = vpack.c.bf16 %v3570, %v3570
    %v3595 = vpack.c.bf16 %v3573, %v3573
    %v3596 = vpack.c.bf16 %v3576, %v3576
    %v3597 = vld [vmem:[%s8] sm:$0xf]
    %v3598 = vld [vmem:[%s8 + $0x4] sm:$0xf]
    %v3599 = vld [vmem:[%s8 + $0x8] sm:$0xf]
    %v3600 = vld [vmem:[%s8 + $0xc] sm:$0xf]
    %v3601 = vld [vmem:[%s8 + $0x10] sm:$0xf]
    %v3602 = vld [vmem:[%s8 + $0x14] sm:$0xf]
    %v3603 = vld [vmem:[%s8 + $0x18] sm:$0xf]
    %v3604 = vld [vmem:[%s8 + $0x1c] sm:$0xf]
    %v3605 = vld [vmem:[%s8 + $0x20] sm:$0xf]
    %v3606 = vld [vmem:[%s8 + $0x24] sm:$0xf]
    %v3607 = vld [vmem:[%s8 + $0x28] sm:$0xf]
    %v3608 = vld [vmem:[%s8 + $0x2c] sm:$0xf]
    %v3609 = vld [vmem:[%s8 + $0x30] sm:$0xf]
    %v3610 = vld [vmem:[%s8 + $0x34] sm:$0xf]
    %v3611 = vld [vmem:[%s8 + $0x38] sm:$0xf]
    %v3612 = vld [vmem:[%s8 + $0x3c] sm:$0xf]
    %v3613 = vld [vmem:[%s8 + $0x40] sm:$0xf]
    %v3614 = vld [vmem:[%s8 + $0x44] sm:$0xf]
    %v3615 = vld [vmem:[%s8 + $0x48] sm:$0xf]
    %v3616 = vld [vmem:[%s8 + $0x4c] sm:$0xf]
    %v3617 = vld [vmem:[%s8 + $0x50] sm:$0xf]
    %v3618 = vld [vmem:[%s8 + $0x54] sm:$0xf]
    %v3619 = vld [vmem:[%s8 + $0x58] sm:$0xf]
    %v3620 = vld [vmem:[%s8 + $0x5c] sm:$0xf]
    %v3621 = vld [vmem:[%s8 + $0x60] sm:$0xf]
    %v3622 = vld [vmem:[%s8 + $0x64] sm:$0xf]
    %v3623 = vld [vmem:[%s8 + $0x68] sm:$0xf]
    %v3624 = vld [vmem:[%s8 + $0x6c] sm:$0xf]
    %v3625 = vld [vmem:[%s8 + $0x70] sm:$0xf]
    %v3626 = vld [vmem:[%s8 + $0x74] sm:$0xf]
    %v3627 = vld [vmem:[%s8 + $0x78] sm:$0xf]
    %v3628 = vld [vmem:[%s8 + $0x7c] sm:$0xf]
    %v3629 = vld [vmem:[%s8 + $0x80] sm:$0xf]
    %v3630 = vld [vmem:[%s8 + $0x84] sm:$0xf]
    %v3631 = vld [vmem:[%s8 + $0x88] sm:$0xf]
    %v3632 = vld [vmem:[%s8 + $0x8c] sm:$0xf]
    %v3633 = vld [vmem:[%s8 + $0x90] sm:$0xf]
    %v3634 = vld [vmem:[%s8 + $0x94] sm:$0xf]
    %v3635 = vld [vmem:[%s8 + $0x98] sm:$0xf]
    %v3636 = vld [vmem:[%s8 + $0x9c] sm:$0xf]
    %v3637 = vld [vmem:[%s8 + $0xa0] sm:$0xf]
    %v3638 = vld [vmem:[%s8 + $0xa4] sm:$0xf]
    %v3639 = vld [vmem:[%s8 + $0xa8] sm:$0xf]
    %v3640 = vld [vmem:[%s8 + $0xac] sm:$0xf]
    %v3641 = vld [vmem:[%s8 + $0xb0] sm:$0xf]
    %v3642 = vld [vmem:[%s8 + $0xb4] sm:$0xf]
    %v3643 = vld [vmem:[%s8 + $0xb8] sm:$0xf]
    %v3644 = vld [vmem:[%s8 + $0xbc] sm:$0xf]
    %v3645 = vld [vmem:[%s8 + $0xc0] sm:$0xf]
    %v3646 = vld [vmem:[%s8 + $0xc4] sm:$0xf]
    %v3647 = vld [vmem:[%s8 + $0xc8] sm:$0xf]
    %v3648 = vld [vmem:[%s8 + $0xcc] sm:$0xf]
    %v3649 = vld [vmem:[%s8 + $0xd0] sm:$0xf]
    %v3650 = vld [vmem:[%s8 + $0xd4] sm:$0xf]
    %v3651 = vld [vmem:[%s8 + $0xd8] sm:$0xf]
    %v3652 = vld [vmem:[%s8 + $0xdc] sm:$0xf]
    %v3653 = vld [vmem:[%s8 + $0xe0] sm:$0xf]
    %v3654 = vld [vmem:[%s8 + $0xe4] sm:$0xf]
    %v3655 = vld [vmem:[%s8 + $0xe8] sm:$0xf]
    %v3656 = vld [vmem:[%s8 + $0xec] sm:$0xf]
    %v3657 = vld [vmem:[%s8 + $0xf0] sm:$0xf]
    %v3658 = vld [vmem:[%s8 + $0xf4] sm:$0xf]
    %v3659 = vld [vmem:[%s8 + $0xf8] sm:$0xf]
    %v3660 = vld [vmem:[%s8 + $0xfc] sm:$0xf]
    %v3725 = vunpack.c.l.b16 %v3597
    %v3726 = vunpack.c.l.b16 %v3598
    %v3727 = vunpack.c.l.b16 %v3599
    %v3728 = vunpack.c.l.b16 %v3600
    %v3729 = vunpack.c.l.b16 %v3601
    %v3730 = vunpack.c.l.b16 %v3602
    %v3731 = vunpack.c.l.b16 %v3603
    %v3732 = vunpack.c.l.b16 %v3604
    %v3733 = vunpack.c.l.b16 %v3605
    %v3734 = vunpack.c.l.b16 %v3606
    %v3735 = vunpack.c.l.b16 %v3607
    %v3736 = vunpack.c.l.b16 %v3608
    %v3737 = vunpack.c.l.b16 %v3609
    %v3738 = vunpack.c.l.b16 %v3610
    %v3739 = vunpack.c.l.b16 %v3611
    %v3740 = vunpack.c.l.b16 %v3612
    %v3741 = vunpack.c.l.b16 %v3613
    %v3742 = vunpack.c.l.b16 %v3614
    %v3743 = vunpack.c.l.b16 %v3615
    %v3744 = vunpack.c.l.b16 %v3616
    %v3745 = vunpack.c.l.b16 %v3617
    %v3746 = vunpack.c.l.b16 %v3618
    %v3747 = vunpack.c.l.b16 %v3619
    %v3748 = vunpack.c.l.b16 %v3620
    %v3749 = vunpack.c.l.b16 %v3621
    %v3750 = vunpack.c.l.b16 %v3622
    %v3751 = vunpack.c.l.b16 %v3623
    %v3752 = vunpack.c.l.b16 %v3624
    %v3753 = vunpack.c.l.b16 %v3625
    %v3754 = vunpack.c.l.b16 %v3626
    %v3755 = vunpack.c.l.b16 %v3627
    %v3756 = vunpack.c.l.b16 %v3628
    %v3757 = vunpack.c.l.b16 %v3629
    %v3758 = vunpack.c.l.b16 %v3630
    %v3759 = vunpack.c.l.b16 %v3631
    %v3760 = vunpack.c.l.b16 %v3632
    %v3761 = vunpack.c.l.b16 %v3633
    %v3762 = vunpack.c.l.b16 %v3634
    %v3763 = vunpack.c.l.b16 %v3635
    %v3764 = vunpack.c.l.b16 %v3636
    %v3765 = vunpack.c.l.b16 %v3637
    %v3766 = vunpack.c.l.b16 %v3638
    %v3767 = vunpack.c.l.b16 %v3639
    %v3768 = vunpack.c.l.b16 %v3640
    %v3769 = vunpack.c.l.b16 %v3641
    %v3770 = vunpack.c.l.b16 %v3642
    %v3771 = vunpack.c.l.b16 %v3643
    %v3772 = vunpack.c.l.b16 %v3644
    %v3773 = vunpack.c.l.b16 %v3645
    %v3774 = vunpack.c.l.b16 %v3646
    %v3775 = vunpack.c.l.b16 %v3647
    %v3776 = vunpack.c.l.b16 %v3648
    %v3777 = vunpack.c.l.b16 %v3649
    %v3778 = vunpack.c.l.b16 %v3650
    %v3779 = vunpack.c.l.b16 %v3651
    %v3780 = vunpack.c.l.b16 %v3652
    %v3781 = vunpack.c.l.b16 %v3653
    %v3782 = vunpack.c.l.b16 %v3654
    %v3783 = vunpack.c.l.b16 %v3655
    %v3784 = vunpack.c.l.b16 %v3656
    %v3785 = vunpack.c.l.b16 %v3657
    %v3786 = vunpack.c.l.b16 %v3658
    %v3787 = vunpack.c.l.b16 %v3659
    %v3788 = vunpack.c.l.b16 %v3660
    %v3789 = vpack.c.b16 %v3726, %v3725
    %v3790 = vpack.c.b16 %v3728, %v3727
    %v3791 = vpack.c.b16 %v3730, %v3729
    %v3792 = vpack.c.b16 %v3732, %v3731
    %v3793 = vpack.c.b16 %v3734, %v3733
    %v3794 = vpack.c.b16 %v3736, %v3735
    %v3795 = vpack.c.b16 %v3738, %v3737
    %v3796 = vpack.c.b16 %v3740, %v3739
    %v3797 = vpack.c.b16 %v3742, %v3741
    %v3798 = vpack.c.b16 %v3744, %v3743
    %v3799 = vpack.c.b16 %v3746, %v3745
    %v3800 = vpack.c.b16 %v3748, %v3747
    %v3801 = vpack.c.b16 %v3750, %v3749
    %v3802 = vpack.c.b16 %v3752, %v3751
    %v3803 = vpack.c.b16 %v3754, %v3753
    %v3804 = vpack.c.b16 %v3756, %v3755
    %v3805 = vpack.c.b16 %v3758, %v3757
    %v3806 = vpack.c.b16 %v3760, %v3759
    %v3807 = vpack.c.b16 %v3762, %v3761
    %v3808 = vpack.c.b16 %v3764, %v3763
    %v3809 = vpack.c.b16 %v3766, %v3765
    %v3810 = vpack.c.b16 %v3768, %v3767
    %v3811 = vpack.c.b16 %v3770, %v3769
    %v3812 = vpack.c.b16 %v3772, %v3771
    %v3813 = vpack.c.b16 %v3774, %v3773
    %v3814 = vpack.c.b16 %v3776, %v3775
    %v3815 = vpack.c.b16 %v3778, %v3777
    %v3816 = vpack.c.b16 %v3780, %v3779
    %v3817 = vpack.c.b16 %v3782, %v3781
    %v3818 = vpack.c.b16 %v3784, %v3783
    %v3819 = vpack.c.b16 %v3786, %v3785
    %v3820 = vpack.c.b16 %v3788, %v3787
    %3853 = vmatpush.bf16.msra.mxu0 %v3796
    %3854 = vmatpush.bf16.msra.mxu0 %v3795
    %3855 = vmatpush.bf16.msra.mxu0 %v3794
    %3856 = vmatpush.bf16.msra.mxu0 %v3793
    %3857 = vmatpush.bf16.msra.mxu0 %v3792
    %3858 = vmatpush.bf16.msra.mxu0 %v3791
    %3859 = vmatpush.bf16.msra.mxu0 %v3790
    %3860 = vmatpush.bf16.msra.mxu0 %v3789
    %3861 = vmatmul.bf16.gmra.mxu0 %v3593
    %v3862 = vpop.f32.mrf.mxu0
    %v3863 = vadd.f32 0.0, %v3862
    %v3864 = vpop.f32.mrf.mxu0
    %3865 = vdwg.mxu0
    %3866 = vmatpush.bf16.msra.mxu0 %v3804
    %3867 = vmatpush.bf16.msra.mxu0 %v3803
    %3868 = vmatpush.bf16.msra.mxu0 %v3802
    %3869 = vmatpush.bf16.msra.mxu0 %v3801
    %3870 = vmatpush.bf16.msra.mxu0 %v3800
    %3871 = vmatpush.bf16.msra.mxu0 %v3799
    %3872 = vmatpush.bf16.msra.mxu0 %v3798
    %3873 = vmatpush.bf16.msra.mxu0 %v3797
    %3874 = vmatmul.bf16.gmra.mxu0 %v3594
    %v3875 = vpop.f32.mrf.mxu0
    %v3876 = vadd.f32 %v3863, %v3875
    %v3877 = vpop.f32.mrf.mxu0
    %3878 = vdwg.mxu0
    %3879 = vmatpush.bf16.msra.mxu0 %v3812
    %3880 = vmatpush.bf16.msra.mxu0 %v3811
    %3881 = vmatpush.bf16.msra.mxu0 %v3810
    %3882 = vmatpush.bf16.msra.mxu0 %v3809
    %3883 = vmatpush.bf16.msra.mxu0 %v3808
    %3884 = vmatpush.bf16.msra.mxu0 %v3807
    %3885 = vmatpush.bf16.msra.mxu0 %v3806
    %3886 = vmatpush.bf16.msra.mxu0 %v3805
    %3887 = vmatmul.bf16.gmra.mxu0 %v3595
    %v3888 = vpop.f32.mrf.mxu0
    %v3889 = vadd.f32 %v3876, %v3888
    %v3890 = vpop.f32.mrf.mxu0
    %3891 = vdwg.mxu0
    %3892 = vmatpush.bf16.msra.mxu0 %v3820
    %3893 = vmatpush.bf16.msra.mxu0 %v3819
    %3894 = vmatpush.bf16.msra.mxu0 %v3818
    %3895 = vmatpush.bf16.msra.mxu0 %v3817
    %3896 = vmatpush.bf16.msra.mxu0 %v3816
    %3897 = vmatpush.bf16.msra.mxu0 %v3815
    %3898 = vmatpush.bf16.msra.mxu0 %v3814
    %3899 = vmatpush.bf16.msra.mxu0 %v3813
    %3900 = vmatmul.bf16.gmra.mxu0 %v3596
    %v3901 = vpop.f32.mrf.mxu0
    %v3902 = vadd.f32 %v3889, %v3901
    %v3903 = vpop.f32.mrf.mxu0
    %3904 = vdwg.mxu0
    %v3905 = vpack.c.bf16 %v3592, %v3592
    %v3906 = vld [vmem:[%s9] sm:$0xf]
    %v3907 = vld [vmem:[%s9 + $0x4] sm:$0xf]
    %v3908 = vld [vmem:[%s9 + $0x8] sm:$0xf]
    %v3909 = vld [vmem:[%s9 + $0xc] sm:$0xf]
    %v3910 = vld [vmem:[%s9 + $0x10] sm:$0xf]
    %v3911 = vld [vmem:[%s9 + $0x14] sm:$0xf]
    %v3912 = vld [vmem:[%s9 + $0x18] sm:$0xf]
    %v3913 = vld [vmem:[%s9 + $0x1c] sm:$0xf]
    %v3914 = vld [vmem:[%s9 + $0x20] sm:$0xf]
    %v3915 = vld [vmem:[%s9 + $0x24] sm:$0xf]
    %v3916 = vld [vmem:[%s9 + $0x28] sm:$0xf]
    %v3917 = vld [vmem:[%s9 + $0x2c] sm:$0xf]
    %v3918 = vld [vmem:[%s9 + $0x30] sm:$0xf]
    %v3919 = vld [vmem:[%s9 + $0x34] sm:$0xf]
    %v3920 = vld [vmem:[%s9 + $0x38] sm:$0xf]
    %v3921 = vld [vmem:[%s9 + $0x3c] sm:$0xf]
    %v3938 = vunpack.c.l.b16 %v3906
    %v3939 = vunpack.c.l.b16 %v3907
    %v3940 = vunpack.c.l.b16 %v3908
    %v3941 = vunpack.c.l.b16 %v3909
    %v3942 = vunpack.c.l.b16 %v3910
    %v3943 = vunpack.c.l.b16 %v3911
    %v3944 = vunpack.c.l.b16 %v3912
    %v3945 = vunpack.c.l.b16 %v3913
    %v3946 = vunpack.c.l.b16 %v3914
    %v3947 = vunpack.c.l.b16 %v3915
    %v3948 = vunpack.c.l.b16 %v3916
    %v3949 = vunpack.c.l.b16 %v3917
    %v3950 = vunpack.c.l.b16 %v3918
    %v3951 = vunpack.c.l.b16 %v3919
    %v3952 = vunpack.c.l.b16 %v3920
    %v3953 = vunpack.c.l.b16 %v3921
    %v3954 = vpack.c.b16 %v3939, %v3938
    %v3955 = vpack.c.b16 %v3941, %v3940
    %v3956 = vpack.c.b16 %v3943, %v3942
    %v3957 = vpack.c.b16 %v3945, %v3944
    %v3958 = vpack.c.b16 %v3947, %v3946
    %v3959 = vpack.c.b16 %v3949, %v3948
    %v3960 = vpack.c.b16 %v3951, %v3950
    %v3961 = vpack.c.b16 %v3953, %v3952
    %3970 = vmatpush.bf16.msra.mxu0 %v3961
    %3971 = vmatpush.bf16.msra.mxu0 %v3960
    %3972 = vmatpush.bf16.msra.mxu0 %v3959
    %3973 = vmatpush.bf16.msra.mxu0 %v3958
    %3974 = vmatpush.bf16.msra.mxu0 %v3957
    %3975 = vmatpush.bf16.msra.mxu0 %v3956
    %3976 = vmatpush.bf16.msra.mxu0 %v3955
    %3977 = vmatpush.bf16.msra.mxu0 %v3954
    %3978 = vmatmul.bf16.gmra.mxu0 %v3905
    %v3979 = vpop.f32.mrf.mxu0
    %v3980 = vadd.f32 0.0, %v3979
    %v3981 = vpop.f32.mrf.mxu0
    %3982 = vdwg.mxu0
    %v3983 = vadd.f32 %v3902, %v3980
    %v3984 = vld [vmem:[%s11 + $0x21] sm:$0x1]
    %v3985 = vperm.slane %v3984, 0
    %3987 = vrot.lane.b32.xlu0 %v3985, 32
    %v3988 = vpop.permute.xlu0 %3987
    %v3990 = vadd.f32 %v3983, %v3988
    %vm3991 = vcmask 271616
    %v3992 = vsel %vm3991, %v3990, -inf
    %3993 = vmax.xlane.f32.xlu0 %v3992
    %v3994 = vpop.xlane.xlu0 %3993
    %v3995 = vsub.f32 %v3990, %v3994
    %v3996 = vmul.f32 %v3995, 1.442695
    %v3997 = vpow.pop %v3996
    %3999 = vrot.lane.b32.xlu0 %v3997, 96
    %v4000 = vpop.permute.xlu0 %3999
    %vm4002 = vcmask 9216
    %v4003 = vsel %vm4002, %v4000, 0.0
    %4004 = vadd.xlane.f32.xlu0 %v4003
    %v4005 = vpop.xlane.xlu0 %4004
    %v4006 = vrcp.pop %v4005
    %v4007 = vmul.f32 %v4005, %v4006
    %v4008 = vsub.f32 1.0, %v4007
    %v4009 = vmul.f32 %v4006, %v4008
    %v4010 = vadd.f32 %v4006, %v4009
    %vm4011 = vweird.f32 %v4005
    %vm4012 = vweird.f32 %v4006
    %vm4013 = vmor %vm4011, %vm4012
    %v4014 = vsel %vm4013, %v4006, %v4010
    %v4015 = vand.u32 2147483647, %v4005
    %vm4016 = vcmp.eq.f32.partialorder %v4015, 8.507059e+37
    %v4017 = vand.u32 %v4005, 2147483648
    %v4018 = vor.u32 1.1754944e-38, %v4017
    %v4019 = vsel %vm4016, %v4018, %v4014
    %v4020 = vmul.f32 %v3997, %v4019
    %4022 = vset.pattern.permute.xlu0 32
    %4023 = vperm.xlu0 %4022, %v4020
    %v4024 = vpop.permute.xlu0 %4023
    %v4026 = vmul.f32 %v4024, %v3902
    %4027 = vset.pattern.permute.xlu0 33
    %4028 = vperm.xlu0 %4027, %v4020
    %v4029 = vpop.permute.xlu0 %4028
    %v4031 = vmul.f32 %v4029, %v3980
    %v4032 = vadd.f32 %v4026, %v4031
    %v4033 = vld [vmem:[%s11 + $0x22] sm:$0x1]
    %v4034 = vperm.slane %v4033, 0
    %v4035 = vadd.f32 %v4032, %v4034
    %v4036 = vtanh.pop %v4035
    %v4037 = vpack.c.bf16 %v4036, %v4036
    %v4038 = vld [vmem:[%s10] sm:$0xf]
    %v4039 = vld [vmem:[%s10 + $0x4] sm:$0xf]
    %v4040 = vld [vmem:[%s10 + $0x8] sm:$0xf]
    %v4041 = vld [vmem:[%s10 + $0xc] sm:$0xf]
    %v4042 = vld [vmem:[%s11 + $0x23] sm:$0x1]
    %v4043 = vperm.slane %v4042, 0
    %v4048 = vunpack.c.l.b16 %v4038
    %v4049 = vunpack.c.l.b16 %v4039
    %v4050 = vunpack.c.l.b16 %v4040
    %v4051 = vunpack.c.l.b16 %v4041
    %v4052 = vpack.c.b16 %v4049, %v4048
    %v4053 = vpack.c.b16 %v4051, %v4050
    %v4057 = vsel %vm179, %v4037, 0
    %4059 = vmatpush.bf16.msra.mxu0 0
    %4060 = vmatpush.bf16.msra.mxu0 0
    %4061 = vmatpush.bf16.msra.mxu0 0
    %4062 = vmatpush.bf16.msra.mxu0 0
    %4063 = vmatpush.bf16.msra.mxu0 0
    %4064 = vmatpush.bf16.msra.mxu0 0
    %4065 = vmatpush.bf16.msra.mxu0 %v4053
    %4066 = vmatpush.bf16.msra.mxu0 %v4052
    %4067 = vmatmul.bf16.gmra.mxu0 %v4057
    %v4068 = vpop.f32.mrf.mxu0
    %v4069 = vadd.f32 %v4043, %v4068
    %v4070 = vpop.f32.mrf.mxu0
    %4071 = vdwg.mxu0
    %v4072 = vtanh.pop %v4069
    %v4073 = vpack.c.bf16 %v4072, %v4072
    %v4074 = vld [vmem:[%s10 + $0x10] sm:$0xf]
    %v4075 = vld [vmem:[%s10 + $0x14] sm:$0xf]
    %v4076 = vld [vmem:[%s10 + $0x18] sm:$0xf]
    %v4077 = vld [vmem:[%s10 + $0x1c] sm:$0xf]
    %v4082 = vunpack.c.l.b16 %v4074
    %v4083 = vunpack.c.l.b16 %v4075
    %v4084 = vunpack.c.l.b16 %v4076
    %v4085 = vunpack.c.l.b16 %v4077
    %v4086 = vpack.c.b16 %v4083, %v4082
    %v4087 = vpack.c.b16 %v4085, %v4084
    %v4091 = vsel %vm179, %v4073, 0
    %4093 = vmatpush.bf16.msra.mxu0 0
    %4094 = vmatpush.bf16.msra.mxu0 0
    %4095 = vmatpush.bf16.msra.mxu0 0
    %4096 = vmatpush.bf16.msra.mxu0 0
    %4097 = vmatpush.bf16.msra.mxu0 0
    %4098 = vmatpush.bf16.msra.mxu0 0
    %4099 = vmatpush.bf16.msra.mxu0 %v4087
    %4100 = vmatpush.bf16.msra.mxu0 %v4086
    %4101 = vmatmul.bf16.gmra.mxu0 %v4091
    %v4102 = vpop.f32.mrf.mxu0
    %v4103 = vadd.f32 0.0, %v4102
    %v4104 = vpop.f32.mrf.mxu0
    %4105 = vdwg.mxu0
    %v4106 = vld [vmem:[%s11 + $0x24] sm:$0x1]
    %v4107 = vperm.slane %v4106, 0
    %v4108 = vadd.f32 %v4103, %v4107
    %vm4109 = vcmask 50176
    %4110 = vst.msk [vmem:[#allocation2] sm:$0x3] %vm4109, %v4108
    // Predicated region
    $region50: #{forward.1} parent=1 // pred_check
      _
    $region51: #{forward.1} parent=1 // pred_check_branch
      %4112 = sbr.rel (0) target = $region53
    $region52: #{forward.1} parent=1 // pred_region
      %4114 = vsyncadd [#allocation3], 0
      %s4116 = sshll.u32 [#allocation2], 4
      %s4117 = int_to_ptr.vmem [resolvable:$true] %s4116
      %s4118 = sshll.u32 %s12, 4
      %s4119 = int_to_ptr.hbm [resolvable:$true] %s4118
      %4121 = dma.vmem_to_hbm [thread:$0]  %s4117, 32, %s4119, [#allocation3]
    $region53: #{forward.1} parent=1 // pred_fallthru
      _
    // Predicated region
    $region54: #{forward.1} parent=1 // pred_check
      _
    $region55: #{forward.1} parent=1 // pred_check_branch
      %4123 = sbr.rel (0) target = $region57
    $region56: #{forward.1} parent=1 // pred_region
      %4125 = dma.done [#allocation3], 32
    $region57: #{forward.1} parent=1 // pred_fallthru
      _
    %4126 = vsyncpa [#allocation3], 1

</llo_original>
